<compile_context>
chip_gen: v7x
topology: tpu7x:2x2x1
jax: 0.10.0
libtpu: 0.0.40
codegen_flags: <defaults>
</compile_context>

<pallas_src>
import functools

import jax
import jax.numpy as jnp
from jax.experimental import pallas as pl
from jax.experimental.pallas import tpu as pltpu


def _round_up(x, m):
    return ((x + m - 1) // m) * m


# ---------------------------------------------------------------------------
# Pallas kernels
# ---------------------------------------------------------------------------

def _make_conv_kernel(k, stride, h_out, w_out):
    """Conv-as-matmul kernel for one padded NHWC image (grid step = one image).

    x_ref:   (Hp, Wp, C_in)        f32  (leading batch dim squeezed by BlockSpec)
    w_ref:   (k*k*C_in, C_pad)     bf16 (tap-major (ki, kj, cin) flattened)
    out_ref: (Ho*Wo, C_pad)        f32
    sum_ref, ssq_ref: (1, C_pad)   f32  per-image BN partial statistics
    """

    def conv_kernel(x_ref, w_ref, out_ref, sum_ref, ssq_ref):
        rows = []
        for ho in range(h_out):
            taps = []
            for ki in range(k):
                r = ho * stride + ki
                for kj in range(k):
                    if stride == 1:
                        taps.append(x_ref[r, kj:kj + w_out, :])
                    else:
                        taps.append(x_ref[r, pl.ds(kj, w_out, stride), :])
            # (Wo, k*k*C_in): in-VMEM patch row (lane concat of (Wo, C_in) taps)
            rows.append(jnp.concatenate(taps, axis=-1))
        # (Ho*Wo, k*k*C_in) patch matrix assembled entirely in VMEM (no HBM im2col)
        a = jnp.concatenate(rows, axis=0).astype(jnp.bfloat16)
        acc = jnp.dot(a, w_ref[...], preferred_element_type=jnp.float32)
        out_ref[...] = acc
        # Per-image BN partial stats (summed over all Ho*Wo rows).
        sum_ref[...] = jnp.sum(acc, axis=0, keepdims=True)
        ssq_ref[...] = jnp.sum(acc * acc, axis=0, keepdims=True)

    return conv_kernel


def _bn_prelu_kernel(x_ref, scale_ref, shift_ref, alpha_ref, o_ref):
    # x_ref: (TM, C_pad); scale/shift/alpha: (1, C_pad) broadcast per channel.
    y = x_ref[...] * scale_ref[...] + shift_ref[...]
    o_ref[...] = jnp.where(y >= 0.0, y, alpha_ref[...] * y)


# ---------------------------------------------------------------------------
# Pallas wrappers
# ---------------------------------------------------------------------------

def _pallas_conv(x_pad, w_mat, k, stride, h_out, w_out):
    N, Hp, Wp, C_in = x_pad.shape
    kkc, C_pad = w_mat.shape
    ho_wo = h_out * w_out

    conv_kernel = _make_conv_kernel(k, stride, h_out, w_out)
    return pl.pallas_call(
        conv_kernel,
        out_shape=(
            jax.ShapeDtypeStruct((N, ho_wo, C_pad), jnp.float32),
            jax.ShapeDtypeStruct((N, 1, C_pad), jnp.float32),
            jax.ShapeDtypeStruct((N, 1, C_pad), jnp.float32),
        ),
        grid_spec=pltpu.PrefetchScalarGridSpec(
            num_scalar_prefetch=0,
            grid=(N,),
            in_specs=[
                pl.BlockSpec((None, Hp, Wp, C_in), lambda n: (n, 0, 0, 0)),
                pl.BlockSpec((kkc, C_pad), lambda n: (0, 0)),
            ],
            out_specs=(
                pl.BlockSpec((None, ho_wo, C_pad), lambda n: (n, 0, 0)),
                pl.BlockSpec((None, 1, C_pad), lambda n: (n, 0, 0)),
                pl.BlockSpec((None, 1, C_pad), lambda n: (n, 0, 0)),
            ),
        ),
        compiler_params=pltpu.CompilerParams(
            dimension_semantics=("parallel",)),
    )(x_pad, w_mat)


def _pallas_bn_prelu(x, scale, shift, alpha, tm):
    M, C = x.shape
    return pl.pallas_call(
        _bn_prelu_kernel,
        out_shape=jax.ShapeDtypeStruct((M, C), jnp.float32),
        grid_spec=pltpu.PrefetchScalarGridSpec(
            num_scalar_prefetch=0,
            grid=(M // tm,),
            in_specs=[
                pl.BlockSpec((tm, C), lambda i: (i, 0)),
                pl.BlockSpec((1, C), lambda i: (0, 0)),
                pl.BlockSpec((1, C), lambda i: (0, 0)),
                pl.BlockSpec((1, C), lambda i: (0, 0)),
            ],
            out_specs=pl.BlockSpec((tm, C), lambda i: (i, 0)),
        ),
        compiler_params=pltpu.CompilerParams(
            dimension_semantics=("parallel",)),
    )(x, scale, shift, alpha)


# ---------------------------------------------------------------------------
# Forward pass
# ---------------------------------------------------------------------------

@functools.partial(jax.jit, static_argnames=("k_size", "stride"))
def conv_tag_para_forward(x_nchw, conv_w, bn_gamma, bn_beta, prelu_alpha,
                          *, k_size, stride=1):
    """Forward pass of ConvTAGpara (Conv2d no-bias -> BatchNorm2d(train) -> PReLU).

    x_nchw:      (N, C_in, H, W)      float32
    conv_w:      (C_out, C_in, k, k)  float32   (PyTorch layout, bias=False)
    bn_gamma, bn_beta, prelu_alpha: (C_out,)
    Returns (N, C_out, H_out, W_out) float32.
    """
    eps = 1e-3
    padding = (k_size - 1) // 2
    N, C_in, H, W = x_nchw.shape
    C_out = conv_w.shape[0]
    C_pad = _round_up(C_out, 128)

    H_out = (H + 2 * padding - k_size) // stride + 1
    W_out = (W + 2 * padding - k_size) // stride + 1
    ho_wo = H_out * W_out

    # NCHW -> NHWC (channels on the lane dim), spatial zero padding.
    x_nhwc = jnp.transpose(x_nchw, (0, 2, 3, 1)).astype(jnp.float32)
    x_pad = jnp.pad(x_nhwc, ((0, 0), (padding, padding), (padding, padding), (0, 0)))

    # Weight (C_out, C_in, kh, kw) -> (kh, kw, C_in, C_out) -> (k*k*C_in, C_pad) bf16,
    # matching the (ki, kj, c_in) patch ordering built inside the kernel.
    w_mat = jnp.transpose(conv_w, (2, 3, 1, 0)).reshape(k_size * k_size * C_in, C_out)
    w_mat = jnp.pad(w_mat, ((0, 0), (0, C_pad - C_out))).astype(jnp.bfloat16)

    # --- conv hot path: fused in-VMEM patch assembly + bf16 MXU matmul,
    #     emitting per-image BN partial stats as extra outputs ---
    conv_out, psum, pssq = _pallas_conv(x_pad, w_mat, k_size, stride, H_out, W_out)

    # BatchNorm training-mode batch statistics (biased variance) from the
    # kernel's per-image partials; tiny final reduction in plain JAX, folded
    # into a per-channel affine.
    count = jnp.float32(N * ho_wo)
    mean = jnp.sum(psum, axis=(0, 1)) / count                     # (C_pad,)
    ex2 = jnp.sum(pssq, axis=(0, 1)) / count
    var = jnp.maximum(ex2 - mean * mean, 0.0)
    inv_std = jax.lax.rsqrt(var + eps)

    gamma = jnp.pad(bn_gamma.astype(jnp.float32), (0, C_pad - C_out))
    beta = jnp.pad(bn_beta.astype(jnp.float32), (0, C_pad - C_out))
    alpha = jnp.pad(prelu_alpha.astype(jnp.float32), (0, C_pad - C_out))

    scale = (gamma * inv_std)[None, :]                            # (1, C_pad)
    shift = (beta - mean * gamma * inv_std)[None, :]
    alpha = alpha[None, :]

    # --- fused BN-apply + PReLU over the flattened (M, C_pad) conv output ---
    M = N * ho_wo
    tm = min(512, _round_up(M, 8))
    m_pad = _round_up(M, tm)
    x_flat = conv_out.reshape(M, C_pad)
    if m_pad != M:
        x_flat = jnp.pad(x_flat, ((0, m_pad - M), (0, 0)))
    out_flat = _pallas_bn_prelu(x_flat, scale, shift, alpha, tm)

    # Drop row/channel padding, NHWC -> NCHW.
    out = out_flat[:M, :C_out].reshape(N, H_out, W_out, C_out)
    return jnp.transpose(out, (0, 3, 1, 2))


# ---------------------------------------------------------------------------
# Reference (plain JAX, f32) for sanity checking
# ---------------------------------------------------------------------------

def _reference(x_nchw, conv_w, bn_gamma, bn_beta, prelu_alpha, k_size, stride=1):
    eps = 1e-3
    padding = (k_size - 1) // 2
    conv = jax.lax.conv_general_dilated(
        x_nchw, conv_w, window_strides=(stride, stride),
        padding=[(padding, padding), (padding, padding)],
        dimension_numbers=("NCHW", "OIHW", "NCHW"))
    mean = jnp.mean(conv, axis=(0, 2, 3), keepdims=True)
    var = jnp.mean(jnp.square(conv - mean), axis=(0, 2, 3), keepdims=True)
    y = (conv - mean) * jax.lax.rsqrt(var + eps)
    y = y * bn_gamma[None, :, None, None] + bn_beta[None, :, None, None]
    a = prelu_alpha[None, :, None, None]
    return jnp.where(y >= 0.0, y, a * y)


# ---------------------------------------------------------------------------
# Main
# ---------------------------------------------------------------------------

if __name__ == "__main__":
    # Module hyper-params (synthetic, small).
    nIn, nOut, kSize, stride = 4, 8, 3, 1
    N, H, W = 2, 16, 16

    key = jax.random.PRNGKey(0)
    kx, kw = jax.random.split(key)

    x = jax.random.normal(kx, (N, nIn, H, W), dtype=jnp.float32)
    conv_w = 0.1 * jax.random.normal(kw, (nOut, nIn, kSize, kSize), dtype=jnp.float32)
    bn_gamma = jnp.ones((nOut,), jnp.float32)          # BatchNorm2d weight init
    bn_beta = jnp.zeros((nOut,), jnp.float32)          # BatchNorm2d bias init
    prelu_alpha = jnp.full((nOut,), 0.25, jnp.float32)  # nn.PReLU(nOut) init

    out = conv_tag_para_forward(x, conv_w, bn_gamma, bn_beta, prelu_alpha,
                                k_size=kSize, stride=stride)
    out = jax.block_until_ready(out)

    ref = _reference(x, conv_w, bn_gamma, bn_beta, prelu_alpha, kSize, stride)
    assert out.shape == (N, nOut, H, W)
    # bf16 MXU operands (f32 accumulate) -> slightly looser tolerance vs. the f32 reference.
    assert jnp.allclose(out, ref, atol=3e-2, rtol=3e-2), float(jnp.max(jnp.abs(out - ref)))

    print("KERNEL_OK")
</pallas_src>

<mosaic_0001>
module attributes {stable_mosaic.version = 11 : i64} {
  func.func @_bn_prelu_kernel(%arg0: i32, %arg1: memref<512x128xf32, #tpu.memory_space<vmem>>, %arg2: memref<1x128xf32, #tpu.memory_space<vmem>>, %arg3: memref<1x128xf32, #tpu.memory_space<vmem>>, %arg4: memref<1x128xf32, #tpu.memory_space<vmem>>, %arg5: memref<512x128xf32, #tpu.memory_space<vmem>>) attributes {dimension_semantics = [#tpu.dimension_semantics<parallel>], iteration_bounds = array<i64: 1>, scalar_prefetch = 0 : i64, scratch_operands = 0 : i64, tpu.core_type = #tpu.core_type<tc>, window_params = [{transform_indices = @transform_0, window_bounds = array<i64: 512, 128>}, {pipeline_mode = #tpu.pipeline_mode<synchronous>, transform_indices = @transform_1, window_bounds = array<i64: 1, 128>}, {pipeline_mode = #tpu.pipeline_mode<synchronous>, transform_indices = @transform_2, window_bounds = array<i64: 1, 128>}, {pipeline_mode = #tpu.pipeline_mode<synchronous>, transform_indices = @transform_3, window_bounds = array<i64: 1, 128>}, {transform_indices = @transform_4, window_bounds = array<i64: 512, 128>}]} {
    %c0 = arith.constant 0 : index
    %c0_0 = arith.constant 0 : index
    %0 = vector.load %arg1[%c0, %c0_0] : memref<512x128xf32, #tpu.memory_space<vmem>>, vector<512x128xf32>
    %c0_1 = arith.constant 0 : index
    %c0_2 = arith.constant 0 : index
    %1 = vector.load %arg2[%c0_1, %c0_2] : memref<1x128xf32, #tpu.memory_space<vmem>>, vector<1x128xf32>
    %2 = vector.broadcast %1 : vector<1x128xf32> to vector<512x128xf32>
    %3 = arith.mulf %0, %2 : vector<512x128xf32>
    %c0_3 = arith.constant 0 : index
    %c0_4 = arith.constant 0 : index
    %4 = vector.load %arg3[%c0_3, %c0_4] : memref<1x128xf32, #tpu.memory_space<vmem>>, vector<1x128xf32>
    %5 = vector.broadcast %4 : vector<1x128xf32> to vector<512x128xf32>
    %6 = arith.addf %3, %5 : vector<512x128xf32>
    %cst = arith.constant 0.000000e+00 : f32
    %7 = vector.broadcast %cst : f32 to vector<512x128xf32>
    %8 = arith.cmpf oge, %6, %7 : vector<512x128xf32>
    %c0_5 = arith.constant 0 : index
    %c0_6 = arith.constant 0 : index
    %9 = vector.load %arg4[%c0_5, %c0_6] : memref<1x128xf32, #tpu.memory_space<vmem>>, vector<1x128xf32>
    %10 = vector.broadcast %9 : vector<1x128xf32> to vector<512x128xf32>
    %11 = arith.mulf %10, %6 : vector<512x128xf32>
    %12 = arith.select %8, %6, %11 : vector<512x128xi1>, vector<512x128xf32>
    %c0_7 = arith.constant 0 : index
    %c0_8 = arith.constant 0 : index
    %13 = vector.load %arg5[%c0_7, %c0_8] : memref<512x128xf32, #tpu.memory_space<vmem>>, vector<512x128xf32>
    tpu.vector_store %arg5[%c0_7, %c0_8], %12 {strides = array<i32>} : memref<512x128xf32, #tpu.memory_space<vmem>>, vector<512x128xf32>,
    return
  }
  func.func @transform_0(%arg0: i32) -> (i32, i32) {
    %c0_i32 = arith.constant 0 : i32
    %c0_i32_0 = arith.constant 0 : i32
    return %arg0, %c0_i32 : i32, i32
  }
  func.func @transform_1(%arg0: i32) -> (i32, i32) {
    %c0_i32 = arith.constant 0 : i32
    %c0_i32_0 = arith.constant 0 : i32
    %c0_i32_1 = arith.constant 0 : i32
    return %c0_i32, %c0_i32_0 : i32, i32
  }
  func.func @transform_2(%arg0: i32) -> (i32, i32) {
    %c0_i32 = arith.constant 0 : i32
    %c0_i32_0 = arith.constant 0 : i32
    %c0_i32_1 = arith.constant 0 : i32
    return %c0_i32, %c0_i32_0 : i32, i32
  }
  func.func @transform_3(%arg0: i32) -> (i32, i32) {
    %c0_i32 = arith.constant 0 : i32
    %c0_i32_0 = arith.constant 0 : i32
    %c0_i32_1 = arith.constant 0 : i32
    return %c0_i32, %c0_i32_0 : i32, i32
  }
  func.func @transform_4(%arg0: i32) -> (i32, i32) {
    %c0_i32 = arith.constant 0 : i32
    %c0_i32_0 = arith.constant 0 : i32
    return %arg0, %c0_i32 : i32, i32
  }
}

module attributes {stable_mosaic.version = 11 : i64} {
  func.func @conv_kernel(%arg0: i32, %arg1: memref<1x18x18x4xf32, #tpu.memory_space<vmem>>, %arg2: memref<36x128xbf16, #tpu.memory_space<vmem>>, %arg3: memref<1x256x128xf32, #tpu.memory_space<vmem>>, %arg4: memref<1x1x128xf32, #tpu.memory_space<vmem>>, %arg5: memref<1x1x128xf32, #tpu.memory_space<vmem>>) attributes {dimension_semantics = [#tpu.dimension_semantics<parallel>], iteration_bounds = array<i64: 2>, scalar_prefetch = 0 : i64, scratch_operands = 0 : i64, tpu.core_type = #tpu.core_type<tc>, window_params = [{transform_indices = @transform_0, window_bounds = array<i64: 1, 18, 18, 4>}, {pipeline_mode = #tpu.pipeline_mode<synchronous>, transform_indices = @transform_1, window_bounds = array<i64: 36, 128>}, {transform_indices = @transform_2, window_bounds = array<i64: 1, 256, 128>}, {transform_indices = @transform_3, window_bounds = array<i64: 1, 1, 128>}, {transform_indices = @transform_4, window_bounds = array<i64: 1, 1, 128>}]} {
    %c0 = arith.constant 0 : index
    %c0_0 = arith.constant 0 : index
    %c0_1 = arith.constant 0 : index
    %c0_2 = arith.constant 0 : index
    %0 = vector.load %arg1[%c0, %c0_0, %c0_1, %c0_2] : memref<1x18x18x4xf32, #tpu.memory_space<vmem>>, vector<1x1x16x4xf32>
    %1 = vector.shape_cast %0 : vector<1x1x16x4xf32> to vector<16x4xf32>
    %c0_3 = arith.constant 0 : index
    %c0_4 = arith.constant 0 : index
    %c1 = arith.constant 1 : index
    %c0_5 = arith.constant 0 : index
    %2 = vector.load %arg1[%c0_3, %c0_4, %c1, %c0_5] : memref<1x18x18x4xf32, #tpu.memory_space<vmem>>, vector<1x1x16x4xf32>
    %3 = vector.shape_cast %2 : vector<1x1x16x4xf32> to vector<16x4xf32>
    %c0_6 = arith.constant 0 : index
    %c0_7 = arith.constant 0 : index
    %c2 = arith.constant 2 : index
    %c0_8 = arith.constant 0 : index
    %4 = vector.load %arg1[%c0_6, %c0_7, %c2, %c0_8] : memref<1x18x18x4xf32, #tpu.memory_space<vmem>>, vector<1x1x16x4xf32>
    %5 = vector.shape_cast %4 : vector<1x1x16x4xf32> to vector<16x4xf32>
    %c0_9 = arith.constant 0 : index
    %c1_10 = arith.constant 1 : index
    %c0_11 = arith.constant 0 : index
    %c0_12 = arith.constant 0 : index
    %6 = vector.load %arg1[%c0_9, %c1_10, %c0_11, %c0_12] : memref<1x18x18x4xf32, #tpu.memory_space<vmem>>, vector<1x1x16x4xf32>
    %7 = vector.shape_cast %6 : vector<1x1x16x4xf32> to vector<16x4xf32>
    %c0_13 = arith.constant 0 : index
    %c1_14 = arith.constant 1 : index
    %c1_15 = arith.constant 1 : index
    %c0_16 = arith.constant 0 : index
    %8 = vector.load %arg1[%c0_13, %c1_14, %c1_15, %c0_16] : memref<1x18x18x4xf32, #tpu.memory_space<vmem>>, vector<1x1x16x4xf32>
    %9 = vector.shape_cast %8 : vector<1x1x16x4xf32> to vector<16x4xf32>
    %c0_17 = arith.constant 0 : index
    %c1_18 = arith.constant 1 : index
    %c2_19 = arith.constant 2 : index
    %c0_20 = arith.constant 0 : index
    %10 = vector.load %arg1[%c0_17, %c1_18, %c2_19, %c0_20] : memref<1x18x18x4xf32, #tpu.memory_space<vmem>>, vector<1x1x16x4xf32>
    %11 = vector.shape_cast %10 : vector<1x1x16x4xf32> to vector<16x4xf32>
    %c0_21 = arith.constant 0 : index
    %c2_22 = arith.constant 2 : index
    %c0_23 = arith.constant 0 : index
    %c0_24 = arith.constant 0 : index
    %12 = vector.load %arg1[%c0_21, %c2_22, %c0_23, %c0_24] : memref<1x18x18x4xf32, #tpu.memory_space<vmem>>, vector<1x1x16x4xf32>
    %13 = vector.shape_cast %12 : vector<1x1x16x4xf32> to vector<16x4xf32>
    %c0_25 = arith.constant 0 : index
    %c2_26 = arith.constant 2 : index
    %c1_27 = arith.constant 1 : index
    %c0_28 = arith.constant 0 : index
    %14 = vector.load %arg1[%c0_25, %c2_26, %c1_27, %c0_28] : memref<1x18x18x4xf32, #tpu.memory_space<vmem>>, vector<1x1x16x4xf32>
    %15 = vector.shape_cast %14 : vector<1x1x16x4xf32> to vector<16x4xf32>
    %c0_29 = arith.constant 0 : index
    %c2_30 = arith.constant 2 : index
    %c2_31 = arith.constant 2 : index
    %c0_32 = arith.constant 0 : index
    %16 = vector.load %arg1[%c0_29, %c2_30, %c2_31, %c0_32] : memref<1x18x18x4xf32, #tpu.memory_space<vmem>>, vector<1x1x16x4xf32>
    %17 = vector.shape_cast %16 : vector<1x1x16x4xf32> to vector<16x4xf32>
    %18 = tpu.concatenate %1, %3, %5, %7, %9, %11, %13, %15, %17 in 1 : vector<16x4xf32>, vector<16x4xf32>, vector<16x4xf32>, vector<16x4xf32>, vector<16x4xf32>, vector<16x4xf32>, vector<16x4xf32>, vector<16x4xf32>, vector<16x4xf32> -> vector<16x36xf32>
    %c0_33 = arith.constant 0 : index
    %c1_34 = arith.constant 1 : index
    %c0_35 = arith.constant 0 : index
    %c0_36 = arith.constant 0 : index
    %19 = vector.load %arg1[%c0_33, %c1_34, %c0_35, %c0_36] : memref<1x18x18x4xf32, #tpu.memory_space<vmem>>, vector<1x1x16x4xf32>
    %20 = vector.shape_cast %19 : vector<1x1x16x4xf32> to vector<16x4xf32>
    %c0_37 = arith.constant 0 : index
    %c1_38 = arith.constant 1 : index
    %c1_39 = arith.constant 1 : index
    %c0_40 = arith.constant 0 : index
    %21 = vector.load %arg1[%c0_37, %c1_38, %c1_39, %c0_40] : memref<1x18x18x4xf32, #tpu.memory_space<vmem>>, vector<1x1x16x4xf32>
    %22 = vector.shape_cast %21 : vector<1x1x16x4xf32> to vector<16x4xf32>
    %c0_41 = arith.constant 0 : index
    %c1_42 = arith.constant 1 : index
    %c2_43 = arith.constant 2 : index
    %c0_44 = arith.constant 0 : index
    %23 = vector.load %arg1[%c0_41, %c1_42, %c2_43, %c0_44] : memref<1x18x18x4xf32, #tpu.memory_space<vmem>>, vector<1x1x16x4xf32>
    %24 = vector.shape_cast %23 : vector<1x1x16x4xf32> to vector<16x4xf32>
    %c0_45 = arith.constant 0 : index
    %c2_46 = arith.constant 2 : index
    %c0_47 = arith.constant 0 : index
    %c0_48 = arith.constant 0 : index
    %25 = vector.load %arg1[%c0_45, %c2_46, %c0_47, %c0_48] : memref<1x18x18x4xf32, #tpu.memory_space<vmem>>, vector<1x1x16x4xf32>
    %26 = vector.shape_cast %25 : vector<1x1x16x4xf32> to vector<16x4xf32>
    %c0_49 = arith.constant 0 : index
    %c2_50 = arith.constant 2 : index
    %c1_51 = arith.constant 1 : index
    %c0_52 = arith.constant 0 : index
    %27 = vector.load %arg1[%c0_49, %c2_50, %c1_51, %c0_52] : memref<1x18x18x4xf32, #tpu.memory_space<vmem>>, vector<1x1x16x4xf32>
    %28 = vector.shape_cast %27 : vector<1x1x16x4xf32> to vector<16x4xf32>
    %c0_53 = arith.constant 0 : index
    %c2_54 = arith.constant 2 : index
    %c2_55 = arith.constant 2 : index
    %c0_56 = arith.constant 0 : index
    %29 = vector.load %arg1[%c0_53, %c2_54, %c2_55, %c0_56] : memref<1x18x18x4xf32, #tpu.memory_space<vmem>>, vector<1x1x16x4xf32>
    %30 = vector.shape_cast %29 : vector<1x1x16x4xf32> to vector<16x4xf32>
    %c0_57 = arith.constant 0 : index
    %c3 = arith.constant 3 : index
    %c0_58 = arith.constant 0 : index
    %c0_59 = arith.constant 0 : index
    %31 = vector.load %arg1[%c0_57, %c3, %c0_58, %c0_59] : memref<1x18x18x4xf32, #tpu.memory_space<vmem>>, vector<1x1x16x4xf32>
    %32 = vector.shape_cast %31 : vector<1x1x16x4xf32> to vector<16x4xf32>
    %c0_60 = arith.constant 0 : index
    %c3_61 = arith.constant 3 : index
    %c1_62 = arith.constant 1 : index
    %c0_63 = arith.constant 0 : index
    %33 = vector.load %arg1[%c0_60, %c3_61, %c1_62, %c0_63] : memref<1x18x18x4xf32, #tpu.memory_space<vmem>>, vector<1x1x16x4xf32>
    %34 = vector.shape_cast %33 : vector<1x1x16x4xf32> to vector<16x4xf32>
    %c0_64 = arith.constant 0 : index
    %c3_65 = arith.constant 3 : index
    %c2_66 = arith.constant 2 : index
    %c0_67 = arith.constant 0 : index
    %35 = vector.load %arg1[%c0_64, %c3_65, %c2_66, %c0_67] : memref<1x18x18x4xf32, #tpu.memory_space<vmem>>, vector<1x1x16x4xf32>
    %36 = vector.shape_cast %35 : vector<1x1x16x4xf32> to vector<16x4xf32>
    %37 = tpu.concatenate %20, %22, %24, %26, %28, %30, %32, %34, %36 in 1 : vector<16x4xf32>, vector<16x4xf32>, vector<16x4xf32>, vector<16x4xf32>, vector<16x4xf32>, vector<16x4xf32>, vector<16x4xf32>, vector<16x4xf32>, vector<16x4xf32> -> vector<16x36xf32>
    %c0_68 = arith.constant 0 : index
    %c2_69 = arith.constant 2 : index
    %c0_70 = arith.constant 0 : index
    %c0_71 = arith.constant 0 : index
    %38 = vector.load %arg1[%c0_68, %c2_69, %c0_70, %c0_71] : memref<1x18x18x4xf32, #tpu.memory_space<vmem>>, vector<1x1x16x4xf32>
    %39 = vector.shape_cast %38 : vector<1x1x16x4xf32> to vector<16x4xf32>
    %c0_72 = arith.constant 0 : index
    %c2_73 = arith.constant 2 : index
    %c1_74 = arith.constant 1 : index
    %c0_75 = arith.constant 0 : index
    %40 = vector.load %arg1[%c0_72, %c2_73, %c1_74, %c0_75] : memref<1x18x18x4xf32, #tpu.memory_space<vmem>>, vector<1x1x16x4xf32>
    %41 = vector.shape_cast %40 : vector<1x1x16x4xf32> to vector<16x4xf32>
    %c0_76 = arith.constant 0 : index
    %c2_77 = arith.constant 2 : index
    %c2_78 = arith.constant 2 : index
    %c0_79 = arith.constant 0 : index
    %42 = vector.load %arg1[%c0_76, %c2_77, %c2_78, %c0_79] : memref<1x18x18x4xf32, #tpu.memory_space<vmem>>, vector<1x1x16x4xf32>
    %43 = vector.shape_cast %42 : vector<1x1x16x4xf32> to vector<16x4xf32>
    %c0_80 = arith.constant 0 : index
    %c3_81 = arith.constant 3 : index
    %c0_82 = arith.constant 0 : index
    %c0_83 = arith.constant 0 : index
    %44 = vector.load %arg1[%c0_80, %c3_81, %c0_82, %c0_83] : memref<1x18x18x4xf32, #tpu.memory_space<vmem>>, vector<1x1x16x4xf32>
    %45 = vector.shape_cast %44 : vector<1x1x16x4xf32> to vector<16x4xf32>
    %c0_84 = arith.constant 0 : index
    %c3_85 = arith.constant 3 : index
    %c1_86 = arith.constant 1 : index
    %c0_87 = arith.constant 0 : index
    %46 = vector.load %arg1[%c0_84, %c3_85, %c1_86, %c0_87] : memref<1x18x18x4xf32, #tpu.memory_space<vmem>>, vector<1x1x16x4xf32>
    %47 = vector.shape_cast %46 : vector<1x1x16x4xf32> to vector<16x4xf32>
    %c0_88 = arith.constant 0 : index
    %c3_89 = arith.constant 3 : index
    %c2_90 = arith.constant 2 : index
    %c0_91 = arith.constant 0 : index
    %48 = vector.load %arg1[%c0_88, %c3_89, %c2_90, %c0_91] : memref<1x18x18x4xf32, #tpu.memory_space<vmem>>, vector<1x1x16x4xf32>
    %49 = vector.shape_cast %48 : vector<1x1x16x4xf32> to vector<16x4xf32>
    %c0_92 = arith.constant 0 : index
    %c4 = arith.constant 4 : index
    %c0_93 = arith.constant 0 : index
    %c0_94 = arith.constant 0 : index
    %50 = vector.load %arg1[%c0_92, %c4, %c0_93, %c0_94] : memref<1x18x18x4xf32, #tpu.memory_space<vmem>>, vector<1x1x16x4xf32>
    %51 = vector.shape_cast %50 : vector<1x1x16x4xf32> to vector<16x4xf32>
    %c0_95 = arith.constant 0 : index
    %c4_96 = arith.constant 4 : index
    %c1_97 = arith.constant 1 : index
    %c0_98 = arith.constant 0 : index
    %52 = vector.load %arg1[%c0_95, %c4_96, %c1_97, %c0_98] : memref<1x18x18x4xf32, #tpu.memory_space<vmem>>, vector<1x1x16x4xf32>
    %53 = vector.shape_cast %52 : vector<1x1x16x4xf32> to vector<16x4xf32>
    %c0_99 = arith.constant 0 : index
    %c4_100 = arith.constant 4 : index
    %c2_101 = arith.constant 2 : index
    %c0_102 = arith.constant 0 : index
    %54 = vector.load %arg1[%c0_99, %c4_100, %c2_101, %c0_102] : memref<1x18x18x4xf32, #tpu.memory_space<vmem>>, vector<1x1x16x4xf32>
    %55 = vector.shape_cast %54 : vector<1x1x16x4xf32> to vector<16x4xf32>
    %56 = tpu.concatenate %39, %41, %43, %45, %47, %49, %51, %53, %55 in 1 : vector<16x4xf32>, vector<16x4xf32>, vector<16x4xf32>, vector<16x4xf32>, vector<16x4xf32>, vector<16x4xf32>, vector<16x4xf32>, vector<16x4xf32>, vector<16x4xf32> -> vector<16x36xf32>
    %c0_103 = arith.constant 0 : index
    %c3_104 = arith.constant 3 : index
    %c0_105 = arith.constant 0 : index
    %c0_106 = arith.constant 0 : index
    %57 = vector.load %arg1[%c0_103, %c3_104, %c0_105, %c0_106] : memref<1x18x18x4xf32, #tpu.memory_space<vmem>>, vector<1x1x16x4xf32>
    %58 = vector.shape_cast %57 : vector<1x1x16x4xf32> to vector<16x4xf32>
    %c0_107 = arith.constant 0 : index
    %c3_108 = arith.constant 3 : index
    %c1_109 = arith.constant 1 : index
    %c0_110 = arith.constant 0 : index
    %59 = vector.load %arg1[%c0_107, %c3_108, %c1_109, %c0_110] : memref<1x18x18x4xf32, #tpu.memory_space<vmem>>, vector<1x1x16x4xf32>
    %60 = vector.shape_cast %59 : vector<1x1x16x4xf32> to vector<16x4xf32>
    %c0_111 = arith.constant 0 : index
    %c3_112 = arith.constant 3 : index
    %c2_113 = arith.constant 2 : index
    %c0_114 = arith.constant 0 : index
    %61 = vector.load %arg1[%c0_111, %c3_112, %c2_113, %c0_114] : memref<1x18x18x4xf32, #tpu.memory_space<vmem>>, vector<1x1x16x4xf32>
    %62 = vector.shape_cast %61 : vector<1x1x16x4xf32> to vector<16x4xf32>
    %c0_115 = arith.constant 0 : index
    %c4_116 = arith.constant 4 : index
    %c0_117 = arith.constant 0 : index
    %c0_118 = arith.constant 0 : index
    %63 = vector.load %arg1[%c0_115, %c4_116, %c0_117, %c0_118] : memref<1x18x18x4xf32, #tpu.memory_space<vmem>>, vector<1x1x16x4xf32>
    %64 = vector.shape_cast %63 : vector<1x1x16x4xf32> to vector<16x4xf32>
    %c0_119 = arith.constant 0 : index
    %c4_120 = arith.constant 4 : index
    %c1_121 = arith.constant 1 : index
    %c0_122 = arith.constant 0 : index
    %65 = vector.load %arg1[%c0_119, %c4_120, %c1_121, %c0_122] : memref<1x18x18x4xf32, #tpu.memory_space<vmem>>, vector<1x1x16x4xf32>
    %66 = vector.shape_cast %65 : vector<1x1x16x4xf32> to vector<16x4xf32>
    %c0_123 = arith.constant 0 : index
    %c4_124 = arith.constant 4 : index
    %c2_125 = arith.constant 2 : index
    %c0_126 = arith.constant 0 : index
    %67 = vector.load %arg1[%c0_123, %c4_124, %c2_125, %c0_126] : memref<1x18x18x4xf32, #tpu.memory_space<vmem>>, vector<1x1x16x4xf32>
    %68 = vector.shape_cast %67 : vector<1x1x16x4xf32> to vector<16x4xf32>
    %c0_127 = arith.constant 0 : index
    %c5 = arith.constant 5 : index
    %c0_128 = arith.constant 0 : index
    %c0_129 = arith.constant 0 : index
    %69 = vector.load %arg1[%c0_127, %c5, %c0_128, %c0_129] : memref<1x18x18x4xf32, #tpu.memory_space<vmem>>, vector<1x1x16x4xf32>
    %70 = vector.shape_cast %69 : vector<1x1x16x4xf32> to vector<16x4xf32>
    %c0_130 = arith.constant 0 : index
    %c5_131 = arith.constant 5 : index
    %c1_132 = arith.constant 1 : index
    %c0_133 = arith.constant 0 : index
    %71 = vector.load %arg1[%c0_130, %c5_131, %c1_132, %c0_133] : memref<1x18x18x4xf32, #tpu.memory_space<vmem>>, vector<1x1x16x4xf32>
    %72 = vector.shape_cast %71 : vector<1x1x16x4xf32> to vector<16x4xf32>
    %c0_134 = arith.constant 0 : index
    %c5_135 = arith.constant 5 : index
    %c2_136 = arith.constant 2 : index
    %c0_137 = arith.constant 0 : index
    %73 = vector.load %arg1[%c0_134, %c5_135, %c2_136, %c0_137] : memref<1x18x18x4xf32, #tpu.memory_space<vmem>>, vector<1x1x16x4xf32>
    %74 = vector.shape_cast %73 : vector<1x1x16x4xf32> to vector<16x4xf32>
    %75 = tpu.concatenate %58, %60, %62, %64, %66, %68, %70, %72, %74 in 1 : vector<16x4xf32>, vector<16x4xf32>, vector<16x4xf32>, vector<16x4xf32>, vector<16x4xf32>, vector<16x4xf32>, vector<16x4xf32>, vector<16x4xf32>, vector<16x4xf32> -> vector<16x36xf32>
    %c0_138 = arith.constant 0 : index
    %c4_139 = arith.constant 4 : index
    %c0_140 = arith.constant 0 : index
    %c0_141 = arith.constant 0 : index
    %76 = vector.load %arg1[%c0_138, %c4_139, %c0_140, %c0_141] : memref<1x18x18x4xf32, #tpu.memory_space<vmem>>, vector<1x1x16x4xf32>
    %77 = vector.shape_cast %76 : vector<1x1x16x4xf32> to vector<16x4xf32>
    %c0_142 = arith.constant 0 : index
    %c4_143 = arith.constant 4 : index
    %c1_144 = arith.constant 1 : index
    %c0_145 = arith.constant 0 : index
    %78 = vector.load %arg1[%c0_142, %c4_143, %c1_144, %c0_145] : memref<1x18x18x4xf32, #tpu.memory_space<vmem>>, vector<1x1x16x4xf32>
    %79 = vector.shape_cast %78 : vector<1x1x16x4xf32> to vector<16x4xf32>
    %c0_146 = arith.constant 0 : index
    %c4_147 = arith.constant 4 : index
    %c2_148 = arith.constant 2 : index
    %c0_149 = arith.constant 0 : index
    %80 = vector.load %arg1[%c0_146, %c4_147, %c2_148, %c0_149] : memref<1x18x18x4xf32, #tpu.memory_space<vmem>>, vector<1x1x16x4xf32>
    %81 = vector.shape_cast %80 : vector<1x1x16x4xf32> to vector<16x4xf32>
    %c0_150 = arith.constant 0 : index
    %c5_151 = arith.constant 5 : index
    %c0_152 = arith.constant 0 : index
    %c0_153 = arith.constant 0 : index
    %82 = vector.load %arg1[%c0_150, %c5_151, %c0_152, %c0_153] : memref<1x18x18x4xf32, #tpu.memory_space<vmem>>, vector<1x1x16x4xf32>
    %83 = vector.shape_cast %82 : vector<1x1x16x4xf32> to vector<16x4xf32>
    %c0_154 = arith.constant 0 : index
    %c5_155 = arith.constant 5 : index
    %c1_156 = arith.constant 1 : index
    %c0_157 = arith.constant 0 : index
    %84 = vector.load %arg1[%c0_154, %c5_155, %c1_156, %c0_157] : memref<1x18x18x4xf32, #tpu.memory_space<vmem>>, vector<1x1x16x4xf32>
    %85 = vector.shape_cast %84 : vector<1x1x16x4xf32> to vector<16x4xf32>
    %c0_158 = arith.constant 0 : index
    %c5_159 = arith.constant 5 : index
    %c2_160 = arith.constant 2 : index
    %c0_161 = arith.constant 0 : index
    %86 = vector.load %arg1[%c0_158, %c5_159, %c2_160, %c0_161] : memref<1x18x18x4xf32, #tpu.memory_space<vmem>>, vector<1x1x16x4xf32>
    %87 = vector.shape_cast %86 : vector<1x1x16x4xf32> to vector<16x4xf32>
    %c0_162 = arith.constant 0 : index
    %c6 = arith.constant 6 : index
    %c0_163 = arith.constant 0 : index
    %c0_164 = arith.constant 0 : index
    %88 = vector.load %arg1[%c0_162, %c6, %c0_163, %c0_164] : memref<1x18x18x4xf32, #tpu.memory_space<vmem>>, vector<1x1x16x4xf32>
    %89 = vector.shape_cast %88 : vector<1x1x16x4xf32> to vector<16x4xf32>
    %c0_165 = arith.constant 0 : index
    %c6_166 = arith.constant 6 : index
    %c1_167 = arith.constant 1 : index
    %c0_168 = arith.constant 0 : index
    %90 = vector.load %arg1[%c0_165, %c6_166, %c1_167, %c0_168] : memref<1x18x18x4xf32, #tpu.memory_space<vmem>>, vector<1x1x16x4xf32>
    %91 = vector.shape_cast %90 : vector<1x1x16x4xf32> to vector<16x4xf32>
    %c0_169 = arith.constant 0 : index
    %c6_170 = arith.constant 6 : index
    %c2_171 = arith.constant 2 : index
    %c0_172 = arith.constant 0 : index
    %92 = vector.load %arg1[%c0_169, %c6_170, %c2_171, %c0_172] : memref<1x18x18x4xf32, #tpu.memory_space<vmem>>, vector<1x1x16x4xf32>
    %93 = vector.shape_cast %92 : vector<1x1x16x4xf32> to vector<16x4xf32>
    %94 = tpu.concatenate %77, %79, %81, %83, %85, %87, %89, %91, %93 in 1 : vector<16x4xf32>, vector<16x4xf32>, vector<16x4xf32>, vector<16x4xf32>, vector<16x4xf32>, vector<16x4xf32>, vector<16x4xf32>, vector<16x4xf32>, vector<16x4xf32> -> vector<16x36xf32>
    %c0_173 = arith.constant 0 : index
    %c5_174 = arith.constant 5 : index
    %c0_175 = arith.constant 0 : index
    %c0_176 = arith.constant 0 : index
    %95 = vector.load %arg1[%c0_173, %c5_174, %c0_175, %c0_176] : memref<1x18x18x4xf32, #tpu.memory_space<vmem>>, vector<1x1x16x4xf32>
    %96 = vector.shape_cast %95 : vector<1x1x16x4xf32> to vector<16x4xf32>
    %c0_177 = arith.constant 0 : index
    %c5_178 = arith.constant 5 : index
    %c1_179 = arith.constant 1 : index
    %c0_180 = arith.constant 0 : index
    %97 = vector.load %arg1[%c0_177, %c5_178, %c1_179, %c0_180] : memref<1x18x18x4xf32, #tpu.memory_space<vmem>>, vector<1x1x16x4xf32>
    %98 = vector.shape_cast %97 : vector<1x1x16x4xf32> to vector<16x4xf32>
    %c0_181 = arith.constant 0 : index
    %c5_182 = arith.constant 5 : index
    %c2_183 = arith.constant 2 : index
    %c0_184 = arith.constant 0 : index
    %99 = vector.load %arg1[%c0_181, %c5_182, %c2_183, %c0_184] : memref<1x18x18x4xf32, #tpu.memory_space<vmem>>, vector<1x1x16x4xf32>
    %100 = vector.shape_cast %99 : vector<1x1x16x4xf32> to vector<16x4xf32>
    %c0_185 = arith.constant 0 : index
    %c6_186 = arith.constant 6 : index
    %c0_187 = arith.constant 0 : index
    %c0_188 = arith.constant 0 : index
    %101 = vector.load %arg1[%c0_185, %c6_186, %c0_187, %c0_188] : memref<1x18x18x4xf32, #tpu.memory_space<vmem>>, vector<1x1x16x4xf32>
    %102 = vector.shape_cast %101 : vector<1x1x16x4xf32> to vector<16x4xf32>
    %c0_189 = arith.constant 0 : index
    %c6_190 = arith.constant 6 : index
    %c1_191 = arith.constant 1 : index
    %c0_192 = arith.constant 0 : index
    %103 = vector.load %arg1[%c0_189, %c6_190, %c1_191, %c0_192] : memref<1x18x18x4xf32, #tpu.memory_space<vmem>>, vector<1x1x16x4xf32>
    %104 = vector.shape_cast %103 : vector<1x1x16x4xf32> to vector<16x4xf32>
    %c0_193 = arith.constant 0 : index
    %c6_194 = arith.constant 6 : index
    %c2_195 = arith.constant 2 : index
    %c0_196 = arith.constant 0 : index
    %105 = vector.load %arg1[%c0_193, %c6_194, %c2_195, %c0_196] : memref<1x18x18x4xf32, #tpu.memory_space<vmem>>, vector<1x1x16x4xf32>
    %106 = vector.shape_cast %105 : vector<1x1x16x4xf32> to vector<16x4xf32>
    %c0_197 = arith.constant 0 : index
    %c7 = arith.constant 7 : index
    %c0_198 = arith.constant 0 : index
    %c0_199 = arith.constant 0 : index
    %107 = vector.load %arg1[%c0_197, %c7, %c0_198, %c0_199] : memref<1x18x18x4xf32, #tpu.memory_space<vmem>>, vector<1x1x16x4xf32>
    %108 = vector.shape_cast %107 : vector<1x1x16x4xf32> to vector<16x4xf32>
    %c0_200 = arith.constant 0 : index
    %c7_201 = arith.constant 7 : index
    %c1_202 = arith.constant 1 : index
    %c0_203 = arith.constant 0 : index
    %109 = vector.load %arg1[%c0_200, %c7_201, %c1_202, %c0_203] : memref<1x18x18x4xf32, #tpu.memory_space<vmem>>, vector<1x1x16x4xf32>
    %110 = vector.shape_cast %109 : vector<1x1x16x4xf32> to vector<16x4xf32>
    %c0_204 = arith.constant 0 : index
    %c7_205 = arith.constant 7 : index
    %c2_206 = arith.constant 2 : index
    %c0_207 = arith.constant 0 : index
    %111 = vector.load %arg1[%c0_204, %c7_205, %c2_206, %c0_207] : memref<1x18x18x4xf32, #tpu.memory_space<vmem>>, vector<1x1x16x4xf32>
    %112 = vector.shape_cast %111 : vector<1x1x16x4xf32> to vector<16x4xf32>
    %113 = tpu.concatenate %96, %98, %100, %102, %104, %106, %108, %110, %112 in 1 : vector<16x4xf32>, vector<16x4xf32>, vector<16x4xf32>, vector<16x4xf32>, vector<16x4xf32>, vector<16x4xf32>, vector<16x4xf32>, vector<16x4xf32>, vector<16x4xf32> -> vector<16x36xf32>
    %c0_208 = arith.constant 0 : index
    %c6_209 = arith.constant 6 : index
    %c0_210 = arith.constant 0 : index
    %c0_211 = arith.constant 0 : index
    %114 = vector.load %arg1[%c0_208, %c6_209, %c0_210, %c0_211] : memref<1x18x18x4xf32, #tpu.memory_space<vmem>>, vector<1x1x16x4xf32>
    %115 = vector.shape_cast %114 : vector<1x1x16x4xf32> to vector<16x4xf32>
    %c0_212 = arith.constant 0 : index
    %c6_213 = arith.constant 6 : index
    %c1_214 = arith.constant 1 : index
    %c0_215 = arith.constant 0 : index
    %116 = vector.load %arg1[%c0_212, %c6_213, %c1_214, %c0_215] : memref<1x18x18x4xf32, #tpu.memory_space<vmem>>, vector<1x1x16x4xf32>
    %117 = vector.shape_cast %116 : vector<1x1x16x4xf32> to vector<16x4xf32>
    %c0_216 = arith.constant 0 : index
    %c6_217 = arith.constant 6 : index
    %c2_218 = arith.constant 2 : index
    %c0_219 = arith.constant 0 : index
    %118 = vector.load %arg1[%c0_216, %c6_217, %c2_218, %c0_219] : memref<1x18x18x4xf32, #tpu.memory_space<vmem>>, vector<1x1x16x4xf32>
    %119 = vector.shape_cast %118 : vector<1x1x16x4xf32> to vector<16x4xf32>
    %c0_220 = arith.constant 0 : index
    %c7_221 = arith.constant 7 : index
    %c0_222 = arith.constant 0 : index
    %c0_223 = arith.constant 0 : index
    %120 = vector.load %arg1[%c0_220, %c7_221, %c0_222, %c0_223] : memref<1x18x18x4xf32, #tpu.memory_space<vmem>>, vector<1x1x16x4xf32>
    %121 = vector.shape_cast %120 : vector<1x1x16x4xf32> to vector<16x4xf32>
    %c0_224 = arith.constant 0 : index
    %c7_225 = arith.constant 7 : index
    %c1_226 = arith.constant 1 : index
    %c0_227 = arith.constant 0 : index
    %122 = vector.load %arg1[%c0_224, %c7_225, %c1_226, %c0_227] : memref<1x18x18x4xf32, #tpu.memory_space<vmem>>, vector<1x1x16x4xf32>
    %123 = vector.shape_cast %122 : vector<1x1x16x4xf32> to vector<16x4xf32>
    %c0_228 = arith.constant 0 : index
    %c7_229 = arith.constant 7 : index
    %c2_230 = arith.constant 2 : index
    %c0_231 = arith.constant 0 : index
    %124 = vector.load %arg1[%c0_228, %c7_229, %c2_230, %c0_231] : memref<1x18x18x4xf32, #tpu.memory_space<vmem>>, vector<1x1x16x4xf32>
    %125 = vector.shape_cast %124 : vector<1x1x16x4xf32> to vector<16x4xf32>
    %c0_232 = arith.constant 0 : index
    %c8 = arith.constant 8 : index
    %c0_233 = arith.constant 0 : index
    %c0_234 = arith.constant 0 : index
    %126 = vector.load %arg1[%c0_232, %c8, %c0_233, %c0_234] : memref<1x18x18x4xf32, #tpu.memory_space<vmem>>, vector<1x1x16x4xf32>
    %127 = vector.shape_cast %126 : vector<1x1x16x4xf32> to vector<16x4xf32>
    %c0_235 = arith.constant 0 : index
    %c8_236 = arith.constant 8 : index
    %c1_237 = arith.constant 1 : index
    %c0_238 = arith.constant 0 : index
    %128 = vector.load %arg1[%c0_235, %c8_236, %c1_237, %c0_238] : memref<1x18x18x4xf32, #tpu.memory_space<vmem>>, vector<1x1x16x4xf32>
    %129 = vector.shape_cast %128 : vector<1x1x16x4xf32> to vector<16x4xf32>
    %c0_239 = arith.constant 0 : index
    %c8_240 = arith.constant 8 : index
    %c2_241 = arith.constant 2 : index
    %c0_242 = arith.constant 0 : index
    %130 = vector.load %arg1[%c0_239, %c8_240, %c2_241, %c0_242] : memref<1x18x18x4xf32, #tpu.memory_space<vmem>>, vector<1x1x16x4xf32>
    %131 = vector.shape_cast %130 : vector<1x1x16x4xf32> to vector<16x4xf32>
    %132 = tpu.concatenate %115, %117, %119, %121, %123, %125, %127, %129, %131 in 1 : vector<16x4xf32>, vector<16x4xf32>, vector<16x4xf32>, vector<16x4xf32>, vector<16x4xf32>, vector<16x4xf32>, vector<16x4xf32>, vector<16x4xf32>, vector<16x4xf32> -> vector<16x36xf32>
    %c0_243 = arith.constant 0 : index
    %c7_244 = arith.constant 7 : index
    %c0_245 = arith.constant 0 : index
    %c0_246 = arith.constant 0 : index
    %133 = vector.load %arg1[%c0_243, %c7_244, %c0_245, %c0_246] : memref<1x18x18x4xf32, #tpu.memory_space<vmem>>, vector<1x1x16x4xf32>
    %134 = vector.shape_cast %133 : vector<1x1x16x4xf32> to vector<16x4xf32>
    %c0_247 = arith.constant 0 : index
    %c7_248 = arith.constant 7 : index
    %c1_249 = arith.constant 1 : index
    %c0_250 = arith.constant 0 : index
    %135 = vector.load %arg1[%c0_247, %c7_248, %c1_249, %c0_250] : memref<1x18x18x4xf32, #tpu.memory_space<vmem>>, vector<1x1x16x4xf32>
    %136 = vector.shape_cast %135 : vector<1x1x16x4xf32> to vector<16x4xf32>
    %c0_251 = arith.constant 0 : index
    %c7_252 = arith.constant 7 : index
    %c2_253 = arith.constant 2 : index
    %c0_254 = arith.constant 0 : index
    %137 = vector.load %arg1[%c0_251, %c7_252, %c2_253, %c0_254] : memref<1x18x18x4xf32, #tpu.memory_space<vmem>>, vector<1x1x16x4xf32>
    %138 = vector.shape_cast %137 : vector<1x1x16x4xf32> to vector<16x4xf32>
    %c0_255 = arith.constant 0 : index
    %c8_256 = arith.constant 8 : index
    %c0_257 = arith.constant 0 : index
    %c0_258 = arith.constant 0 : index
    %139 = vector.load %arg1[%c0_255, %c8_256, %c0_257, %c0_258] : memref<1x18x18x4xf32, #tpu.memory_space<vmem>>, vector<1x1x16x4xf32>
    %140 = vector.shape_cast %139 : vector<1x1x16x4xf32> to vector<16x4xf32>
    %c0_259 = arith.constant 0 : index
    %c8_260 = arith.constant 8 : index
    %c1_261 = arith.constant 1 : index
    %c0_262 = arith.constant 0 : index
    %141 = vector.load %arg1[%c0_259, %c8_260, %c1_261, %c0_262] : memref<1x18x18x4xf32, #tpu.memory_space<vmem>>, vector<1x1x16x4xf32>
    %142 = vector.shape_cast %141 : vector<1x1x16x4xf32> to vector<16x4xf32>
    %c0_263 = arith.constant 0 : index
    %c8_264 = arith.constant 8 : index
    %c2_265 = arith.constant 2 : index
    %c0_266 = arith.constant 0 : index
    %143 = vector.load %arg1[%c0_263, %c8_264, %c2_265, %c0_266] : memref<1x18x18x4xf32, #tpu.memory_space<vmem>>, vector<1x1x16x4xf32>
    %144 = vector.shape_cast %143 : vector<1x1x16x4xf32> to vector<16x4xf32>
    %c0_267 = arith.constant 0 : index
    %c9 = arith.constant 9 : index
    %c0_268 = arith.constant 0 : index
    %c0_269 = arith.constant 0 : index
    %145 = vector.load %arg1[%c0_267, %c9, %c0_268, %c0_269] : memref<1x18x18x4xf32, #tpu.memory_space<vmem>>, vector<1x1x16x4xf32>
    %146 = vector.shape_cast %145 : vector<1x1x16x4xf32> to vector<16x4xf32>
    %c0_270 = arith.constant 0 : index
    %c9_271 = arith.constant 9 : index
    %c1_272 = arith.constant 1 : index
    %c0_273 = arith.constant 0 : index
    %147 = vector.load %arg1[%c0_270, %c9_271, %c1_272, %c0_273] : memref<1x18x18x4xf32, #tpu.memory_space<vmem>>, vector<1x1x16x4xf32>
    %148 = vector.shape_cast %147 : vector<1x1x16x4xf32> to vector<16x4xf32>
    %c0_274 = arith.constant 0 : index
    %c9_275 = arith.constant 9 : index
    %c2_276 = arith.constant 2 : index
    %c0_277 = arith.constant 0 : index
    %149 = vector.load %arg1[%c0_274, %c9_275, %c2_276, %c0_277] : memref<1x18x18x4xf32, #tpu.memory_space<vmem>>, vector<1x1x16x4xf32>
    %150 = vector.shape_cast %149 : vector<1x1x16x4xf32> to vector<16x4xf32>
    %151 = tpu.concatenate %134, %136, %138, %140, %142, %144, %146, %148, %150 in 1 : vector<16x4xf32>, vector<16x4xf32>, vector<16x4xf32>, vector<16x4xf32>, vector<16x4xf32>, vector<16x4xf32>, vector<16x4xf32>, vector<16x4xf32>, vector<16x4xf32> -> vector<16x36xf32>
    %c0_278 = arith.constant 0 : index
    %c8_279 = arith.constant 8 : index
    %c0_280 = arith.constant 0 : index
    %c0_281 = arith.constant 0 : index
    %152 = vector.load %arg1[%c0_278, %c8_279, %c0_280, %c0_281] : memref<1x18x18x4xf32, #tpu.memory_space<vmem>>, vector<1x1x16x4xf32>
    %153 = vector.shape_cast %152 : vector<1x1x16x4xf32> to vector<16x4xf32>
    %c0_282 = arith.constant 0 : index
    %c8_283 = arith.constant 8 : index
    %c1_284 = arith.constant 1 : index
    %c0_285 = arith.constant 0 : index
    %154 = vector.load %arg1[%c0_282, %c8_283, %c1_284, %c0_285] : memref<1x18x18x4xf32, #tpu.memory_space<vmem>>, vector<1x1x16x4xf32>
    %155 = vector.shape_cast %154 : vector<1x1x16x4xf32> to vector<16x4xf32>
    %c0_286 = arith.constant 0 : index
    %c8_287 = arith.constant 8 : index
    %c2_288 = arith.constant 2 : index
    %c0_289 = arith.constant 0 : index
    %156 = vector.load %arg1[%c0_286, %c8_287, %c2_288, %c0_289] : memref<1x18x18x4xf32, #tpu.memory_space<vmem>>, vector<1x1x16x4xf32>
    %157 = vector.shape_cast %156 : vector<1x1x16x4xf32> to vector<16x4xf32>
    %c0_290 = arith.constant 0 : index
    %c9_291 = arith.constant 9 : index
    %c0_292 = arith.constant 0 : index
    %c0_293 = arith.constant 0 : index
    %158 = vector.load %arg1[%c0_290, %c9_291, %c0_292, %c0_293] : memref<1x18x18x4xf32, #tpu.memory_space<vmem>>, vector<1x1x16x4xf32>
    %159 = vector.shape_cast %158 : vector<1x1x16x4xf32> to vector<16x4xf32>
    %c0_294 = arith.constant 0 : index
    %c9_295 = arith.constant 9 : index
    %c1_296 = arith.constant 1 : index
    %c0_297 = arith.constant 0 : index
    %160 = vector.load %arg1[%c0_294, %c9_295, %c1_296, %c0_297] : memref<1x18x18x4xf32, #tpu.memory_space<vmem>>, vector<1x1x16x4xf32>
    %161 = vector.shape_cast %160 : vector<1x1x16x4xf32> to vector<16x4xf32>
    %c0_298 = arith.constant 0 : index
    %c9_299 = arith.constant 9 : index
    %c2_300 = arith.constant 2 : index
    %c0_301 = arith.constant 0 : index
    %162 = vector.load %arg1[%c0_298, %c9_299, %c2_300, %c0_301] : memref<1x18x18x4xf32, #tpu.memory_space<vmem>>, vector<1x1x16x4xf32>
    %163 = vector.shape_cast %162 : vector<1x1x16x4xf32> to vector<16x4xf32>
    %c0_302 = arith.constant 0 : index
    %c10 = arith.constant 10 : index
    %c0_303 = arith.constant 0 : index
    %c0_304 = arith.constant 0 : index
    %164 = vector.load %arg1[%c0_302, %c10, %c0_303, %c0_304] : memref<1x18x18x4xf32, #tpu.memory_space<vmem>>, vector<1x1x16x4xf32>
    %165 = vector.shape_cast %164 : vector<1x1x16x4xf32> to vector<16x4xf32>
    %c0_305 = arith.constant 0 : index
    %c10_306 = arith.constant 10 : index
    %c1_307 = arith.constant 1 : index
    %c0_308 = arith.constant 0 : index
    %166 = vector.load %arg1[%c0_305, %c10_306, %c1_307, %c0_308] : memref<1x18x18x4xf32, #tpu.memory_space<vmem>>, vector<1x1x16x4xf32>
    %167 = vector.shape_cast %166 : vector<1x1x16x4xf32> to vector<16x4xf32>
    %c0_309 = arith.constant 0 : index
    %c10_310 = arith.constant 10 : index
    %c2_311 = arith.constant 2 : index
    %c0_312 = arith.constant 0 : index
    %168 = vector.load %arg1[%c0_309, %c10_310, %c2_311, %c0_312] : memref<1x18x18x4xf32, #tpu.memory_space<vmem>>, vector<1x1x16x4xf32>
    %169 = vector.shape_cast %168 : vector<1x1x16x4xf32> to vector<16x4xf32>
    %170 = tpu.concatenate %153, %155, %157, %159, %161, %163, %165, %167, %169 in 1 : vector<16x4xf32>, vector<16x4xf32>, vector<16x4xf32>, vector<16x4xf32>, vector<16x4xf32>, vector<16x4xf32>, vector<16x4xf32>, vector<16x4xf32>, vector<16x4xf32> -> vector<16x36xf32>
    %c0_313 = arith.constant 0 : index
    %c9_314 = arith.constant 9 : index
    %c0_315 = arith.constant 0 : index
    %c0_316 = arith.constant 0 : index
    %171 = vector.load %arg1[%c0_313, %c9_314, %c0_315, %c0_316] : memref<1x18x18x4xf32, #tpu.memory_space<vmem>>, vector<1x1x16x4xf32>
    %172 = vector.shape_cast %171 : vector<1x1x16x4xf32> to vector<16x4xf32>
    %c0_317 = arith.constant 0 : index
    %c9_318 = arith.constant 9 : index
    %c1_319 = arith.constant 1 : index
    %c0_320 = arith.constant 0 : index
    %173 = vector.load %arg1[%c0_317, %c9_318, %c1_319, %c0_320] : memref<1x18x18x4xf32, #tpu.memory_space<vmem>>, vector<1x1x16x4xf32>
    %174 = vector.shape_cast %173 : vector<1x1x16x4xf32> to vector<16x4xf32>
    %c0_321 = arith.constant 0 : index
    %c9_322 = arith.constant 9 : index
    %c2_323 = arith.constant 2 : index
    %c0_324 = arith.constant 0 : index
    %175 = vector.load %arg1[%c0_321, %c9_322, %c2_323, %c0_324] : memref<1x18x18x4xf32, #tpu.memory_space<vmem>>, vector<1x1x16x4xf32>
    %176 = vector.shape_cast %175 : vector<1x1x16x4xf32> to vector<16x4xf32>
    %c0_325 = arith.constant 0 : index
    %c10_326 = arith.constant 10 : index
    %c0_327 = arith.constant 0 : index
    %c0_328 = arith.constant 0 : index
    %177 = vector.load %arg1[%c0_325, %c10_326, %c0_327, %c0_328] : memref<1x18x18x4xf32, #tpu.memory_space<vmem>>, vector<1x1x16x4xf32>
    %178 = vector.shape_cast %177 : vector<1x1x16x4xf32> to vector<16x4xf32>
    %c0_329 = arith.constant 0 : index
    %c10_330 = arith.constant 10 : index
    %c1_331 = arith.constant 1 : index
    %c0_332 = arith.constant 0 : index
    %179 = vector.load %arg1[%c0_329, %c10_330, %c1_331, %c0_332] : memref<1x18x18x4xf32, #tpu.memory_space<vmem>>, vector<1x1x16x4xf32>
    %180 = vector.shape_cast %179 : vector<1x1x16x4xf32> to vector<16x4xf32>
    %c0_333 = arith.constant 0 : index
    %c10_334 = arith.constant 10 : index
    %c2_335 = arith.constant 2 : index
    %c0_336 = arith.constant 0 : index
    %181 = vector.load %arg1[%c0_333, %c10_334, %c2_335, %c0_336] : memref<1x18x18x4xf32, #tpu.memory_space<vmem>>, vector<1x1x16x4xf32>
    %182 = vector.shape_cast %181 : vector<1x1x16x4xf32> to vector<16x4xf32>
    %c0_337 = arith.constant 0 : index
    %c11 = arith.constant 11 : index
    %c0_338 = arith.constant 0 : index
    %c0_339 = arith.constant 0 : index
    %183 = vector.load %arg1[%c0_337, %c11, %c0_338, %c0_339] : memref<1x18x18x4xf32, #tpu.memory_space<vmem>>, vector<1x1x16x4xf32>
    %184 = vector.shape_cast %183 : vector<1x1x16x4xf32> to vector<16x4xf32>
    %c0_340 = arith.constant 0 : index
    %c11_341 = arith.constant 11 : index
    %c1_342 = arith.constant 1 : index
    %c0_343 = arith.constant 0 : index
    %185 = vector.load %arg1[%c0_340, %c11_341, %c1_342, %c0_343] : memref<1x18x18x4xf32, #tpu.memory_space<vmem>>, vector<1x1x16x4xf32>
    %186 = vector.shape_cast %185 : vector<1x1x16x4xf32> to vector<16x4xf32>
    %c0_344 = arith.constant 0 : index
    %c11_345 = arith.constant 11 : index
    %c2_346 = arith.constant 2 : index
    %c0_347 = arith.constant 0 : index
    %187 = vector.load %arg1[%c0_344, %c11_345, %c2_346, %c0_347] : memref<1x18x18x4xf32, #tpu.memory_space<vmem>>, vector<1x1x16x4xf32>
    %188 = vector.shape_cast %187 : vector<1x1x16x4xf32> to vector<16x4xf32>
    %189 = tpu.concatenate %172, %174, %176, %178, %180, %182, %184, %186, %188 in 1 : vector<16x4xf32>, vector<16x4xf32>, vector<16x4xf32>, vector<16x4xf32>, vector<16x4xf32>, vector<16x4xf32>, vector<16x4xf32>, vector<16x4xf32>, vector<16x4xf32> -> vector<16x36xf32>
    %c0_348 = arith.constant 0 : index
    %c10_349 = arith.constant 10 : index
    %c0_350 = arith.constant 0 : index
    %c0_351 = arith.constant 0 : index
    %190 = vector.load %arg1[%c0_348, %c10_349, %c0_350, %c0_351] : memref<1x18x18x4xf32, #tpu.memory_space<vmem>>, vector<1x1x16x4xf32>
    %191 = vector.shape_cast %190 : vector<1x1x16x4xf32> to vector<16x4xf32>
    %c0_352 = arith.constant 0 : index
    %c10_353 = arith.constant 10 : index
    %c1_354 = arith.constant 1 : index
    %c0_355 = arith.constant 0 : index
    %192 = vector.load %arg1[%c0_352, %c10_353, %c1_354, %c0_355] : memref<1x18x18x4xf32, #tpu.memory_space<vmem>>, vector<1x1x16x4xf32>
    %193 = vector.shape_cast %192 : vector<1x1x16x4xf32> to vector<16x4xf32>
    %c0_356 = arith.constant 0 : index
    %c10_357 = arith.constant 10 : index
    %c2_358 = arith.constant 2 : index
    %c0_359 = arith.constant 0 : index
    %194 = vector.load %arg1[%c0_356, %c10_357, %c2_358, %c0_359] : memref<1x18x18x4xf32, #tpu.memory_space<vmem>>, vector<1x1x16x4xf32>
    %195 = vector.shape_cast %194 : vector<1x1x16x4xf32> to vector<16x4xf32>
    %c0_360 = arith.constant 0 : index
    %c11_361 = arith.constant 11 : index
    %c0_362 = arith.constant 0 : index
    %c0_363 = arith.constant 0 : index
    %196 = vector.load %arg1[%c0_360, %c11_361, %c0_362, %c0_363] : memref<1x18x18x4xf32, #tpu.memory_space<vmem>>, vector<1x1x16x4xf32>
    %197 = vector.shape_cast %196 : vector<1x1x16x4xf32> to vector<16x4xf32>
    %c0_364 = arith.constant 0 : index
    %c11_365 = arith.constant 11 : index
    %c1_366 = arith.constant 1 : index
    %c0_367 = arith.constant 0 : index
    %198 = vector.load %arg1[%c0_364, %c11_365, %c1_366, %c0_367] : memref<1x18x18x4xf32, #tpu.memory_space<vmem>>, vector<1x1x16x4xf32>
    %199 = vector.shape_cast %198 : vector<1x1x16x4xf32> to vector<16x4xf32>
    %c0_368 = arith.constant 0 : index
    %c11_369 = arith.constant 11 : index
    %c2_370 = arith.constant 2 : index
    %c0_371 = arith.constant 0 : index
    %200 = vector.load %arg1[%c0_368, %c11_369, %c2_370, %c0_371] : memref<1x18x18x4xf32, #tpu.memory_space<vmem>>, vector<1x1x16x4xf32>
    %201 = vector.shape_cast %200 : vector<1x1x16x4xf32> to vector<16x4xf32>
    %c0_372 = arith.constant 0 : index
    %c12 = arith.constant 12 : index
    %c0_373 = arith.constant 0 : index
    %c0_374 = arith.constant 0 : index
    %202 = vector.load %arg1[%c0_372, %c12, %c0_373, %c0_374] : memref<1x18x18x4xf32, #tpu.memory_space<vmem>>, vector<1x1x16x4xf32>
    %203 = vector.shape_cast %202 : vector<1x1x16x4xf32> to vector<16x4xf32>
    %c0_375 = arith.constant 0 : index
    %c12_376 = arith.constant 12 : index
    %c1_377 = arith.constant 1 : index
    %c0_378 = arith.constant 0 : index
    %204 = vector.load %arg1[%c0_375, %c12_376, %c1_377, %c0_378] : memref<1x18x18x4xf32, #tpu.memory_space<vmem>>, vector<1x1x16x4xf32>
    %205 = vector.shape_cast %204 : vector<1x1x16x4xf32> to vector<16x4xf32>
    %c0_379 = arith.constant 0 : index
    %c12_380 = arith.constant 12 : index
    %c2_381 = arith.constant 2 : index
    %c0_382 = arith.constant 0 : index
    %206 = vector.load %arg1[%c0_379, %c12_380, %c2_381, %c0_382] : memref<1x18x18x4xf32, #tpu.memory_space<vmem>>, vector<1x1x16x4xf32>
    %207 = vector.shape_cast %206 : vector<1x1x16x4xf32> to vector<16x4xf32>
    %208 = tpu.concatenate %191, %193, %195, %197, %199, %201, %203, %205, %207 in 1 : vector<16x4xf32>, vector<16x4xf32>, vector<16x4xf32>, vector<16x4xf32>, vector<16x4xf32>, vector<16x4xf32>, vector<16x4xf32>, vector<16x4xf32>, vector<16x4xf32> -> vector<16x36xf32>
    %c0_383 = arith.constant 0 : index
    %c11_384 = arith.constant 11 : index
    %c0_385 = arith.constant 0 : index
    %c0_386 = arith.constant 0 : index
    %209 = vector.load %arg1[%c0_383, %c11_384, %c0_385, %c0_386] : memref<1x18x18x4xf32, #tpu.memory_space<vmem>>, vector<1x1x16x4xf32>
    %210 = vector.shape_cast %209 : vector<1x1x16x4xf32> to vector<16x4xf32>
    %c0_387 = arith.constant 0 : index
    %c11_388 = arith.constant 11 : index
    %c1_389 = arith.constant 1 : index
    %c0_390 = arith.constant 0 : index
    %211 = vector.load %arg1[%c0_387, %c11_388, %c1_389, %c0_390] : memref<1x18x18x4xf32, #tpu.memory_space<vmem>>, vector<1x1x16x4xf32>
    %212 = vector.shape_cast %211 : vector<1x1x16x4xf32> to vector<16x4xf32>
    %c0_391 = arith.constant 0 : index
    %c11_392 = arith.constant 11 : index
    %c2_393 = arith.constant 2 : index
    %c0_394 = arith.constant 0 : index
    %213 = vector.load %arg1[%c0_391, %c11_392, %c2_393, %c0_394] : memref<1x18x18x4xf32, #tpu.memory_space<vmem>>, vector<1x1x16x4xf32>
    %214 = vector.shape_cast %213 : vector<1x1x16x4xf32> to vector<16x4xf32>
    %c0_395 = arith.constant 0 : index
    %c12_396 = arith.constant 12 : index
    %c0_397 = arith.constant 0 : index
    %c0_398 = arith.constant 0 : index
    %215 = vector.load %arg1[%c0_395, %c12_396, %c0_397, %c0_398] : memref<1x18x18x4xf32, #tpu.memory_space<vmem>>, vector<1x1x16x4xf32>
    %216 = vector.shape_cast %215 : vector<1x1x16x4xf32> to vector<16x4xf32>
    %c0_399 = arith.constant 0 : index
    %c12_400 = arith.constant 12 : index
    %c1_401 = arith.constant 1 : index
    %c0_402 = arith.constant 0 : index
    %217 = vector.load %arg1[%c0_399, %c12_400, %c1_401, %c0_402] : memref<1x18x18x4xf32, #tpu.memory_space<vmem>>, vector<1x1x16x4xf32>
    %218 = vector.shape_cast %217 : vector<1x1x16x4xf32> to vector<16x4xf32>
    %c0_403 = arith.constant 0 : index
    %c12_404 = arith.constant 12 : index
    %c2_405 = arith.constant 2 : index
    %c0_406 = arith.constant 0 : index
    %219 = vector.load %arg1[%c0_403, %c12_404, %c2_405, %c0_406] : memref<1x18x18x4xf32, #tpu.memory_space<vmem>>, vector<1x1x16x4xf32>
    %220 = vector.shape_cast %219 : vector<1x1x16x4xf32> to vector<16x4xf32>
    %c0_407 = arith.constant 0 : index
    %c13 = arith.constant 13 : index
    %c0_408 = arith.constant 0 : index
    %c0_409 = arith.constant 0 : index
    %221 = vector.load %arg1[%c0_407, %c13, %c0_408, %c0_409] : memref<1x18x18x4xf32, #tpu.memory_space<vmem>>, vector<1x1x16x4xf32>
    %222 = vector.shape_cast %221 : vector<1x1x16x4xf32> to vector<16x4xf32>
    %c0_410 = arith.constant 0 : index
    %c13_411 = arith.constant 13 : index
    %c1_412 = arith.constant 1 : index
    %c0_413 = arith.constant 0 : index
    %223 = vector.load %arg1[%c0_410, %c13_411, %c1_412, %c0_413] : memref<1x18x18x4xf32, #tpu.memory_space<vmem>>, vector<1x1x16x4xf32>
    %224 = vector.shape_cast %223 : vector<1x1x16x4xf32> to vector<16x4xf32>
    %c0_414 = arith.constant 0 : index
    %c13_415 = arith.constant 13 : index
    %c2_416 = arith.constant 2 : index
    %c0_417 = arith.constant 0 : index
    %225 = vector.load %arg1[%c0_414, %c13_415, %c2_416, %c0_417] : memref<1x18x18x4xf32, #tpu.memory_space<vmem>>, vector<1x1x16x4xf32>
    %226 = vector.shape_cast %225 : vector<1x1x16x4xf32> to vector<16x4xf32>
    %227 = tpu.concatenate %210, %212, %214, %216, %218, %220, %222, %224, %226 in 1 : vector<16x4xf32>, vector<16x4xf32>, vector<16x4xf32>, vector<16x4xf32>, vector<16x4xf32>, vector<16x4xf32>, vector<16x4xf32>, vector<16x4xf32>, vector<16x4xf32> -> vector<16x36xf32>
    %c0_418 = arith.constant 0 : index
    %c12_419 = arith.constant 12 : index
    %c0_420 = arith.constant 0 : index
    %c0_421 = arith.constant 0 : index
    %228 = vector.load %arg1[%c0_418, %c12_419, %c0_420, %c0_421] : memref<1x18x18x4xf32, #tpu.memory_space<vmem>>, vector<1x1x16x4xf32>
    %229 = vector.shape_cast %228 : vector<1x1x16x4xf32> to vector<16x4xf32>
    %c0_422 = arith.constant 0 : index
    %c12_423 = arith.constant 12 : index
    %c1_424 = arith.constant 1 : index
    %c0_425 = arith.constant 0 : index
    %230 = vector.load %arg1[%c0_422, %c12_423, %c1_424, %c0_425] : memref<1x18x18x4xf32, #tpu.memory_space<vmem>>, vector<1x1x16x4xf32>
    %231 = vector.shape_cast %230 : vector<1x1x16x4xf32> to vector<16x4xf32>
    %c0_426 = arith.constant 0 : index
    %c12_427 = arith.constant 12 : index
    %c2_428 = arith.constant 2 : index
    %c0_429 = arith.constant 0 : index
    %232 = vector.load %arg1[%c0_426, %c12_427, %c2_428, %c0_429] : memref<1x18x18x4xf32, #tpu.memory_space<vmem>>, vector<1x1x16x4xf32>
    %233 = vector.shape_cast %232 : vector<1x1x16x4xf32> to vector<16x4xf32>
    %c0_430 = arith.constant 0 : index
    %c13_431 = arith.constant 13 : index
    %c0_432 = arith.constant 0 : index
    %c0_433 = arith.constant 0 : index
    %234 = vector.load %arg1[%c0_430, %c13_431, %c0_432, %c0_433] : memref<1x18x18x4xf32, #tpu.memory_space<vmem>>, vector<1x1x16x4xf32>
    %235 = vector.shape_cast %234 : vector<1x1x16x4xf32> to vector<16x4xf32>
    %c0_434 = arith.constant 0 : index
    %c13_435 = arith.constant 13 : index
    %c1_436 = arith.constant 1 : index
    %c0_437 = arith.constant 0 : index
    %236 = vector.load %arg1[%c0_434, %c13_435, %c1_436, %c0_437] : memref<1x18x18x4xf32, #tpu.memory_space<vmem>>, vector<1x1x16x4xf32>
    %237 = vector.shape_cast %236 : vector<1x1x16x4xf32> to vector<16x4xf32>
    %c0_438 = arith.constant 0 : index
    %c13_439 = arith.constant 13 : index
    %c2_440 = arith.constant 2 : index
    %c0_441 = arith.constant 0 : index
    %238 = vector.load %arg1[%c0_438, %c13_439, %c2_440, %c0_441] : memref<1x18x18x4xf32, #tpu.memory_space<vmem>>, vector<1x1x16x4xf32>
    %239 = vector.shape_cast %238 : vector<1x1x16x4xf32> to vector<16x4xf32>
    %c0_442 = arith.constant 0 : index
    %c14 = arith.constant 14 : index
    %c0_443 = arith.constant 0 : index
    %c0_444 = arith.constant 0 : index
    %240 = vector.load %arg1[%c0_442, %c14, %c0_443, %c0_444] : memref<1x18x18x4xf32, #tpu.memory_space<vmem>>, vector<1x1x16x4xf32>
    %241 = vector.shape_cast %240 : vector<1x1x16x4xf32> to vector<16x4xf32>
    %c0_445 = arith.constant 0 : index
    %c14_446 = arith.constant 14 : index
    %c1_447 = arith.constant 1 : index
    %c0_448 = arith.constant 0 : index
    %242 = vector.load %arg1[%c0_445, %c14_446, %c1_447, %c0_448] : memref<1x18x18x4xf32, #tpu.memory_space<vmem>>, vector<1x1x16x4xf32>
    %243 = vector.shape_cast %242 : vector<1x1x16x4xf32> to vector<16x4xf32>
    %c0_449 = arith.constant 0 : index
    %c14_450 = arith.constant 14 : index
    %c2_451 = arith.constant 2 : index
    %c0_452 = arith.constant 0 : index
    %244 = vector.load %arg1[%c0_449, %c14_450, %c2_451, %c0_452] : memref<1x18x18x4xf32, #tpu.memory_space<vmem>>, vector<1x1x16x4xf32>
    %245 = vector.shape_cast %244 : vector<1x1x16x4xf32> to vector<16x4xf32>
    %246 = tpu.concatenate %229, %231, %233, %235, %237, %239, %241, %243, %245 in 1 : vector<16x4xf32>, vector<16x4xf32>, vector<16x4xf32>, vector<16x4xf32>, vector<16x4xf32>, vector<16x4xf32>, vector<16x4xf32>, vector<16x4xf32>, vector<16x4xf32> -> vector<16x36xf32>
    %c0_453 = arith.constant 0 : index
    %c13_454 = arith.constant 13 : index
    %c0_455 = arith.constant 0 : index
    %c0_456 = arith.constant 0 : index
    %247 = vector.load %arg1[%c0_453, %c13_454, %c0_455, %c0_456] : memref<1x18x18x4xf32, #tpu.memory_space<vmem>>, vector<1x1x16x4xf32>
    %248 = vector.shape_cast %247 : vector<1x1x16x4xf32> to vector<16x4xf32>
    %c0_457 = arith.constant 0 : index
    %c13_458 = arith.constant 13 : index
    %c1_459 = arith.constant 1 : index
    %c0_460 = arith.constant 0 : index
    %249 = vector.load %arg1[%c0_457, %c13_458, %c1_459, %c0_460] : memref<1x18x18x4xf32, #tpu.memory_space<vmem>>, vector<1x1x16x4xf32>
    %250 = vector.shape_cast %249 : vector<1x1x16x4xf32> to vector<16x4xf32>
    %c0_461 = arith.constant 0 : index
    %c13_462 = arith.constant 13 : index
    %c2_463 = arith.constant 2 : index
    %c0_464 = arith.constant 0 : index
    %251 = vector.load %arg1[%c0_461, %c13_462, %c2_463, %c0_464] : memref<1x18x18x4xf32, #tpu.memory_space<vmem>>, vector<1x1x16x4xf32>
    %252 = vector.shape_cast %251 : vector<1x1x16x4xf32> to vector<16x4xf32>
    %c0_465 = arith.constant 0 : index
    %c14_466 = arith.constant 14 : index
    %c0_467 = arith.constant 0 : index
    %c0_468 = arith.constant 0 : index
    %253 = vector.load %arg1[%c0_465, %c14_466, %c0_467, %c0_468] : memref<1x18x18x4xf32, #tpu.memory_space<vmem>>, vector<1x1x16x4xf32>
    %254 = vector.shape_cast %253 : vector<1x1x16x4xf32> to vector<16x4xf32>
    %c0_469 = arith.constant 0 : index
    %c14_470 = arith.constant 14 : index
    %c1_471 = arith.constant 1 : index
    %c0_472 = arith.constant 0 : index
    %255 = vector.load %arg1[%c0_469, %c14_470, %c1_471, %c0_472] : memref<1x18x18x4xf32, #tpu.memory_space<vmem>>, vector<1x1x16x4xf32>
    %256 = vector.shape_cast %255 : vector<1x1x16x4xf32> to vector<16x4xf32>
    %c0_473 = arith.constant 0 : index
    %c14_474 = arith.constant 14 : index
    %c2_475 = arith.constant 2 : index
    %c0_476 = arith.constant 0 : index
    %257 = vector.load %arg1[%c0_473, %c14_474, %c2_475, %c0_476] : memref<1x18x18x4xf32, #tpu.memory_space<vmem>>, vector<1x1x16x4xf32>
    %258 = vector.shape_cast %257 : vector<1x1x16x4xf32> to vector<16x4xf32>
    %c0_477 = arith.constant 0 : index
    %c15 = arith.constant 15 : index
    %c0_478 = arith.constant 0 : index
    %c0_479 = arith.constant 0 : index
    %259 = vector.load %arg1[%c0_477, %c15, %c0_478, %c0_479] : memref<1x18x18x4xf32, #tpu.memory_space<vmem>>, vector<1x1x16x4xf32>
    %260 = vector.shape_cast %259 : vector<1x1x16x4xf32> to vector<16x4xf32>
    %c0_480 = arith.constant 0 : index
    %c15_481 = arith.constant 15 : index
    %c1_482 = arith.constant 1 : index
    %c0_483 = arith.constant 0 : index
    %261 = vector.load %arg1[%c0_480, %c15_481, %c1_482, %c0_483] : memref<1x18x18x4xf32, #tpu.memory_space<vmem>>, vector<1x1x16x4xf32>
    %262 = vector.shape_cast %261 : vector<1x1x16x4xf32> to vector<16x4xf32>
    %c0_484 = arith.constant 0 : index
    %c15_485 = arith.constant 15 : index
    %c2_486 = arith.constant 2 : index
    %c0_487 = arith.constant 0 : index
    %263 = vector.load %arg1[%c0_484, %c15_485, %c2_486, %c0_487] : memref<1x18x18x4xf32, #tpu.memory_space<vmem>>, vector<1x1x16x4xf32>
    %264 = vector.shape_cast %263 : vector<1x1x16x4xf32> to vector<16x4xf32>
    %265 = tpu.concatenate %248, %250, %252, %254, %256, %258, %260, %262, %264 in 1 : vector<16x4xf32>, vector<16x4xf32>, vector<16x4xf32>, vector<16x4xf32>, vector<16x4xf32>, vector<16x4xf32>, vector<16x4xf32>, vector<16x4xf32>, vector<16x4xf32> -> vector<16x36xf32>
    %c0_488 = arith.constant 0 : index
    %c14_489 = arith.constant 14 : index
    %c0_490 = arith.constant 0 : index
    %c0_491 = arith.constant 0 : index
    %266 = vector.load %arg1[%c0_488, %c14_489, %c0_490, %c0_491] : memref<1x18x18x4xf32, #tpu.memory_space<vmem>>, vector<1x1x16x4xf32>
    %267 = vector.shape_cast %266 : vector<1x1x16x4xf32> to vector<16x4xf32>
    %c0_492 = arith.constant 0 : index
    %c14_493 = arith.constant 14 : index
    %c1_494 = arith.constant 1 : index
    %c0_495 = arith.constant 0 : index
    %268 = vector.load %arg1[%c0_492, %c14_493, %c1_494, %c0_495] : memref<1x18x18x4xf32, #tpu.memory_space<vmem>>, vector<1x1x16x4xf32>
    %269 = vector.shape_cast %268 : vector<1x1x16x4xf32> to vector<16x4xf32>
    %c0_496 = arith.constant 0 : index
    %c14_497 = arith.constant 14 : index
    %c2_498 = arith.constant 2 : index
    %c0_499 = arith.constant 0 : index
    %270 = vector.load %arg1[%c0_496, %c14_497, %c2_498, %c0_499] : memref<1x18x18x4xf32, #tpu.memory_space<vmem>>, vector<1x1x16x4xf32>
    %271 = vector.shape_cast %270 : vector<1x1x16x4xf32> to vector<16x4xf32>
    %c0_500 = arith.constant 0 : index
    %c15_501 = arith.constant 15 : index
    %c0_502 = arith.constant 0 : index
    %c0_503 = arith.constant 0 : index
    %272 = vector.load %arg1[%c0_500, %c15_501, %c0_502, %c0_503] : memref<1x18x18x4xf32, #tpu.memory_space<vmem>>, vector<1x1x16x4xf32>
    %273 = vector.shape_cast %272 : vector<1x1x16x4xf32> to vector<16x4xf32>
    %c0_504 = arith.constant 0 : index
    %c15_505 = arith.constant 15 : index
    %c1_506 = arith.constant 1 : index
    %c0_507 = arith.constant 0 : index
    %274 = vector.load %arg1[%c0_504, %c15_505, %c1_506, %c0_507] : memref<1x18x18x4xf32, #tpu.memory_space<vmem>>, vector<1x1x16x4xf32>
    %275 = vector.shape_cast %274 : vector<1x1x16x4xf32> to vector<16x4xf32>
    %c0_508 = arith.constant 0 : index
    %c15_509 = arith.constant 15 : index
    %c2_510 = arith.constant 2 : index
    %c0_511 = arith.constant 0 : index
    %276 = vector.load %arg1[%c0_508, %c15_509, %c2_510, %c0_511] : memref<1x18x18x4xf32, #tpu.memory_space<vmem>>, vector<1x1x16x4xf32>
    %277 = vector.shape_cast %276 : vector<1x1x16x4xf32> to vector<16x4xf32>
    %c0_512 = arith.constant 0 : index
    %c16 = arith.constant 16 : index
    %c0_513 = arith.constant 0 : index
    %c0_514 = arith.constant 0 : index
    %278 = vector.load %arg1[%c0_512, %c16, %c0_513, %c0_514] : memref<1x18x18x4xf32, #tpu.memory_space<vmem>>, vector<1x1x16x4xf32>
    %279 = vector.shape_cast %278 : vector<1x1x16x4xf32> to vector<16x4xf32>
    %c0_515 = arith.constant 0 : index
    %c16_516 = arith.constant 16 : index
    %c1_517 = arith.constant 1 : index
    %c0_518 = arith.constant 0 : index
    %280 = vector.load %arg1[%c0_515, %c16_516, %c1_517, %c0_518] : memref<1x18x18x4xf32, #tpu.memory_space<vmem>>, vector<1x1x16x4xf32>
    %281 = vector.shape_cast %280 : vector<1x1x16x4xf32> to vector<16x4xf32>
    %c0_519 = arith.constant 0 : index
    %c16_520 = arith.constant 16 : index
    %c2_521 = arith.constant 2 : index
    %c0_522 = arith.constant 0 : index
    %282 = vector.load %arg1[%c0_519, %c16_520, %c2_521, %c0_522] : memref<1x18x18x4xf32, #tpu.memory_space<vmem>>, vector<1x1x16x4xf32>
    %283 = vector.shape_cast %282 : vector<1x1x16x4xf32> to vector<16x4xf32>
    %284 = tpu.concatenate %267, %269, %271, %273, %275, %277, %279, %281, %283 in 1 : vector<16x4xf32>, vector<16x4xf32>, vector<16x4xf32>, vector<16x4xf32>, vector<16x4xf32>, vector<16x4xf32>, vector<16x4xf32>, vector<16x4xf32>, vector<16x4xf32> -> vector<16x36xf32>
    %c0_523 = arith.constant 0 : index
    %c15_524 = arith.constant 15 : index
    %c0_525 = arith.constant 0 : index
    %c0_526 = arith.constant 0 : index
    %285 = vector.load %arg1[%c0_523, %c15_524, %c0_525, %c0_526] : memref<1x18x18x4xf32, #tpu.memory_space<vmem>>, vector<1x1x16x4xf32>
    %286 = vector.shape_cast %285 : vector<1x1x16x4xf32> to vector<16x4xf32>
    %c0_527 = arith.constant 0 : index
    %c15_528 = arith.constant 15 : index
    %c1_529 = arith.constant 1 : index
    %c0_530 = arith.constant 0 : index
    %287 = vector.load %arg1[%c0_527, %c15_528, %c1_529, %c0_530] : memref<1x18x18x4xf32, #tpu.memory_space<vmem>>, vector<1x1x16x4xf32>
    %288 = vector.shape_cast %287 : vector<1x1x16x4xf32> to vector<16x4xf32>
    %c0_531 = arith.constant 0 : index
    %c15_532 = arith.constant 15 : index
    %c2_533 = arith.constant 2 : index
    %c0_534 = arith.constant 0 : index
    %289 = vector.load %arg1[%c0_531, %c15_532, %c2_533, %c0_534] : memref<1x18x18x4xf32, #tpu.memory_space<vmem>>, vector<1x1x16x4xf32>
    %290 = vector.shape_cast %289 : vector<1x1x16x4xf32> to vector<16x4xf32>
    %c0_535 = arith.constant 0 : index
    %c16_536 = arith.constant 16 : index
    %c0_537 = arith.constant 0 : index
    %c0_538 = arith.constant 0 : index
    %291 = vector.load %arg1[%c0_535, %c16_536, %c0_537, %c0_538] : memref<1x18x18x4xf32, #tpu.memory_space<vmem>>, vector<1x1x16x4xf32>
    %292 = vector.shape_cast %291 : vector<1x1x16x4xf32> to vector<16x4xf32>
    %c0_539 = arith.constant 0 : index
    %c16_540 = arith.constant 16 : index
    %c1_541 = arith.constant 1 : index
    %c0_542 = arith.constant 0 : index
    %293 = vector.load %arg1[%c0_539, %c16_540, %c1_541, %c0_542] : memref<1x18x18x4xf32, #tpu.memory_space<vmem>>, vector<1x1x16x4xf32>
    %294 = vector.shape_cast %293 : vector<1x1x16x4xf32> to vector<16x4xf32>
    %c0_543 = arith.constant 0 : index
    %c16_544 = arith.constant 16 : index
    %c2_545 = arith.constant 2 : index
    %c0_546 = arith.constant 0 : index
    %295 = vector.load %arg1[%c0_543, %c16_544, %c2_545, %c0_546] : memref<1x18x18x4xf32, #tpu.memory_space<vmem>>, vector<1x1x16x4xf32>
    %296 = vector.shape_cast %295 : vector<1x1x16x4xf32> to vector<16x4xf32>
    %c0_547 = arith.constant 0 : index
    %c17 = arith.constant 17 : index
    %c0_548 = arith.constant 0 : index
    %c0_549 = arith.constant 0 : index
    %297 = vector.load %arg1[%c0_547, %c17, %c0_548, %c0_549] : memref<1x18x18x4xf32, #tpu.memory_space<vmem>>, vector<1x1x16x4xf32>
    %298 = vector.shape_cast %297 : vector<1x1x16x4xf32> to vector<16x4xf32>
    %c0_550 = arith.constant 0 : index
    %c17_551 = arith.constant 17 : index
    %c1_552 = arith.constant 1 : index
    %c0_553 = arith.constant 0 : index
    %299 = vector.load %arg1[%c0_550, %c17_551, %c1_552, %c0_553] : memref<1x18x18x4xf32, #tpu.memory_space<vmem>>, vector<1x1x16x4xf32>
    %300 = vector.shape_cast %299 : vector<1x1x16x4xf32> to vector<16x4xf32>
    %c0_554 = arith.constant 0 : index
    %c17_555 = arith.constant 17 : index
    %c2_556 = arith.constant 2 : index
    %c0_557 = arith.constant 0 : index
    %301 = vector.load %arg1[%c0_554, %c17_555, %c2_556, %c0_557] : memref<1x18x18x4xf32, #tpu.memory_space<vmem>>, vector<1x1x16x4xf32>
    %302 = vector.shape_cast %301 : vector<1x1x16x4xf32> to vector<16x4xf32>
    %303 = tpu.concatenate %286, %288, %290, %292, %294, %296, %298, %300, %302 in 1 : vector<16x4xf32>, vector<16x4xf32>, vector<16x4xf32>, vector<16x4xf32>, vector<16x4xf32>, vector<16x4xf32>, vector<16x4xf32>, vector<16x4xf32>, vector<16x4xf32> -> vector<16x36xf32>
    %304 = tpu.concatenate %18, %37, %56, %75, %94, %113, %132, %151, %170, %189, %208, %227, %246, %265, %284, %303 in 0 : vector<16x36xf32>, vector<16x36xf32>, vector<16x36xf32>, vector<16x36xf32>, vector<16x36xf32>, vector<16x36xf32>, vector<16x36xf32>, vector<16x36xf32>, vector<16x36xf32>, vector<16x36xf32>, vector<16x36xf32>, vector<16x36xf32>, vector<16x36xf32>, vector<16x36xf32>, vector<16x36xf32>, vector<16x36xf32> -> vector<256x36xf32>
    %305 = arith.truncf %304 : vector<256x36xf32> to vector<256x36xbf16>
    %c0_558 = arith.constant 0 : index
    %c0_559 = arith.constant 0 : index
    %306 = vector.load %arg2[%c0_558, %c0_559] : memref<36x128xbf16, #tpu.memory_space<vmem>>, vector<36x128xbf16>
    %cst = arith.constant dense<0.000000e+00> : vector<256x128xf32>
    %307 = tpu.matmul %305, %306, %cst {dimension_numbers = #tpu.dot_dimension_numbers<[1], [0], [0], [1], [0, 0, 1, 1], [], []>} : vector<256x36xbf16>, vector<36x128xbf16>, vector<256x128xf32> -> vector<256x128xf32>
    %c0_560 = arith.constant 0 : index
    %c0_561 = arith.constant 0 : index
    %c0_562 = arith.constant 0 : index
    %308 = vector.load %arg3[%c0_560, %c0_561, %c0_562] : memref<1x256x128xf32, #tpu.memory_space<vmem>>, vector<1x256x128xf32>
    %309 = vector.shape_cast %308 : vector<1x256x128xf32> to vector<256x128xf32>
    %310 = vector.shape_cast %307 : vector<256x128xf32> to vector<1x256x128xf32>
    tpu.vector_store %arg3[%c0_560, %c0_561, %c0_562], %310 {strides = array<i32>} : memref<1x256x128xf32, #tpu.memory_space<vmem>>, vector<1x256x128xf32>,
    %cst_563 = arith.constant dense<0.000000e+00> : vector<128xf32>
    %311 = vector.multi_reduction <add>, %307, %cst_563 [0] : vector<256x128xf32> to vector<128xf32>
    %312 = vector.shape_cast %311 : vector<128xf32> to vector<1x128xf32>
    %c0_564 = arith.constant 0 : index
    %c0_565 = arith.constant 0 : index
    %c0_566 = arith.constant 0 : index
    %313 = vector.load %arg4[%c0_564, %c0_565, %c0_566] : memref<1x1x128xf32, #tpu.memory_space<vmem>>, vector<1x1x128xf32>
    %314 = vector.shape_cast %313 : vector<1x1x128xf32> to vector<1x128xf32>
    %315 = vector.shape_cast %312 : vector<1x128xf32> to vector<1x1x128xf32>
    tpu.vector_store %arg4[%c0_564, %c0_565, %c0_566], %315 {strides = array<i32>} : memref<1x1x128xf32, #tpu.memory_space<vmem>>, vector<1x1x128xf32>,
    %316 = arith.mulf %307, %307 : vector<256x128xf32>
    %cst_567 = arith.constant dense<0.000000e+00> : vector<128xf32>
    %317 = vector.multi_reduction <add>, %316, %cst_567 [0] : vector<256x128xf32> to vector<128xf32>
    %318 = vector.shape_cast %317 : vector<128xf32> to vector<1x128xf32>
    %c0_568 = arith.constant 0 : index
    %c0_569 = arith.constant 0 : index
    %c0_570 = arith.constant 0 : index
    %319 = vector.load %arg5[%c0_568, %c0_569, %c0_570] : memref<1x1x128xf32, #tpu.memory_space<vmem>>, vector<1x1x128xf32>
    %320 = vector.shape_cast %319 : vector<1x1x128xf32> to vector<1x128xf32>
    %321 = vector.shape_cast %318 : vector<1x128xf32> to vector<1x1x128xf32>
    tpu.vector_store %arg5[%c0_568, %c0_569, %c0_570], %321 {strides = array<i32>} : memref<1x1x128xf32, #tpu.memory_space<vmem>>, vector<1x1x128xf32>,
    return
  }
  func.func @transform_0(%arg0: i32) -> (i32, i32, i32, i32) {
    %c0_i32 = arith.constant 0 : i32
    %c0_i32_0 = arith.constant 0 : i32
    %c0_i32_1 = arith.constant 0 : i32
    %c0_i32_2 = arith.constant 0 : i32
    return %arg0, %c0_i32, %c0_i32_0, %c0_i32_1 : i32, i32, i32, i32
  }
  func.func @transform_1(%arg0: i32) -> (i32, i32) {
    %c0_i32 = arith.constant 0 : i32
    %c0_i32_0 = arith.constant 0 : i32
    %c0_i32_1 = arith.constant 0 : i32
    return %c0_i32, %c0_i32_0 : i32, i32
  }
  func.func @transform_2(%arg0: i32) -> (i32, i32, i32) {
    %c0_i32 = arith.constant 0 : i32
    %c0_i32_0 = arith.constant 0 : i32
    %c0_i32_1 = arith.constant 0 : i32
    return %arg0, %c0_i32, %c0_i32_0 : i32, i32, i32
  }
  func.func @transform_3(%arg0: i32) -> (i32, i32, i32) {
    %c0_i32 = arith.constant 0 : i32
    %c0_i32_0 = arith.constant 0 : i32
    %c0_i32_1 = arith.constant 0 : i32
    return %arg0, %c0_i32, %c0_i32_0 : i32, i32, i32
  }
  func.func @transform_4(%arg0: i32) -> (i32, i32, i32) {
    %c0_i32 = arith.constant 0 : i32
    %c0_i32_0 = arith.constant 0 : i32
    %c0_i32_1 = arith.constant 0 : i32
    return %arg0, %c0_i32, %c0_i32_0 : i32, i32, i32
  }
}

</mosaic_0001>

<llo_original>
// kernel: conv_tag_para_forward.3
$region0: #{conv_tag_para_forward.3}
  #allocation0 [shape = 'u32[]', space=smem, size = 0x4, offset = 0x4, fixed_abs, tag = 'smem constant byte address 0x4 - core index']
  #allocation1 [shape = 'u32[144,128]{1,0:T(1,128)}', space=vmem, size = 0x12000, scoped, tag = 'internal scratch']
  %s0 = inlined_call_operand.vmem [shape: f32[512,128], index: 0, kind: input, shape index: {}]
  %s1 = inlined_call_operand.vmem [shape: f32[1,128], index: 1, kind: input, shape index: {}]
  %s2 = inlined_call_operand.vmem [shape: f32[1,128], index: 2, kind: input, shape index: {}]
  %s3 = inlined_call_operand.vmem [shape: f32[1,128], index: 3, kind: input, shape index: {}]
  %s4 = inlined_call_operand.vmem [shape: f32[512,128], index: 4, kind: output, shape index: {}]
  %s5 = sld [smem:[#allocation0]]
  $region26: #{conv_tag_para_forward.3} parent=0
    _
  %s7 = ssub.s32 1, %s5
  %s8 = scalar_select 0, %s7, %s5
  // Predicated region
  $region2: #{conv_tag_para_forward.3} parent=0 // pred_check
    _
  $region3: #{conv_tag_para_forward.3} parent=0 // pred_check_branch
    %10 = sbr.rel (0) target = $region5
  $region4: #{conv_tag_para_forward.3} parent=0 // pred_region
    _
  $region5: #{conv_tag_para_forward.3} parent=0 // pred_fallthru
    _
  // Predicated region
  $region6: #{conv_tag_para_forward.3} parent=0 // pred_check
    _
  $region7: #{conv_tag_para_forward.3} parent=0 // pred_check_branch
    %12 = sbr.rel (0) target = $region9
  $region8: #{conv_tag_para_forward.3} parent=0 // pred_region
    _
  $region9: #{conv_tag_para_forward.3} parent=0 // pred_fallthru
    _
  // Predicated region
  $region10: #{conv_tag_para_forward.3} parent=0 // pred_check
    _
  $region11: #{conv_tag_para_forward.3} parent=0 // pred_check_branch
    %14 = sbr.rel (0) target = $region13
  $region12: #{conv_tag_para_forward.3} parent=0 // pred_region
    _
  $region13: #{conv_tag_para_forward.3} parent=0 // pred_fallthru
    _
  // Predicated region
  $region14: #{conv_tag_para_forward.3} parent=0 // pred_check
    _
  $region15: #{conv_tag_para_forward.3} parent=0 // pred_check_branch
    %16 = sbr.rel (0) target = $region17
  $region16: #{conv_tag_para_forward.3} parent=0 // pred_region
    _
  $region17: #{conv_tag_para_forward.3} parent=0 // pred_fallthru
    _
  %v17 = vld [vmem:[%s0] sm:$0xff]
  %v18 = vld [vmem:[%s0 + $0x8] sm:$0xff]
  %v19 = vld [vmem:[%s0 + $0x10] sm:$0xff]
  %v20 = vld [vmem:[%s0 + $0x18] sm:$0xff]
  %v21 = vld [vmem:[%s0 + $0x20] sm:$0xff]
  %v22 = vld [vmem:[%s0 + $0x28] sm:$0xff]
  %v23 = vld [vmem:[%s0 + $0x30] sm:$0xff]
  %v24 = vld [vmem:[%s0 + $0x38] sm:$0xff]
  %v25 = vld [vmem:[%s0 + $0x40] sm:$0xff]
  %v26 = vld [vmem:[%s0 + $0x48] sm:$0xff]
  %v27 = vld [vmem:[%s0 + $0x50] sm:$0xff]
  %v28 = vld [vmem:[%s0 + $0x58] sm:$0xff]
  %v29 = vld [vmem:[%s0 + $0x60] sm:$0xff]
  %v30 = vld [vmem:[%s0 + $0x68] sm:$0xff]
  %v31 = vld [vmem:[%s0 + $0x70] sm:$0xff]
  %v32 = vld [vmem:[%s0 + $0x78] sm:$0xff]
  %v33 = vld [vmem:[%s0 + $0x80] sm:$0xff]
  %v34 = vld [vmem:[%s0 + $0x88] sm:$0xff]
  %v35 = vld [vmem:[%s0 + $0x90] sm:$0xff]
  %v36 = vld [vmem:[%s0 + $0x98] sm:$0xff]
  %v37 = vld [vmem:[%s0 + $0xa0] sm:$0xff]
  %v38 = vld [vmem:[%s0 + $0xa8] sm:$0xff]
  %v39 = vld [vmem:[%s0 + $0xb0] sm:$0xff]
  %v40 = vld [vmem:[%s0 + $0xb8] sm:$0xff]
  %v41 = vld [vmem:[%s0 + $0xc0] sm:$0xff]
  %v42 = vld [vmem:[%s0 + $0xc8] sm:$0xff]
  %v43 = vld [vmem:[%s0 + $0xd0] sm:$0xff]
  %v44 = vld [vmem:[%s0 + $0xd8] sm:$0xff]
  %v45 = vld [vmem:[%s0 + $0xe0] sm:$0xff]
  %v46 = vld [vmem:[%s0 + $0xe8] sm:$0xff]
  %v47 = vld [vmem:[%s0 + $0xf0] sm:$0xff]
  %v48 = vld [vmem:[%s0 + $0xf8] sm:$0xff]
  %v49 = vld [vmem:[%s0 + $0x100] sm:$0xff]
  %v50 = vld [vmem:[%s0 + $0x108] sm:$0xff]
  %v51 = vld [vmem:[%s0 + $0x110] sm:$0xff]
  %v52 = vld [vmem:[%s0 + $0x118] sm:$0xff]
  %v53 = vld [vmem:[%s0 + $0x120] sm:$0xff]
  %v54 = vld [vmem:[%s0 + $0x128] sm:$0xff]
  %v55 = vld [vmem:[%s0 + $0x130] sm:$0xff]
  %v56 = vld [vmem:[%s0 + $0x138] sm:$0xff]
  %v57 = vld [vmem:[%s0 + $0x140] sm:$0xff]
  %v58 = vld [vmem:[%s0 + $0x148] sm:$0xff]
  %v59 = vld [vmem:[%s0 + $0x150] sm:$0xff]
  %v60 = vld [vmem:[%s0 + $0x158] sm:$0xff]
  %v61 = vld [vmem:[%s0 + $0x160] sm:$0xff]
  %v62 = vld [vmem:[%s0 + $0x168] sm:$0xff]
  %v63 = vld [vmem:[%s0 + $0x170] sm:$0xff]
  %v64 = vld [vmem:[%s0 + $0x178] sm:$0xff]
  %v65 = vld [vmem:[%s0 + $0x180] sm:$0xff]
  %v66 = vld [vmem:[%s0 + $0x188] sm:$0xff]
  %v67 = vld [vmem:[%s0 + $0x190] sm:$0xff]
  %v68 = vld [vmem:[%s0 + $0x198] sm:$0xff]
  %v69 = vld [vmem:[%s0 + $0x1a0] sm:$0xff]
  %v70 = vld [vmem:[%s0 + $0x1a8] sm:$0xff]
  %v71 = vld [vmem:[%s0 + $0x1b0] sm:$0xff]
  %v72 = vld [vmem:[%s0 + $0x1b8] sm:$0xff]
  %v73 = vld [vmem:[%s0 + $0x1c0] sm:$0xff]
  %v74 = vld [vmem:[%s0 + $0x1c8] sm:$0xff]
  %v75 = vld [vmem:[%s0 + $0x1d0] sm:$0xff]
  %v76 = vld [vmem:[%s0 + $0x1d8] sm:$0xff]
  %v77 = vld [vmem:[%s0 + $0x1e0] sm:$0xff]
  %v78 = vld [vmem:[%s0 + $0x1e8] sm:$0xff]
  %v79 = vld [vmem:[%s0 + $0x1f0] sm:$0xff]
  %v80 = vld [vmem:[%s0 + $0x1f8] sm:$0xff]
  %v81 = vld [vmem:[%s1] sm:$0x1]
  %v83 = vlaneseq
  %v84 = vshrl.u32 %v83, 7
  %v85 = vsub.s32 0, %v84
  %v86 = vrot.slane %v81, %v85
  %v88 = vmul.f32 %v17, %v86
  %v89 = vmul.f32 %v18, %v86
  %v90 = vmul.f32 %v19, %v86
  %v91 = vmul.f32 %v20, %v86
  %v92 = vmul.f32 %v21, %v86
  %v93 = vmul.f32 %v22, %v86
  %v94 = vmul.f32 %v23, %v86
  %v95 = vmul.f32 %v24, %v86
  %v96 = vmul.f32 %v25, %v86
  %v97 = vmul.f32 %v26, %v86
  %v98 = vmul.f32 %v27, %v86
  %v99 = vmul.f32 %v28, %v86
  %v100 = vmul.f32 %v29, %v86
  %v101 = vmul.f32 %v30, %v86
  %v102 = vmul.f32 %v31, %v86
  %v103 = vmul.f32 %v32, %v86
  %v104 = vmul.f32 %v33, %v86
  %v105 = vmul.f32 %v34, %v86
  %v106 = vmul.f32 %v35, %v86
  %v107 = vmul.f32 %v36, %v86
  %v108 = vmul.f32 %v37, %v86
  %v109 = vmul.f32 %v38, %v86
  %v110 = vmul.f32 %v39, %v86
  %v111 = vmul.f32 %v40, %v86
  %v112 = vmul.f32 %v41, %v86
  %v113 = vmul.f32 %v42, %v86
  %v114 = vmul.f32 %v43, %v86
  %v115 = vmul.f32 %v44, %v86
  %v116 = vmul.f32 %v45, %v86
  %v117 = vmul.f32 %v46, %v86
  %v118 = vmul.f32 %v47, %v86
  %v119 = vmul.f32 %v48, %v86
  %v120 = vmul.f32 %v49, %v86
  %v121 = vmul.f32 %v50, %v86
  %v122 = vmul.f32 %v51, %v86
  %v123 = vmul.f32 %v52, %v86
  %v124 = vmul.f32 %v53, %v86
  %v125 = vmul.f32 %v54, %v86
  %v126 = vmul.f32 %v55, %v86
  %v127 = vmul.f32 %v56, %v86
  %v128 = vmul.f32 %v57, %v86
  %v129 = vmul.f32 %v58, %v86
  %v130 = vmul.f32 %v59, %v86
  %v131 = vmul.f32 %v60, %v86
  %v132 = vmul.f32 %v61, %v86
  %v133 = vmul.f32 %v62, %v86
  %v134 = vmul.f32 %v63, %v86
  %v135 = vmul.f32 %v64, %v86
  %v136 = vmul.f32 %v65, %v86
  %v137 = vmul.f32 %v66, %v86
  %v138 = vmul.f32 %v67, %v86
  %v139 = vmul.f32 %v68, %v86
  %v140 = vmul.f32 %v69, %v86
  %v141 = vmul.f32 %v70, %v86
  %v142 = vmul.f32 %v71, %v86
  %v143 = vmul.f32 %v72, %v86
  %v144 = vmul.f32 %v73, %v86
  %v145 = vmul.f32 %v74, %v86
  %v146 = vmul.f32 %v75, %v86
  %v147 = vmul.f32 %v76, %v86
  %v148 = vmul.f32 %v77, %v86
  %v149 = vmul.f32 %v78, %v86
  %v150 = vmul.f32 %v79, %v86
  %v151 = vmul.f32 %v80, %v86
  %v152 = vld [vmem:[%s2] sm:$0x1]
  %v154 = vlaneseq
  %v155 = vshrl.u32 %v154, 7
  %v156 = vsub.s32 0, %v155
  %v157 = vrot.slane %v152, %v156
  %v159 = vadd.f32 %v88, %v157
  %v160 = vadd.f32 %v89, %v157
  %v161 = vadd.f32 %v90, %v157
  %v162 = vadd.f32 %v91, %v157
  %v163 = vadd.f32 %v92, %v157
  %v164 = vadd.f32 %v93, %v157
  %v165 = vadd.f32 %v94, %v157
  %v166 = vadd.f32 %v95, %v157
  %v167 = vadd.f32 %v96, %v157
  %v168 = vadd.f32 %v97, %v157
  %v169 = vadd.f32 %v98, %v157
  %v170 = vadd.f32 %v99, %v157
  %v171 = vadd.f32 %v100, %v157
  %v172 = vadd.f32 %v101, %v157
  %v173 = vadd.f32 %v102, %v157
  %v174 = vadd.f32 %v103, %v157
  %v175 = vadd.f32 %v104, %v157
  %v176 = vadd.f32 %v105, %v157
  %v177 = vadd.f32 %v106, %v157
  %v178 = vadd.f32 %v107, %v157
  %v179 = vadd.f32 %v108, %v157
  %v180 = vadd.f32 %v109, %v157
  %v181 = vadd.f32 %v110, %v157
  %v182 = vadd.f32 %v111, %v157
  %v183 = vadd.f32 %v112, %v157
  %v184 = vadd.f32 %v113, %v157
  %v185 = vadd.f32 %v114, %v157
  %v186 = vadd.f32 %v115, %v157
  %v187 = vadd.f32 %v116, %v157
  %v188 = vadd.f32 %v117, %v157
  %v189 = vadd.f32 %v118, %v157
  %v190 = vadd.f32 %v119, %v157
  %v191 = vadd.f32 %v120, %v157
  %v192 = vadd.f32 %v121, %v157
  %v193 = vadd.f32 %v122, %v157
  %v194 = vadd.f32 %v123, %v157
  %v195 = vadd.f32 %v124, %v157
  %v196 = vadd.f32 %v125, %v157
  %v197 = vadd.f32 %v126, %v157
  %v198 = vadd.f32 %v127, %v157
  %v199 = vadd.f32 %v128, %v157
  %v200 = vadd.f32 %v129, %v157
  %v201 = vadd.f32 %v130, %v157
  %v202 = vadd.f32 %v131, %v157
  %v203 = vadd.f32 %v132, %v157
  %v204 = vadd.f32 %v133, %v157
  %v205 = vadd.f32 %v134, %v157
  %v206 = vadd.f32 %v135, %v157
  %v207 = vadd.f32 %v136, %v157
  %v208 = vadd.f32 %v137, %v157
  %v209 = vadd.f32 %v138, %v157
  %v210 = vadd.f32 %v139, %v157
  %v211 = vadd.f32 %v140, %v157
  %v212 = vadd.f32 %v141, %v157
  %v213 = vadd.f32 %v142, %v157
  %v214 = vadd.f32 %v143, %v157
  %v215 = vadd.f32 %v144, %v157
  %v216 = vadd.f32 %v145, %v157
  %v217 = vadd.f32 %v146, %v157
  %v218 = vadd.f32 %v147, %v157
  %v219 = vadd.f32 %v148, %v157
  %v220 = vadd.f32 %v149, %v157
  %v221 = vadd.f32 %v150, %v157
  %v222 = vadd.f32 %v151, %v157
  %vm223 = vcmp.ge.f32.partialorder %v159, 0.0
  %vm224 = vcmp.ge.f32.partialorder %v160, 0.0
  %vm225 = vcmp.ge.f32.partialorder %v161, 0.0
  %vm226 = vcmp.ge.f32.partialorder %v162, 0.0
  %vm227 = vcmp.ge.f32.partialorder %v163, 0.0
  %vm228 = vcmp.ge.f32.partialorder %v164, 0.0
  %vm229 = vcmp.ge.f32.partialorder %v165, 0.0
  %vm230 = vcmp.ge.f32.partialorder %v166, 0.0
  %vm231 = vcmp.ge.f32.partialorder %v167, 0.0
  %vm232 = vcmp.ge.f32.partialorder %v168, 0.0
  %vm233 = vcmp.ge.f32.partialorder %v169, 0.0
  %vm234 = vcmp.ge.f32.partialorder %v170, 0.0
  %vm235 = vcmp.ge.f32.partialorder %v171, 0.0
  %vm236 = vcmp.ge.f32.partialorder %v172, 0.0
  %vm237 = vcmp.ge.f32.partialorder %v173, 0.0
  %vm238 = vcmp.ge.f32.partialorder %v174, 0.0
  %vm239 = vcmp.ge.f32.partialorder %v175, 0.0
  %vm240 = vcmp.ge.f32.partialorder %v176, 0.0
  %vm241 = vcmp.ge.f32.partialorder %v177, 0.0
  %vm242 = vcmp.ge.f32.partialorder %v178, 0.0
  %vm243 = vcmp.ge.f32.partialorder %v179, 0.0
  %vm244 = vcmp.ge.f32.partialorder %v180, 0.0
  %vm245 = vcmp.ge.f32.partialorder %v181, 0.0
  %vm246 = vcmp.ge.f32.partialorder %v182, 0.0
  %vm247 = vcmp.ge.f32.partialorder %v183, 0.0
  %vm248 = vcmp.ge.f32.partialorder %v184, 0.0
  %vm249 = vcmp.ge.f32.partialorder %v185, 0.0
  %vm250 = vcmp.ge.f32.partialorder %v186, 0.0
  %vm251 = vcmp.ge.f32.partialorder %v187, 0.0
  %vm252 = vcmp.ge.f32.partialorder %v188, 0.0
  %vm253 = vcmp.ge.f32.partialorder %v189, 0.0
  %vm254 = vcmp.ge.f32.partialorder %v190, 0.0
  %vm255 = vcmp.ge.f32.partialorder %v191, 0.0
  %vm256 = vcmp.ge.f32.partialorder %v192, 0.0
  %vm257 = vcmp.ge.f32.partialorder %v193, 0.0
  %vm258 = vcmp.ge.f32.partialorder %v194, 0.0
  %vm259 = vcmp.ge.f32.partialorder %v195, 0.0
  %vm260 = vcmp.ge.f32.partialorder %v196, 0.0
  %vm261 = vcmp.ge.f32.partialorder %v197, 0.0
  %vm262 = vcmp.ge.f32.partialorder %v198, 0.0
  %vm263 = vcmp.ge.f32.partialorder %v199, 0.0
  %vm264 = vcmp.ge.f32.partialorder %v200, 0.0
  %vm265 = vcmp.ge.f32.partialorder %v201, 0.0
  %vm266 = vcmp.ge.f32.partialorder %v202, 0.0
  %vm267 = vcmp.ge.f32.partialorder %v203, 0.0
  %vm268 = vcmp.ge.f32.partialorder %v204, 0.0
  %vm269 = vcmp.ge.f32.partialorder %v205, 0.0
  %vm270 = vcmp.ge.f32.partialorder %v206, 0.0
  %vm271 = vcmp.ge.f32.partialorder %v207, 0.0
  %vm272 = vcmp.ge.f32.partialorder %v208, 0.0
  %vm273 = vcmp.ge.f32.partialorder %v209, 0.0
  %vm274 = vcmp.ge.f32.partialorder %v210, 0.0
  %vm275 = vcmp.ge.f32.partialorder %v211, 0.0
  %vm276 = vcmp.ge.f32.partialorder %v212, 0.0
  %vm277 = vcmp.ge.f32.partialorder %v213, 0.0
  %vm278 = vcmp.ge.f32.partialorder %v214, 0.0
  %vm279 = vcmp.ge.f32.partialorder %v215, 0.0
  %vm280 = vcmp.ge.f32.partialorder %v216, 0.0
  %vm281 = vcmp.ge.f32.partialorder %v217, 0.0
  %vm282 = vcmp.ge.f32.partialorder %v218, 0.0
  %vm283 = vcmp.ge.f32.partialorder %v219, 0.0
  %vm284 = vcmp.ge.f32.partialorder %v220, 0.0
  %vm285 = vcmp.ge.f32.partialorder %v221, 0.0
  %vm286 = vcmp.ge.f32.partialorder %v222, 0.0
  %v287 = vld [vmem:[%s3] sm:$0x1]
  %v289 = vlaneseq
  %v290 = vshrl.u32 %v289, 7
  %v291 = vsub.s32 0, %v290
  %v292 = vrot.slane %v287, %v291
  %v294 = vmul.f32 %v292, %v159
  %v295 = vmul.f32 %v292, %v160
  %v296 = vmul.f32 %v292, %v161
  %v297 = vmul.f32 %v292, %v162
  %v298 = vmul.f32 %v292, %v163
  %v299 = vmul.f32 %v292, %v164
  %v300 = vmul.f32 %v292, %v165
  %v301 = vmul.f32 %v292, %v166
  %v302 = vmul.f32 %v292, %v167
  %v303 = vmul.f32 %v292, %v168
  %v304 = vmul.f32 %v292, %v169
  %v305 = vmul.f32 %v292, %v170
  %v306 = vmul.f32 %v292, %v171
  %v307 = vmul.f32 %v292, %v172
  %v308 = vmul.f32 %v292, %v173
  %v309 = vmul.f32 %v292, %v174
  %v310 = vmul.f32 %v292, %v175
  %v311 = vmul.f32 %v292, %v176
  %v312 = vmul.f32 %v292, %v177
  %v313 = vmul.f32 %v292, %v178
  %v314 = vmul.f32 %v292, %v179
  %v315 = vmul.f32 %v292, %v180
  %v316 = vmul.f32 %v292, %v181
  %v317 = vmul.f32 %v292, %v182
  %v318 = vmul.f32 %v292, %v183
  %v319 = vmul.f32 %v292, %v184
  %v320 = vmul.f32 %v292, %v185
  %v321 = vmul.f32 %v292, %v186
  %v322 = vmul.f32 %v292, %v187
  %v323 = vmul.f32 %v292, %v188
  %v324 = vmul.f32 %v292, %v189
  %v325 = vmul.f32 %v292, %v190
  %v326 = vmul.f32 %v292, %v191
  %v327 = vmul.f32 %v292, %v192
  %v328 = vmul.f32 %v292, %v193
  %v329 = vmul.f32 %v292, %v194
  %v330 = vmul.f32 %v292, %v195
  %v331 = vmul.f32 %v292, %v196
  %v332 = vmul.f32 %v292, %v197
  %v333 = vmul.f32 %v292, %v198
  %v334 = vmul.f32 %v292, %v199
  %v335 = vmul.f32 %v292, %v200
  %v336 = vmul.f32 %v292, %v201
  %v337 = vmul.f32 %v292, %v202
  %v338 = vmul.f32 %v292, %v203
  %v339 = vmul.f32 %v292, %v204
  %v340 = vmul.f32 %v292, %v205
  %v341 = vmul.f32 %v292, %v206
  %v342 = vmul.f32 %v292, %v207
  %v343 = vmul.f32 %v292, %v208
  %v344 = vmul.f32 %v292, %v209
  %v345 = vmul.f32 %v292, %v210
  %v346 = vmul.f32 %v292, %v211
  %v347 = vmul.f32 %v292, %v212
  %v348 = vmul.f32 %v292, %v213
  %v349 = vmul.f32 %v292, %v214
  %v350 = vmul.f32 %v292, %v215
  %v351 = vmul.f32 %v292, %v216
  %v352 = vmul.f32 %v292, %v217
  %v353 = vmul.f32 %v292, %v218
  %v354 = vmul.f32 %v292, %v219
  %v355 = vmul.f32 %v292, %v220
  %v356 = vmul.f32 %v292, %v221
  %v357 = vmul.f32 %v292, %v222
  %v358 = vsel %vm223, %v159, %v294
  %v359 = vsel %vm224, %v160, %v295
  %v360 = vsel %vm225, %v161, %v296
  %v361 = vsel %vm226, %v162, %v297
  %v362 = vsel %vm227, %v163, %v298
  %v363 = vsel %vm228, %v164, %v299
  %v364 = vsel %vm229, %v165, %v300
  %v365 = vsel %vm230, %v166, %v301
  %v366 = vsel %vm231, %v167, %v302
  %v367 = vsel %vm232, %v168, %v303
  %v368 = vsel %vm233, %v169, %v304
  %v369 = vsel %vm234, %v170, %v305
  %v370 = vsel %vm235, %v171, %v306
  %v371 = vsel %vm236, %v172, %v307
  %v372 = vsel %vm237, %v173, %v308
  %v373 = vsel %vm238, %v174, %v309
  %v374 = vsel %vm239, %v175, %v310
  %v375 = vsel %vm240, %v176, %v311
  %v376 = vsel %vm241, %v177, %v312
  %v377 = vsel %vm242, %v178, %v313
  %v378 = vsel %vm243, %v179, %v314
  %v379 = vsel %vm244, %v180, %v315
  %v380 = vsel %vm245, %v181, %v316
  %v381 = vsel %vm246, %v182, %v317
  %v382 = vsel %vm247, %v183, %v318
  %v383 = vsel %vm248, %v184, %v319
  %v384 = vsel %vm249, %v185, %v320
  %v385 = vsel %vm250, %v186, %v321
  %v386 = vsel %vm251, %v187, %v322
  %v387 = vsel %vm252, %v188, %v323
  %v388 = vsel %vm253, %v189, %v324
  %v389 = vsel %vm254, %v190, %v325
  %v390 = vsel %vm255, %v191, %v326
  %v391 = vsel %vm256, %v192, %v327
  %v392 = vsel %vm257, %v193, %v328
  %v393 = vsel %vm258, %v194, %v329
  %v394 = vsel %vm259, %v195, %v330
  %v395 = vsel %vm260, %v196, %v331
  %v396 = vsel %vm261, %v197, %v332
  %v397 = vsel %vm262, %v198, %v333
  %v398 = vsel %vm263, %v199, %v334
  %v399 = vsel %vm264, %v200, %v335
  %v400 = vsel %vm265, %v201, %v336
  %v401 = vsel %vm266, %v202, %v337
  %v402 = vsel %vm267, %v203, %v338
  %v403 = vsel %vm268, %v204, %v339
  %v404 = vsel %vm269, %v205, %v340
  %v405 = vsel %vm270, %v206, %v341
  %v406 = vsel %vm271, %v207, %v342
  %v407 = vsel %vm272, %v208, %v343
  %v408 = vsel %vm273, %v209, %v344
  %v409 = vsel %vm274, %v210, %v345
  %v410 = vsel %vm275, %v211, %v346
  %v411 = vsel %vm276, %v212, %v347
  %v412 = vsel %vm277, %v213, %v348
  %v413 = vsel %vm278, %v214, %v349
  %v414 = vsel %vm279, %v215, %v350
  %v415 = vsel %vm280, %v216, %v351
  %v416 = vsel %vm281, %v217, %v352
  %v417 = vsel %vm282, %v218, %v353
  %v418 = vsel %vm283, %v219, %v354
  %v419 = vsel %vm284, %v220, %v355
  %v420 = vsel %vm285, %v221, %v356
  %v421 = vsel %vm286, %v222, %v357
  %422 = vst [vmem:[%s4] sm:$0xff] %v358
  %423 = vst [vmem:[%s4 + $0x8] sm:$0xff] %v359
  %424 = vst [vmem:[%s4 + $0x10] sm:$0xff] %v360
  %425 = vst [vmem:[%s4 + $0x18] sm:$0xff] %v361
  %426 = vst [vmem:[%s4 + $0x20] sm:$0xff] %v362
  %427 = vst [vmem:[%s4 + $0x28] sm:$0xff] %v363
  %428 = vst [vmem:[%s4 + $0x30] sm:$0xff] %v364
  %429 = vst [vmem:[%s4 + $0x38] sm:$0xff] %v365
  %430 = vst [vmem:[%s4 + $0x40] sm:$0xff] %v366
  %431 = vst [vmem:[%s4 + $0x48] sm:$0xff] %v367
  %432 = vst [vmem:[%s4 + $0x50] sm:$0xff] %v368
  %433 = vst [vmem:[%s4 + $0x58] sm:$0xff] %v369
  %434 = vst [vmem:[%s4 + $0x60] sm:$0xff] %v370
  %435 = vst [vmem:[%s4 + $0x68] sm:$0xff] %v371
  %436 = vst [vmem:[%s4 + $0x70] sm:$0xff] %v372
  %437 = vst [vmem:[%s4 + $0x78] sm:$0xff] %v373
  %438 = vst [vmem:[%s4 + $0x80] sm:$0xff] %v374
  %439 = vst [vmem:[%s4 + $0x88] sm:$0xff] %v375
  %440 = vst [vmem:[%s4 + $0x90] sm:$0xff] %v376
  %441 = vst [vmem:[%s4 + $0x98] sm:$0xff] %v377
  %442 = vst [vmem:[%s4 + $0xa0] sm:$0xff] %v378
  %443 = vst [vmem:[%s4 + $0xa8] sm:$0xff] %v379
  %444 = vst [vmem:[%s4 + $0xb0] sm:$0xff] %v380
  %445 = vst [vmem:[%s4 + $0xb8] sm:$0xff] %v381
  %446 = vst [vmem:[%s4 + $0xc0] sm:$0xff] %v382
  %447 = vst [vmem:[%s4 + $0xc8] sm:$0xff] %v383
  %448 = vst [vmem:[%s4 + $0xd0] sm:$0xff] %v384
  %449 = vst [vmem:[%s4 + $0xd8] sm:$0xff] %v385
  %450 = vst [vmem:[%s4 + $0xe0] sm:$0xff] %v386
  %451 = vst [vmem:[%s4 + $0xe8] sm:$0xff] %v387
  %452 = vst [vmem:[%s4 + $0xf0] sm:$0xff] %v388
  %453 = vst [vmem:[%s4 + $0xf8] sm:$0xff] %v389
  %454 = vst [vmem:[%s4 + $0x100] sm:$0xff] %v390
  %455 = vst [vmem:[%s4 + $0x108] sm:$0xff] %v391
  %456 = vst [vmem:[%s4 + $0x110] sm:$0xff] %v392
  %457 = vst [vmem:[%s4 + $0x118] sm:$0xff] %v393
  %458 = vst [vmem:[%s4 + $0x120] sm:$0xff] %v394
  %459 = vst [vmem:[%s4 + $0x128] sm:$0xff] %v395
  %460 = vst [vmem:[%s4 + $0x130] sm:$0xff] %v396
  %461 = vst [vmem:[%s4 + $0x138] sm:$0xff] %v397
  %462 = vst [vmem:[%s4 + $0x140] sm:$0xff] %v398
  %463 = vst [vmem:[%s4 + $0x148] sm:$0xff] %v399
  %464 = vst [vmem:[%s4 + $0x150] sm:$0xff] %v400
  %465 = vst [vmem:[%s4 + $0x158] sm:$0xff] %v401
  %466 = vst [vmem:[%s4 + $0x160] sm:$0xff] %v402
  %467 = vst [vmem:[%s4 + $0x168] sm:$0xff] %v403
  %468 = vst [vmem:[%s4 + $0x170] sm:$0xff] %v404
  %469 = vst [vmem:[%s4 + $0x178] sm:$0xff] %v405
  %470 = vst [vmem:[%s4 + $0x180] sm:$0xff] %v406
  %471 = vst [vmem:[%s4 + $0x188] sm:$0xff] %v407
  %472 = vst [vmem:[%s4 + $0x190] sm:$0xff] %v408
  %473 = vst [vmem:[%s4 + $0x198] sm:$0xff] %v409
  %474 = vst [vmem:[%s4 + $0x1a0] sm:$0xff] %v410
  %475 = vst [vmem:[%s4 + $0x1a8] sm:$0xff] %v411
  %476 = vst [vmem:[%s4 + $0x1b0] sm:$0xff] %v412
  %477 = vst [vmem:[%s4 + $0x1b8] sm:$0xff] %v413
  %478 = vst [vmem:[%s4 + $0x1c0] sm:$0xff] %v414
  %479 = vst [vmem:[%s4 + $0x1c8] sm:$0xff] %v415
  %480 = vst [vmem:[%s4 + $0x1d0] sm:$0xff] %v416
  %481 = vst [vmem:[%s4 + $0x1d8] sm:$0xff] %v417
  %482 = vst [vmem:[%s4 + $0x1e0] sm:$0xff] %v418
  %483 = vst [vmem:[%s4 + $0x1e8] sm:$0xff] %v419
  %484 = vst [vmem:[%s4 + $0x1f0] sm:$0xff] %v420
  %485 = vst [vmem:[%s4 + $0x1f8] sm:$0xff] %v421
  // Predicated region
  $region18: #{conv_tag_para_forward.3} parent=0 // pred_check
    _
  $region19: #{conv_tag_para_forward.3} parent=0 // pred_check_branch
    %487 = sbr.rel (0) target = $region21
  $region20: #{conv_tag_para_forward.3} parent=0 // pred_region
    _
  $region21: #{conv_tag_para_forward.3} parent=0 // pred_fallthru
    _
  // Predicated region
  $region22: #{conv_tag_para_forward.3} parent=0 // pred_check
    _
  $region23: #{conv_tag_para_forward.3} parent=0 // pred_check_branch
    %489 = sbr.rel (0) target = $region25
  $region24: #{conv_tag_para_forward.3} parent=0 // pred_region
    _
  $region25: #{conv_tag_para_forward.3} parent=0 // pred_fallthru
    _

// kernel: conv_tag_para_forward.2
$region0: #{conv_tag_para_forward.2}
  #allocation0 [shape = 'u32[]', space=smem, size = 0x4, offset = 0x4, fixed_abs, tag = 'smem constant byte address 0x4 - core index']
  #allocation1 [shape = 'u32[144,128]{1,0:T(1,128)}', space=vmem, size = 0x12000, scoped, tag = 'internal scratch']
  %s0 = inlined_call_operand.vmem [shape: f32[2,18,18,4], index: 0, kind: input, shape index: {}]
  %s1 = inlined_call_operand.vmem [shape: bf16[36,128], index: 1, kind: input, shape index: {}]
  %s2 = inlined_call_operand.vmem [shape: f32[2,256,128], index: 2, kind: output, shape index: {0}]
  %s3 = inlined_call_operand.vmem [shape: f32[2,1,128], index: 3, kind: output, shape index: {1}]
  %s4 = inlined_call_operand.vmem [shape: f32[2,1,128], index: 4, kind: output, shape index: {2}]
  %5 = xla_tuple %s2, %s3, %s4
  %s6 = sld [smem:[#allocation0]]
  $region57: #{conv_tag_para_forward.2} parent=0
    _
  %s8 = ssub.s32 1, %s6
  %s9 = scalar_select 0, %s8, %s6
  loop: start=0, step=1, limit=4
  $region2: #{conv_tag_para_forward.2} parent=0 // loop_pre_header
    _
  $region3: #{conv_tag_para_forward.2} parent=0 // loop_header
    %s11 = sphi 0, %s15
    %p12 = scmp.ge.s32.totalorder %s11, 4
    %s21 = sphi 0, %s23
    %s24 = sphi 0, %s21
    %s25 = sphi 0, %s24
    %s41 = sphi 0, %s25
    %s45 = sphi 0, %s45
    %s47 = sphi 0, %s45
    %s48 = sphi 0, %s47
    %s62 = sphi 0, %s48
    %s68 = sphi 0, %s70
    %s71 = sphi 0, %s68
    %s72 = sphi 0, %s71
    %s88 = sphi 0, %s72
    %s94 = sphi 0, %s96
    %s97 = sphi 0, %s94
    %s98 = sphi 0, %s97
    %s114 = sphi 0, %s98
    %s120 = sphi 0, %s122
    %s123 = sphi 0, %s120
    %s124 = sphi 0, %s123
    %s140 = sphi 0, %s124
  $region4: #{conv_tag_para_forward.2} parent=0 // loop_header_branch
    %14 = sbr.rel (%p12) target = $region8
  $region5: #{conv_tag_para_forward.2} parent=0 // loop_body
    %s16 = ssub.s32 %s11, 1
    %s17 = ssub.s32 %s11, 2
    %s18 = sadd.s32 %s11, 1
    %s19 = ssub.s32 %s11, %s18
    %p20 = scmp.eq.s32.totalorder %s19, 0
    %s22 = sadd.s32 %s21, 1
    %s23 = scalar_select %p20, %s21, %s22
    %p26 = pneg %p20
    %p27 = scmp.eq.s32.totalorder %s11, 1
    %p28 = por %p26, %p27
    %p29 = scmp.ne.s32.totalorder %s21, %s24
    %p30 = scmp.eq.s32.totalorder %s11, 0
    %p31 = por %p29, %p30
    %p32 = scmp.ne.s32.totalorder %s21, %s24
    %p33 = scmp.eq.s32.totalorder %s16, 1
    %p34 = por %p32, %p33
    %p35 = scmp.ne.s32.totalorder %s24, %s25
    %p36 = scmp.eq.s32.totalorder %s16, 0
    %p37 = por %p35, %p36
    %p38 = scmp.ne.s32.totalorder %s24, %s25
    %p39 = scmp.eq.s32.totalorder %s17, 1
    %p40 = por %p38, %p39
    %p42 = scmp.ne.s32.totalorder %s25, %s41
    %p43 = scmp.eq.s32.totalorder %s17, 0
    %p44 = por %p42, %p43
    %s46 = sadd.s32 %s45, 1
    %p49 = scmp.eq.s32.totalorder %s11, 1
    %p50 = scmp.ne.s32.totalorder %s45, %s47
    %p51 = scmp.eq.s32.totalorder %s11, 0
    %p52 = por %p50, %p51
    %p53 = scmp.ne.s32.totalorder %s45, %s47
    %p54 = scmp.eq.s32.totalorder %s16, 1
    %p55 = por %p53, %p54
    %p56 = scmp.ne.s32.totalorder %s47, %s48
    %p57 = scmp.eq.s32.totalorder %s16, 0
    %p58 = por %p56, %p57
    %p59 = scmp.ne.s32.totalorder %s47, %s48
    %p60 = scmp.eq.s32.totalorder %s17, 1
    %p61 = por %p59, %p60
    %p63 = scmp.ne.s32.totalorder %s48, %s62
    %p64 = scmp.eq.s32.totalorder %s17, 0
    %p65 = por %p63, %p64
    %s66 = ssub.s32 %s11, %s18
    %p67 = scmp.eq.s32.totalorder %s66, 0
    %s69 = sadd.s32 %s68, 1
    %s70 = scalar_select %p67, %s68, %s69
    %p73 = pneg %p67
    %p74 = scmp.eq.s32.totalorder %s11, 1
    %p75 = por %p73, %p74
    %p76 = scmp.ne.s32.totalorder %s68, %s71
    %p77 = scmp.eq.s32.totalorder %s11, 0
    %p78 = por %p76, %p77
    %p79 = scmp.ne.s32.totalorder %s68, %s71
    %p80 = scmp.eq.s32.totalorder %s16, 1
    %p81 = por %p79, %p80
    %p82 = scmp.ne.s32.totalorder %s71, %s72
    %p83 = scmp.eq.s32.totalorder %s16, 0
    %p84 = por %p82, %p83
    %p85 = scmp.ne.s32.totalorder %s71, %s72
    %p86 = scmp.eq.s32.totalorder %s17, 1
    %p87 = por %p85, %p86
    %p89 = scmp.ne.s32.totalorder %s72, %s88
    %p90 = scmp.eq.s32.totalorder %s17, 0
    %p91 = por %p89, %p90
    %s92 = ssub.s32 %s11, %s18
    %p93 = scmp.eq.s32.totalorder %s92, 0
    %s95 = sadd.s32 %s94, 1
    %s96 = scalar_select %p93, %s94, %s95
    %p99 = pneg %p93
    %p100 = scmp.eq.s32.totalorder %s11, 1
    %p101 = por %p99, %p100
    %p102 = scmp.ne.s32.totalorder %s94, %s97
    %p103 = scmp.eq.s32.totalorder %s11, 0
    %p104 = por %p102, %p103
    %p105 = scmp.ne.s32.totalorder %s94, %s97
    %p106 = scmp.eq.s32.totalorder %s16, 1
    %p107 = por %p105, %p106
    %p108 = scmp.ne.s32.totalorder %s97, %s98
    %p109 = scmp.eq.s32.totalorder %s16, 0
    %p110 = por %p108, %p109
    %p111 = scmp.ne.s32.totalorder %s97, %s98
    %p112 = scmp.eq.s32.totalorder %s17, 1
    %p113 = por %p111, %p112
    %p115 = scmp.ne.s32.totalorder %s98, %s114
    %p116 = scmp.eq.s32.totalorder %s17, 0
    %p117 = por %p115, %p116
    %s118 = ssub.s32 %s11, %s18
    %p119 = scmp.eq.s32.totalorder %s118, 0
    %s121 = sadd.s32 %s120, 1
    %s122 = scalar_select %p119, %s120, %s121
    %p125 = pneg %p119
    %p126 = scmp.eq.s32.totalorder %s11, 1
    %p127 = por %p125, %p126
    %p128 = scmp.ne.s32.totalorder %s120, %s123
    %p129 = scmp.eq.s32.totalorder %s11, 0
    %p130 = por %p128, %p129
    %p131 = scmp.ne.s32.totalorder %s120, %s123
    %p132 = scmp.eq.s32.totalorder %s16, 1
    %p133 = por %p131, %p132
    %p134 = scmp.ne.s32.totalorder %s123, %s124
    %p135 = scmp.eq.s32.totalorder %s16, 0
    %p136 = por %p134, %p135
    %p137 = scmp.ne.s32.totalorder %s123, %s124
    %p138 = scmp.eq.s32.totalorder %s17, 1
    %p139 = por %p137, %p138
    %p141 = scmp.ne.s32.totalorder %s124, %s140
    %p142 = scmp.eq.s32.totalorder %s17, 0
    %p143 = por %p141, %p142
    %p144 = scmp.le.s32.totalorder 1, %s11
    %p145 = scmp.lt.s32.totalorder %s11, 3
    %p146 = pnand %p144, %p145
    %p147 = pneg %p146
    // Predicated region
    $region9: #{conv_tag_para_forward.2} parent=5 // pred_check
      _
    $region10: #{conv_tag_para_forward.2} parent=5 // pred_check_branch
      %149 = sbr.rel (%p146) target = $region12
    $region11: #{conv_tag_para_forward.2} parent=5 // pred_region
      %s150 = ssub.s32 %s11, 1
      // Predicated region
      $region13: #{conv_tag_para_forward.2} parent=11 // pred_check
        %p151 = pneg %p58
      $region14: #{conv_tag_para_forward.2} parent=11 // pred_check_branch
        %153 = sbr.rel (%p151) target = $region16
      $region15: #{conv_tag_para_forward.2} parent=11 // pred_region
        _
      $region16: #{conv_tag_para_forward.2} parent=11 // pred_fallthru
        _
    $region12: #{conv_tag_para_forward.2} parent=5 // pred_fallthru
      _
    %p154 = scmp.lt.s32.totalorder %s11, 2
    // Predicated region
    $region17: #{conv_tag_para_forward.2} parent=5 // pred_check
      %p155 = pneg %p154
    $region18: #{conv_tag_para_forward.2} parent=5 // pred_check_branch
      %157 = sbr.rel (%p155) target = $region20
    $region19: #{conv_tag_para_forward.2} parent=5 // pred_region
      // Predicated region
      $region21: #{conv_tag_para_forward.2} parent=19 // pred_check
        %p158 = pneg %p31
      $region22: #{conv_tag_para_forward.2} parent=19 // pred_check_branch
        %160 = sbr.rel (%p158) target = $region24
      $region23: #{conv_tag_para_forward.2} parent=19 // pred_region
        %p161 = scmp.lt.s32.totalorder %s11, 1
        %s162 = scalar_select %p161, %s11, 1
        %s163 = smul.addr %s162, 54
        %s164 = smul.addr %s163, 8
        %s165 = scalar_lea.vmem %s0, %s164
      $region24: #{conv_tag_para_forward.2} parent=19 // pred_fallthru
        _
    $region20: #{conv_tag_para_forward.2} parent=5 // pred_fallthru
      _
    %p166 = scmp.le.s32.totalorder 1, %s11
    %p167 = scmp.lt.s32.totalorder %s11, 3
    %p168 = pnand %p166, %p167
    %p169 = pneg %p168
    // Predicated region
    $region25: #{conv_tag_para_forward.2} parent=5 // pred_check
      _
    $region26: #{conv_tag_para_forward.2} parent=5 // pred_check_branch
      %171 = sbr.rel (%p168) target = $region28
    $region27: #{conv_tag_para_forward.2} parent=5 // pred_region
      %s172 = ssub.s32 %s11, 1
      %p173 = scmp.lt.s32.totalorder %s16, 1
      %s174 = scalar_select %p173, %s16, 1
      %s175 = smul.addr %s174, 54
      %s176 = smul.addr %s175, 8
      %s177 = scalar_lea.vmem %s0, %s176
      %p178 = pneg %p37
      %p179 = pneg %p34
      %p180 = pneg %p58
      %p181 = pneg %p55
      %p182 = pneg %p84
      %p183 = pneg %p81
      %p184 = scmp.lt.s32.totalorder %s16, 1
      %s185 = scalar_select %p184, %s16, 1
      %s186 = smul.addr %s185, 32
      %s187 = smul.addr %s186, 8
      %s188 = scalar_lea.vmem %s2, %s187
      %p189 = pneg %p110
      %p190 = pneg %p107
      %p191 = scmp.lt.s32.totalorder %s16, 1
      %s192 = scalar_select %p191, %s16, 1
      %s193 = scalar_lea.vmem %s3, %s192
      %p194 = pneg %p136
      %p195 = pneg %p133
      %p196 = scmp.lt.s32.totalorder %s16, 1
      %s197 = scalar_select %p196, %s16, 1
      %s198 = scalar_lea.vmem %s4, %s197
      %p199 = scmp.lt.s32.totalorder %s16, 1
      %s200 = scalar_select %p199, %s16, 1
      %s201 = smul.addr %s200, 54
      %s202 = smul.addr %s201, 8
      %s203 = scalar_lea.vmem %s0, %s202
      %p204 = scmp.lt.s32.totalorder %s16, 1
      %s205 = scalar_select %p204, %s16, 1
      %s206 = smul.addr %s205, 32
      %s207 = smul.addr %s206, 8
      %s208 = scalar_lea.vmem %s2, %s207
      %p209 = scmp.lt.s32.totalorder %s16, 1
      %s210 = scalar_select %p209, %s16, 1
      %s211 = scalar_lea.vmem %s3, %s210
      %p212 = scmp.lt.s32.totalorder %s16, 1
      %s213 = scalar_select %p212, %s16, 1
      %s214 = scalar_lea.vmem %s4, %s213
      %v216 = vld [vmem:[%s203] sm:$0xff]
      %v217 = vld [vmem:[%s203 + $0x8] sm:$0xff]
      %v218 = vld [vmem:[%s203 + $0x1] sm:$0xff]
      %v219 = vld [vmem:[%s203 + $0x9] sm:$0xff]
      %v220 = vld [vmem:[%s203 + $0x2] sm:$0xff]
      %v221 = vld [vmem:[%s203 + $0xa] sm:$0xff]
      %s222 = scalar_lea.vmem %s203, 24
      %v223 = vld [vmem:[%s222] sm:$0xff]
      %v224 = vld [vmem:[%s222 + $0x8] sm:$0xff]
      %v225 = vld [vmem:[%s222 + $0x1] sm:$0xff]
      %v226 = vld [vmem:[%s222 + $0x9] sm:$0xff]
      %v227 = vld [vmem:[%s222 + $0x2] sm:$0xff]
      %v228 = vld [vmem:[%s222 + $0xa] sm:$0xff]
      %s229 = scalar_lea.vmem %s203, 48
      %v230 = vld [vmem:[%s229] sm:$0xff]
      %v231 = vld [vmem:[%s229 + $0x8] sm:$0xff]
      %v232 = vld [vmem:[%s229 + $0x1] sm:$0xff]
      %v233 = vld [vmem:[%s229 + $0x9] sm:$0xff]
      %v234 = vld [vmem:[%s229 + $0x2] sm:$0xff]
      %v235 = vld [vmem:[%s229 + $0xa] sm:$0xff]
      %238 = vrot.lane.b32.xlu0 %v218, 4
      %v239 = vpop.permute.xlu0 %238
      %240 = vrot.lane.b32.xlu0 %v219, 4
      %v241 = vpop.permute.xlu0 %240
      %246 = vrot.lane.b32.xlu0 %v220, 8
      %v247 = vpop.permute.xlu0 %246
      %248 = vrot.lane.b32.xlu0 %v221, 8
      %v249 = vpop.permute.xlu0 %248
      %254 = vrot.lane.b32.xlu0 %v223, 12
      %v255 = vpop.permute.xlu0 %254
      %256 = vrot.lane.b32.xlu0 %v224, 12
      %v257 = vpop.permute.xlu0 %256
      %262 = vrot.lane.b32.xlu0 %v225, 16
      %v263 = vpop.permute.xlu0 %262
      %264 = vrot.lane.b32.xlu0 %v226, 16
      %v265 = vpop.permute.xlu0 %264
      %270 = vrot.lane.b32.xlu0 %v227, 20
      %v271 = vpop.permute.xlu0 %270
      %272 = vrot.lane.b32.xlu0 %v228, 20
      %v273 = vpop.permute.xlu0 %272
      %278 = vrot.lane.b32.xlu0 %v230, 24
      %v279 = vpop.permute.xlu0 %278
      %280 = vrot.lane.b32.xlu0 %v231, 24
      %v281 = vpop.permute.xlu0 %280
      %286 = vrot.lane.b32.xlu0 %v232, 28
      %v287 = vpop.permute.xlu0 %286
      %288 = vrot.lane.b32.xlu0 %v233, 28
      %v289 = vpop.permute.xlu0 %288
      %294 = vrot.lane.b32.xlu0 %v234, 32
      %v295 = vpop.permute.xlu0 %294
      %296 = vrot.lane.b32.xlu0 %v235, 32
      %v297 = vpop.permute.xlu0 %296
      %vm300 = vcmask 31744
      %v301 = vsel %vm300, %v216, %v239
      %v302 = vsel %vm300, %v217, %v241
      %vm303 = vcmask 64512
      %v304 = vsel %vm303, %v301, %v247
      %v305 = vsel %vm303, %v302, %v249
      %vm306 = vcmask 97280
      %v307 = vsel %vm306, %v304, %v255
      %v308 = vsel %vm306, %v305, %v257
      %vm309 = vcmask 130048
      %v310 = vsel %vm309, %v307, %v263
      %v311 = vsel %vm309, %v308, %v265
      %vm312 = vcmask 162816
      %v313 = vsel %vm312, %v310, %v271
      %v314 = vsel %vm312, %v311, %v273
      %vm315 = vcmask 195584
      %v316 = vsel %vm315, %v313, %v279
      %v317 = vsel %vm315, %v314, %v281
      %vm318 = vcmask 228352
      %v319 = vsel %vm318, %v316, %v287
      %v320 = vsel %vm318, %v317, %v289
      %vm321 = vcmask 261120
      %v322 = vsel %vm321, %v319, %v295
      %v323 = vsel %vm321, %v320, %v297
      %s324 = scalar_lea.vmem %s203, 72
      %v325 = vld [vmem:[%s324] sm:$0xff]
      %v326 = vld [vmem:[%s324 + $0x8] sm:$0xff]
      %v327 = vld [vmem:[%s324 + $0x1] sm:$0xff]
      %v328 = vld [vmem:[%s324 + $0x9] sm:$0xff]
      %v329 = vld [vmem:[%s324 + $0x2] sm:$0xff]
      %v330 = vld [vmem:[%s324 + $0xa] sm:$0xff]
      %331 = vrot.lane.b32.xlu0 %v225, 4
      %v332 = vpop.permute.xlu0 %331
      %333 = vrot.lane.b32.xlu0 %v226, 4
      %v334 = vpop.permute.xlu0 %333
      %337 = vrot.lane.b32.xlu0 %v227, 8
      %v338 = vpop.permute.xlu0 %337
      %339 = vrot.lane.b32.xlu0 %v228, 8
      %v340 = vpop.permute.xlu0 %339
      %343 = vrot.lane.b32.xlu0 %v230, 12
      %v344 = vpop.permute.xlu0 %343
      %345 = vrot.lane.b32.xlu0 %v231, 12
      %v346 = vpop.permute.xlu0 %345
      %349 = vrot.lane.b32.xlu0 %v232, 16
      %v350 = vpop.permute.xlu0 %349
      %351 = vrot.lane.b32.xlu0 %v233, 16
      %v352 = vpop.permute.xlu0 %351
      %355 = vrot.lane.b32.xlu0 %v234, 20
      %v356 = vpop.permute.xlu0 %355
      %357 = vrot.lane.b32.xlu0 %v235, 20
      %v358 = vpop.permute.xlu0 %357
      %363 = vrot.lane.b32.xlu0 %v325, 24
      %v364 = vpop.permute.xlu0 %363
      %365 = vrot.lane.b32.xlu0 %v326, 24
      %v366 = vpop.permute.xlu0 %365
      %371 = vrot.lane.b32.xlu0 %v327, 28
      %v372 = vpop.permute.xlu0 %371
      %373 = vrot.lane.b32.xlu0 %v328, 28
      %v374 = vpop.permute.xlu0 %373
      %379 = vrot.lane.b32.xlu0 %v329, 32
      %v380 = vpop.permute.xlu0 %379
      %381 = vrot.lane.b32.xlu0 %v330, 32
      %v382 = vpop.permute.xlu0 %381
      %v385 = vsel %vm300, %v223, %v332
      %v386 = vsel %vm300, %v224, %v334
      %v387 = vsel %vm303, %v385, %v338
      %v388 = vsel %vm303, %v386, %v340
      %v389 = vsel %vm306, %v387, %v344
      %v390 = vsel %vm306, %v388, %v346
      %v391 = vsel %vm309, %v389, %v350
      %v392 = vsel %vm309, %v390, %v352
      %v393 = vsel %vm312, %v391, %v356
      %v394 = vsel %vm312, %v392, %v358
      %v395 = vsel %vm315, %v393, %v364
      %v396 = vsel %vm315, %v394, %v366
      %v397 = vsel %vm318, %v395, %v372
      %v398 = vsel %vm318, %v396, %v374
      %v399 = vsel %vm321, %v397, %v380
      %v400 = vsel %vm321, %v398, %v382
      %s401 = scalar_lea.vmem %s203, 96
      %v402 = vld [vmem:[%s401] sm:$0xff]
      %v403 = vld [vmem:[%s401 + $0x8] sm:$0xff]
      %v404 = vld [vmem:[%s401 + $0x1] sm:$0xff]
      %v405 = vld [vmem:[%s401 + $0x9] sm:$0xff]
      %v406 = vld [vmem:[%s401 + $0x2] sm:$0xff]
      %v407 = vld [vmem:[%s401 + $0xa] sm:$0xff]
      %408 = vrot.lane.b32.xlu0 %v232, 4
      %v409 = vpop.permute.xlu0 %408
      %410 = vrot.lane.b32.xlu0 %v233, 4
      %v411 = vpop.permute.xlu0 %410
      %414 = vrot.lane.b32.xlu0 %v234, 8
      %v415 = vpop.permute.xlu0 %414
      %416 = vrot.lane.b32.xlu0 %v235, 8
      %v417 = vpop.permute.xlu0 %416
      %420 = vrot.lane.b32.xlu0 %v325, 12
      %v421 = vpop.permute.xlu0 %420
      %422 = vrot.lane.b32.xlu0 %v326, 12
      %v423 = vpop.permute.xlu0 %422
      %426 = vrot.lane.b32.xlu0 %v327, 16
      %v427 = vpop.permute.xlu0 %426
      %428 = vrot.lane.b32.xlu0 %v328, 16
      %v429 = vpop.permute.xlu0 %428
      %432 = vrot.lane.b32.xlu0 %v329, 20
      %v433 = vpop.permute.xlu0 %432
      %434 = vrot.lane.b32.xlu0 %v330, 20
      %v435 = vpop.permute.xlu0 %434
      %440 = vrot.lane.b32.xlu0 %v402, 24
      %v441 = vpop.permute.xlu0 %440
      %442 = vrot.lane.b32.xlu0 %v403, 24
      %v443 = vpop.permute.xlu0 %442
      %448 = vrot.lane.b32.xlu0 %v404, 28
      %v449 = vpop.permute.xlu0 %448
      %450 = vrot.lane.b32.xlu0 %v405, 28
      %v451 = vpop.permute.xlu0 %450
      %456 = vrot.lane.b32.xlu0 %v406, 32
      %v457 = vpop.permute.xlu0 %456
      %458 = vrot.lane.b32.xlu0 %v407, 32
      %v459 = vpop.permute.xlu0 %458
      %v462 = vsel %vm300, %v230, %v409
      %v463 = vsel %vm300, %v231, %v411
      %v464 = vsel %vm303, %v462, %v415
      %v465 = vsel %vm303, %v463, %v417
      %v466 = vsel %vm306, %v464, %v421
      %v467 = vsel %vm306, %v465, %v423
      %v468 = vsel %vm309, %v466, %v427
      %v469 = vsel %vm309, %v467, %v429
      %v470 = vsel %vm312, %v468, %v433
      %v471 = vsel %vm312, %v469, %v435
      %v472 = vsel %vm315, %v470, %v441
      %v473 = vsel %vm315, %v471, %v443
      %v474 = vsel %vm318, %v472, %v449
      %v475 = vsel %vm318, %v473, %v451
      %v476 = vsel %vm321, %v474, %v457
      %v477 = vsel %vm321, %v475, %v459
      %s478 = scalar_lea.vmem %s203, 120
      %v479 = vld [vmem:[%s478] sm:$0xff]
      %v480 = vld [vmem:[%s478 + $0x8] sm:$0xff]
      %v481 = vld [vmem:[%s478 + $0x1] sm:$0xff]
      %v482 = vld [vmem:[%s478 + $0x9] sm:$0xff]
      %v483 = vld [vmem:[%s478 + $0x2] sm:$0xff]
      %v484 = vld [vmem:[%s478 + $0xa] sm:$0xff]
      %485 = vrot.lane.b32.xlu0 %v327, 4
      %v486 = vpop.permute.xlu0 %485
      %487 = vrot.lane.b32.xlu0 %v328, 4
      %v488 = vpop.permute.xlu0 %487
      %491 = vrot.lane.b32.xlu0 %v329, 8
      %v492 = vpop.permute.xlu0 %491
      %493 = vrot.lane.b32.xlu0 %v330, 8
      %v494 = vpop.permute.xlu0 %493
      %497 = vrot.lane.b32.xlu0 %v402, 12
      %v498 = vpop.permute.xlu0 %497
      %499 = vrot.lane.b32.xlu0 %v403, 12
      %v500 = vpop.permute.xlu0 %499
      %503 = vrot.lane.b32.xlu0 %v404, 16
      %v504 = vpop.permute.xlu0 %503
      %505 = vrot.lane.b32.xlu0 %v405, 16
      %v506 = vpop.permute.xlu0 %505
      %509 = vrot.lane.b32.xlu0 %v406, 20
      %v510 = vpop.permute.xlu0 %509
      %511 = vrot.lane.b32.xlu0 %v407, 20
      %v512 = vpop.permute.xlu0 %511
      %517 = vrot.lane.b32.xlu0 %v479, 24
      %v518 = vpop.permute.xlu0 %517
      %519 = vrot.lane.b32.xlu0 %v480, 24
      %v520 = vpop.permute.xlu0 %519
      %525 = vrot.lane.b32.xlu0 %v481, 28
      %v526 = vpop.permute.xlu0 %525
      %527 = vrot.lane.b32.xlu0 %v482, 28
      %v528 = vpop.permute.xlu0 %527
      %533 = vrot.lane.b32.xlu0 %v483, 32
      %v534 = vpop.permute.xlu0 %533
      %535 = vrot.lane.b32.xlu0 %v484, 32
      %v536 = vpop.permute.xlu0 %535
      %v539 = vsel %vm300, %v325, %v486
      %v540 = vsel %vm300, %v326, %v488
      %v541 = vsel %vm303, %v539, %v492
      %v542 = vsel %vm303, %v540, %v494
      %v543 = vsel %vm306, %v541, %v498
      %v544 = vsel %vm306, %v542, %v500
      %v545 = vsel %vm309, %v543, %v504
      %v546 = vsel %vm309, %v544, %v506
      %v547 = vsel %vm312, %v545, %v510
      %v548 = vsel %vm312, %v546, %v512
      %v549 = vsel %vm315, %v547, %v518
      %v550 = vsel %vm315, %v548, %v520
      %v551 = vsel %vm318, %v549, %v526
      %v552 = vsel %vm318, %v550, %v528
      %v553 = vsel %vm321, %v551, %v534
      %v554 = vsel %vm321, %v552, %v536
      %s555 = scalar_lea.vmem %s203, 144
      %v556 = vld [vmem:[%s555] sm:$0xff]
      %v557 = vld [vmem:[%s555 + $0x8] sm:$0xff]
      %v558 = vld [vmem:[%s555 + $0x1] sm:$0xff]
      %v559 = vld [vmem:[%s555 + $0x9] sm:$0xff]
      %v560 = vld [vmem:[%s555 + $0x2] sm:$0xff]
      %v561 = vld [vmem:[%s555 + $0xa] sm:$0xff]
      %562 = vrot.lane.b32.xlu0 %v404, 4
      %v563 = vpop.permute.xlu0 %562
      %564 = vrot.lane.b32.xlu0 %v405, 4
      %v565 = vpop.permute.xlu0 %564
      %568 = vrot.lane.b32.xlu0 %v406, 8
      %v569 = vpop.permute.xlu0 %568
      %570 = vrot.lane.b32.xlu0 %v407, 8
      %v571 = vpop.permute.xlu0 %570
      %574 = vrot.lane.b32.xlu0 %v479, 12
      %v575 = vpop.permute.xlu0 %574
      %576 = vrot.lane.b32.xlu0 %v480, 12
      %v577 = vpop.permute.xlu0 %576
      %580 = vrot.lane.b32.xlu0 %v481, 16
      %v581 = vpop.permute.xlu0 %580
      %582 = vrot.lane.b32.xlu0 %v482, 16
      %v583 = vpop.permute.xlu0 %582
      %586 = vrot.lane.b32.xlu0 %v483, 20
      %v587 = vpop.permute.xlu0 %586
      %588 = vrot.lane.b32.xlu0 %v484, 20
      %v589 = vpop.permute.xlu0 %588
      %594 = vrot.lane.b32.xlu0 %v556, 24
      %v595 = vpop.permute.xlu0 %594
      %596 = vrot.lane.b32.xlu0 %v557, 24
      %v597 = vpop.permute.xlu0 %596
      %602 = vrot.lane.b32.xlu0 %v558, 28
      %v603 = vpop.permute.xlu0 %602
      %604 = vrot.lane.b32.xlu0 %v559, 28
      %v605 = vpop.permute.xlu0 %604
      %610 = vrot.lane.b32.xlu0 %v560, 32
      %v611 = vpop.permute.xlu0 %610
      %612 = vrot.lane.b32.xlu0 %v561, 32
      %v613 = vpop.permute.xlu0 %612
      %v616 = vsel %vm300, %v402, %v563
      %v617 = vsel %vm300, %v403, %v565
      %v618 = vsel %vm303, %v616, %v569
      %v619 = vsel %vm303, %v617, %v571
      %v620 = vsel %vm306, %v618, %v575
      %v621 = vsel %vm306, %v619, %v577
      %v622 = vsel %vm309, %v620, %v581
      %v623 = vsel %vm309, %v621, %v583
      %v624 = vsel %vm312, %v622, %v587
      %v625 = vsel %vm312, %v623, %v589
      %v626 = vsel %vm315, %v624, %v595
      %v627 = vsel %vm315, %v625, %v597
      %v628 = vsel %vm318, %v626, %v603
      %v629 = vsel %vm318, %v627, %v605
      %v630 = vsel %vm321, %v628, %v611
      %v631 = vsel %vm321, %v629, %v613
      %s632 = scalar_lea.vmem %s203, 168
      %v633 = vld [vmem:[%s632] sm:$0xff]
      %v634 = vld [vmem:[%s632 + $0x8] sm:$0xff]
      %v635 = vld [vmem:[%s632 + $0x1] sm:$0xff]
      %v636 = vld [vmem:[%s632 + $0x9] sm:$0xff]
      %v637 = vld [vmem:[%s632 + $0x2] sm:$0xff]
      %v638 = vld [vmem:[%s632 + $0xa] sm:$0xff]
      %639 = vrot.lane.b32.xlu0 %v481, 4
      %v640 = vpop.permute.xlu0 %639
      %641 = vrot.lane.b32.xlu0 %v482, 4
      %v642 = vpop.permute.xlu0 %641
      %645 = vrot.lane.b32.xlu0 %v483, 8
      %v646 = vpop.permute.xlu0 %645
      %647 = vrot.lane.b32.xlu0 %v484, 8
      %v648 = vpop.permute.xlu0 %647
      %651 = vrot.lane.b32.xlu0 %v556, 12
      %v652 = vpop.permute.xlu0 %651
      %653 = vrot.lane.b32.xlu0 %v557, 12
      %v654 = vpop.permute.xlu0 %653
      %657 = vrot.lane.b32.xlu0 %v558, 16
      %v658 = vpop.permute.xlu0 %657
      %659 = vrot.lane.b32.xlu0 %v559, 16
      %v660 = vpop.permute.xlu0 %659
      %663 = vrot.lane.b32.xlu0 %v560, 20
      %v664 = vpop.permute.xlu0 %663
      %665 = vrot.lane.b32.xlu0 %v561, 20
      %v666 = vpop.permute.xlu0 %665
      %671 = vrot.lane.b32.xlu0 %v633, 24
      %v672 = vpop.permute.xlu0 %671
      %673 = vrot.lane.b32.xlu0 %v634, 24
      %v674 = vpop.permute.xlu0 %673
      %679 = vrot.lane.b32.xlu0 %v635, 28
      %v680 = vpop.permute.xlu0 %679
      %681 = vrot.lane.b32.xlu0 %v636, 28
      %v682 = vpop.permute.xlu0 %681
      %687 = vrot.lane.b32.xlu0 %v637, 32
      %v688 = vpop.permute.xlu0 %687
      %689 = vrot.lane.b32.xlu0 %v638, 32
      %v690 = vpop.permute.xlu0 %689
      %v693 = vsel %vm300, %v479, %v640
      %v694 = vsel %vm300, %v480, %v642
      %v695 = vsel %vm303, %v693, %v646
      %v696 = vsel %vm303, %v694, %v648
      %v697 = vsel %vm306, %v695, %v652
      %v698 = vsel %vm306, %v696, %v654
      %v699 = vsel %vm309, %v697, %v658
      %v700 = vsel %vm309, %v698, %v660
      %v701 = vsel %vm312, %v699, %v664
      %v702 = vsel %vm312, %v700, %v666
      %v703 = vsel %vm315, %v701, %v672
      %v704 = vsel %vm315, %v702, %v674
      %v705 = vsel %vm318, %v703, %v680
      %v706 = vsel %vm318, %v704, %v682
      %v707 = vsel %vm321, %v705, %v688
      %v708 = vsel %vm321, %v706, %v690
      %s709 = scalar_lea.vmem %s203, 192
      %v710 = vld [vmem:[%s709] sm:$0xff]
      %v711 = vld [vmem:[%s709 + $0x8] sm:$0xff]
      %v712 = vld [vmem:[%s709 + $0x1] sm:$0xff]
      %v713 = vld [vmem:[%s709 + $0x9] sm:$0xff]
      %v714 = vld [vmem:[%s709 + $0x2] sm:$0xff]
      %v715 = vld [vmem:[%s709 + $0xa] sm:$0xff]
      %716 = vrot.lane.b32.xlu0 %v558, 4
      %v717 = vpop.permute.xlu0 %716
      %718 = vrot.lane.b32.xlu0 %v559, 4
      %v719 = vpop.permute.xlu0 %718
      %722 = vrot.lane.b32.xlu0 %v560, 8
      %v723 = vpop.permute.xlu0 %722
      %724 = vrot.lane.b32.xlu0 %v561, 8
      %v725 = vpop.permute.xlu0 %724
      %728 = vrot.lane.b32.xlu0 %v633, 12
      %v729 = vpop.permute.xlu0 %728
      %730 = vrot.lane.b32.xlu0 %v634, 12
      %v731 = vpop.permute.xlu0 %730
      %734 = vrot.lane.b32.xlu0 %v635, 16
      %v735 = vpop.permute.xlu0 %734
      %736 = vrot.lane.b32.xlu0 %v636, 16
      %v737 = vpop.permute.xlu0 %736
      %740 = vrot.lane.b32.xlu0 %v637, 20
      %v741 = vpop.permute.xlu0 %740
      %742 = vrot.lane.b32.xlu0 %v638, 20
      %v743 = vpop.permute.xlu0 %742
      %748 = vrot.lane.b32.xlu0 %v710, 24
      %v749 = vpop.permute.xlu0 %748
      %750 = vrot.lane.b32.xlu0 %v711, 24
      %v751 = vpop.permute.xlu0 %750
      %756 = vrot.lane.b32.xlu0 %v712, 28
      %v757 = vpop.permute.xlu0 %756
      %758 = vrot.lane.b32.xlu0 %v713, 28
      %v759 = vpop.permute.xlu0 %758
      %764 = vrot.lane.b32.xlu0 %v714, 32
      %v765 = vpop.permute.xlu0 %764
      %766 = vrot.lane.b32.xlu0 %v715, 32
      %v767 = vpop.permute.xlu0 %766
      %v770 = vsel %vm300, %v556, %v717
      %v771 = vsel %vm300, %v557, %v719
      %v772 = vsel %vm303, %v770, %v723
      %v773 = vsel %vm303, %v771, %v725
      %v774 = vsel %vm306, %v772, %v729
      %v775 = vsel %vm306, %v773, %v731
      %v776 = vsel %vm309, %v774, %v735
      %v777 = vsel %vm309, %v775, %v737
      %v778 = vsel %vm312, %v776, %v741
      %v779 = vsel %vm312, %v777, %v743
      %v780 = vsel %vm315, %v778, %v749
      %v781 = vsel %vm315, %v779, %v751
      %v782 = vsel %vm318, %v780, %v757
      %v783 = vsel %vm318, %v781, %v759
      %v784 = vsel %vm321, %v782, %v765
      %v785 = vsel %vm321, %v783, %v767
      %s786 = scalar_lea.vmem %s203, 216
      %v787 = vld [vmem:[%s786] sm:$0xff]
      %v788 = vld [vmem:[%s786 + $0x8] sm:$0xff]
      %v789 = vld [vmem:[%s786 + $0x1] sm:$0xff]
      %v790 = vld [vmem:[%s786 + $0x9] sm:$0xff]
      %v791 = vld [vmem:[%s786 + $0x2] sm:$0xff]
      %v792 = vld [vmem:[%s786 + $0xa] sm:$0xff]
      %793 = vrot.lane.b32.xlu0 %v635, 4
      %v794 = vpop.permute.xlu0 %793
      %795 = vrot.lane.b32.xlu0 %v636, 4
      %v796 = vpop.permute.xlu0 %795
      %799 = vrot.lane.b32.xlu0 %v637, 8
      %v800 = vpop.permute.xlu0 %799
      %801 = vrot.lane.b32.xlu0 %v638, 8
      %v802 = vpop.permute.xlu0 %801
      %805 = vrot.lane.b32.xlu0 %v710, 12
      %v806 = vpop.permute.xlu0 %805
      %807 = vrot.lane.b32.xlu0 %v711, 12
      %v808 = vpop.permute.xlu0 %807
      %811 = vrot.lane.b32.xlu0 %v712, 16
      %v812 = vpop.permute.xlu0 %811
      %813 = vrot.lane.b32.xlu0 %v713, 16
      %v814 = vpop.permute.xlu0 %813
      %817 = vrot.lane.b32.xlu0 %v714, 20
      %v818 = vpop.permute.xlu0 %817
      %819 = vrot.lane.b32.xlu0 %v715, 20
      %v820 = vpop.permute.xlu0 %819
      %825 = vrot.lane.b32.xlu0 %v787, 24
      %v826 = vpop.permute.xlu0 %825
      %827 = vrot.lane.b32.xlu0 %v788, 24
      %v828 = vpop.permute.xlu0 %827
      %833 = vrot.lane.b32.xlu0 %v789, 28
      %v834 = vpop.permute.xlu0 %833
      %835 = vrot.lane.b32.xlu0 %v790, 28
      %v836 = vpop.permute.xlu0 %835
      %841 = vrot.lane.b32.xlu0 %v791, 32
      %v842 = vpop.permute.xlu0 %841
      %843 = vrot.lane.b32.xlu0 %v792, 32
      %v844 = vpop.permute.xlu0 %843
      %v847 = vsel %vm300, %v633, %v794
      %v848 = vsel %vm300, %v634, %v796
      %v849 = vsel %vm303, %v847, %v800
      %v850 = vsel %vm303, %v848, %v802
      %v851 = vsel %vm306, %v849, %v806
      %v852 = vsel %vm306, %v850, %v808
      %v853 = vsel %vm309, %v851, %v812
      %v854 = vsel %vm309, %v852, %v814
      %v855 = vsel %vm312, %v853, %v818
      %v856 = vsel %vm312, %v854, %v820
      %v857 = vsel %vm315, %v855, %v826
      %v858 = vsel %vm315, %v856, %v828
      %v859 = vsel %vm318, %v857, %v834
      %v860 = vsel %vm318, %v858, %v836
      %v861 = vsel %vm321, %v859, %v842
      %v862 = vsel %vm321, %v860, %v844
      %s863 = scalar_lea.vmem %s203, 240
      %v864 = vld [vmem:[%s863] sm:$0xff]
      %v865 = vld [vmem:[%s863 + $0x8] sm:$0xff]
      %v866 = vld [vmem:[%s863 + $0x1] sm:$0xff]
      %v867 = vld [vmem:[%s863 + $0x9] sm:$0xff]
      %v868 = vld [vmem:[%s863 + $0x2] sm:$0xff]
      %v869 = vld [vmem:[%s863 + $0xa] sm:$0xff]
      %870 = vrot.lane.b32.xlu0 %v712, 4
      %v871 = vpop.permute.xlu0 %870
      %872 = vrot.lane.b32.xlu0 %v713, 4
      %v873 = vpop.permute.xlu0 %872
      %876 = vrot.lane.b32.xlu0 %v714, 8
      %v877 = vpop.permute.xlu0 %876
      %878 = vrot.lane.b32.xlu0 %v715, 8
      %v879 = vpop.permute.xlu0 %878
      %882 = vrot.lane.b32.xlu0 %v787, 12
      %v883 = vpop.permute.xlu0 %882
      %884 = vrot.lane.b32.xlu0 %v788, 12
      %v885 = vpop.permute.xlu0 %884
      %888 = vrot.lane.b32.xlu0 %v789, 16
      %v889 = vpop.permute.xlu0 %888
      %890 = vrot.lane.b32.xlu0 %v790, 16
      %v891 = vpop.permute.xlu0 %890
      %894 = vrot.lane.b32.xlu0 %v791, 20
      %v895 = vpop.permute.xlu0 %894
      %896 = vrot.lane.b32.xlu0 %v792, 20
      %v897 = vpop.permute.xlu0 %896
      %902 = vrot.lane.b32.xlu0 %v864, 24
      %v903 = vpop.permute.xlu0 %902
      %904 = vrot.lane.b32.xlu0 %v865, 24
      %v905 = vpop.permute.xlu0 %904
      %910 = vrot.lane.b32.xlu0 %v866, 28
      %v911 = vpop.permute.xlu0 %910
      %912 = vrot.lane.b32.xlu0 %v867, 28
      %v913 = vpop.permute.xlu0 %912
      %918 = vrot.lane.b32.xlu0 %v868, 32
      %v919 = vpop.permute.xlu0 %918
      %920 = vrot.lane.b32.xlu0 %v869, 32
      %v921 = vpop.permute.xlu0 %920
      %v924 = vsel %vm300, %v710, %v871
      %v925 = vsel %vm300, %v711, %v873
      %v926 = vsel %vm303, %v924, %v877
      %v927 = vsel %vm303, %v925, %v879
      %v928 = vsel %vm306, %v926, %v883
      %v929 = vsel %vm306, %v927, %v885
      %v930 = vsel %vm309, %v928, %v889
      %v931 = vsel %vm309, %v929, %v891
      %v932 = vsel %vm312, %v930, %v895
      %v933 = vsel %vm312, %v931, %v897
      %v934 = vsel %vm315, %v932, %v903
      %v935 = vsel %vm315, %v933, %v905
      %v936 = vsel %vm318, %v934, %v911
      %v937 = vsel %vm318, %v935, %v913
      %v938 = vsel %vm321, %v936, %v919
      %v939 = vsel %vm321, %v937, %v921
      %s940 = scalar_lea.vmem %s203, 264
      %v941 = vld [vmem:[%s940] sm:$0xff]
      %v942 = vld [vmem:[%s940 + $0x8] sm:$0xff]
      %v943 = vld [vmem:[%s940 + $0x1] sm:$0xff]
      %v944 = vld [vmem:[%s940 + $0x9] sm:$0xff]
      %v945 = vld [vmem:[%s940 + $0x2] sm:$0xff]
      %v946 = vld [vmem:[%s940 + $0xa] sm:$0xff]
      %947 = vrot.lane.b32.xlu0 %v789, 4
      %v948 = vpop.permute.xlu0 %947
      %949 = vrot.lane.b32.xlu0 %v790, 4
      %v950 = vpop.permute.xlu0 %949
      %953 = vrot.lane.b32.xlu0 %v791, 8
      %v954 = vpop.permute.xlu0 %953
      %955 = vrot.lane.b32.xlu0 %v792, 8
      %v956 = vpop.permute.xlu0 %955
      %959 = vrot.lane.b32.xlu0 %v864, 12
      %v960 = vpop.permute.xlu0 %959
      %961 = vrot.lane.b32.xlu0 %v865, 12
      %v962 = vpop.permute.xlu0 %961
      %965 = vrot.lane.b32.xlu0 %v866, 16
      %v966 = vpop.permute.xlu0 %965
      %967 = vrot.lane.b32.xlu0 %v867, 16
      %v968 = vpop.permute.xlu0 %967
      %971 = vrot.lane.b32.xlu0 %v868, 20
      %v972 = vpop.permute.xlu0 %971
      %973 = vrot.lane.b32.xlu0 %v869, 20
      %v974 = vpop.permute.xlu0 %973
      %979 = vrot.lane.b32.xlu0 %v941, 24
      %v980 = vpop.permute.xlu0 %979
      %981 = vrot.lane.b32.xlu0 %v942, 24
      %v982 = vpop.permute.xlu0 %981
      %987 = vrot.lane.b32.xlu0 %v943, 28
      %v988 = vpop.permute.xlu0 %987
      %989 = vrot.lane.b32.xlu0 %v944, 28
      %v990 = vpop.permute.xlu0 %989
      %995 = vrot.lane.b32.xlu0 %v945, 32
      %v996 = vpop.permute.xlu0 %995
      %997 = vrot.lane.b32.xlu0 %v946, 32
      %v998 = vpop.permute.xlu0 %997
      %v1001 = vsel %vm300, %v787, %v948
      %v1002 = vsel %vm300, %v788, %v950
      %v1003 = vsel %vm303, %v1001, %v954
      %v1004 = vsel %vm303, %v1002, %v956
      %v1005 = vsel %vm306, %v1003, %v960
      %v1006 = vsel %vm306, %v1004, %v962
      %v1007 = vsel %vm309, %v1005, %v966
      %v1008 = vsel %vm309, %v1006, %v968
      %v1009 = vsel %vm312, %v1007, %v972
      %v1010 = vsel %vm312, %v1008, %v974
      %v1011 = vsel %vm315, %v1009, %v980
      %v1012 = vsel %vm315, %v1010, %v982
      %v1013 = vsel %vm318, %v1011, %v988
      %v1014 = vsel %vm318, %v1012, %v990
      %v1015 = vsel %vm321, %v1013, %v996
      %v1016 = vsel %vm321, %v1014, %v998
      %s1017 = scalar_lea.vmem %s203, 288
      %v1018 = vld [vmem:[%s1017] sm:$0xff]
      %v1019 = vld [vmem:[%s1017 + $0x8] sm:$0xff]
      %v1020 = vld [vmem:[%s1017 + $0x1] sm:$0xff]
      %v1021 = vld [vmem:[%s1017 + $0x9] sm:$0xff]
      %v1022 = vld [vmem:[%s1017 + $0x2] sm:$0xff]
      %v1023 = vld [vmem:[%s1017 + $0xa] sm:$0xff]
      %1024 = vrot.lane.b32.xlu0 %v866, 4
      %v1025 = vpop.permute.xlu0 %1024
      %1026 = vrot.lane.b32.xlu0 %v867, 4
      %v1027 = vpop.permute.xlu0 %1026
      %1030 = vrot.lane.b32.xlu0 %v868, 8
      %v1031 = vpop.permute.xlu0 %1030
      %1032 = vrot.lane.b32.xlu0 %v869, 8
      %v1033 = vpop.permute.xlu0 %1032
      %1036 = vrot.lane.b32.xlu0 %v941, 12
      %v1037 = vpop.permute.xlu0 %1036
      %1038 = vrot.lane.b32.xlu0 %v942, 12
      %v1039 = vpop.permute.xlu0 %1038
      %1042 = vrot.lane.b32.xlu0 %v943, 16
      %v1043 = vpop.permute.xlu0 %1042
      %1044 = vrot.lane.b32.xlu0 %v944, 16
      %v1045 = vpop.permute.xlu0 %1044
      %1048 = vrot.lane.b32.xlu0 %v945, 20
      %v1049 = vpop.permute.xlu0 %1048
      %1050 = vrot.lane.b32.xlu0 %v946, 20
      %v1051 = vpop.permute.xlu0 %1050
      %1056 = vrot.lane.b32.xlu0 %v1018, 24
      %v1057 = vpop.permute.xlu0 %1056
      %1058 = vrot.lane.b32.xlu0 %v1019, 24
      %v1059 = vpop.permute.xlu0 %1058
      %1064 = vrot.lane.b32.xlu0 %v1020, 28
      %v1065 = vpop.permute.xlu0 %1064
      %1066 = vrot.lane.b32.xlu0 %v1021, 28
      %v1067 = vpop.permute.xlu0 %1066
      %1072 = vrot.lane.b32.xlu0 %v1022, 32
      %v1073 = vpop.permute.xlu0 %1072
      %1074 = vrot.lane.b32.xlu0 %v1023, 32
      %v1075 = vpop.permute.xlu0 %1074
      %v1078 = vsel %vm300, %v864, %v1025
      %v1079 = vsel %vm300, %v865, %v1027
      %v1080 = vsel %vm303, %v1078, %v1031
      %v1081 = vsel %vm303, %v1079, %v1033
      %v1082 = vsel %vm306, %v1080, %v1037
      %v1083 = vsel %vm306, %v1081, %v1039
      %v1084 = vsel %vm309, %v1082, %v1043
      %v1085 = vsel %vm309, %v1083, %v1045
      %v1086 = vsel %vm312, %v1084, %v1049
      %v1087 = vsel %vm312, %v1085, %v1051
      %v1088 = vsel %vm315, %v1086, %v1057
      %v1089 = vsel %vm315, %v1087, %v1059
      %v1090 = vsel %vm318, %v1088, %v1065
      %v1091 = vsel %vm318, %v1089, %v1067
      %v1092 = vsel %vm321, %v1090, %v1073
      %v1093 = vsel %vm321, %v1091, %v1075
      %s1094 = scalar_lea.vmem %s203, 312
      %v1095 = vld [vmem:[%s1094] sm:$0xff]
      %v1096 = vld [vmem:[%s1094 + $0x8] sm:$0xff]
      %v1097 = vld [vmem:[%s1094 + $0x1] sm:$0xff]
      %v1098 = vld [vmem:[%s1094 + $0x9] sm:$0xff]
      %v1099 = vld [vmem:[%s1094 + $0x2] sm:$0xff]
      %v1100 = vld [vmem:[%s1094 + $0xa] sm:$0xff]
      %1101 = vrot.lane.b32.xlu0 %v943, 4
      %v1102 = vpop.permute.xlu0 %1101
      %1103 = vrot.lane.b32.xlu0 %v944, 4
      %v1104 = vpop.permute.xlu0 %1103
      %1107 = vrot.lane.b32.xlu0 %v945, 8
      %v1108 = vpop.permute.xlu0 %1107
      %1109 = vrot.lane.b32.xlu0 %v946, 8
      %v1110 = vpop.permute.xlu0 %1109
      %1113 = vrot.lane.b32.xlu0 %v1018, 12
      %v1114 = vpop.permute.xlu0 %1113
      %1115 = vrot.lane.b32.xlu0 %v1019, 12
      %v1116 = vpop.permute.xlu0 %1115
      %1119 = vrot.lane.b32.xlu0 %v1020, 16
      %v1120 = vpop.permute.xlu0 %1119
      %1121 = vrot.lane.b32.xlu0 %v1021, 16
      %v1122 = vpop.permute.xlu0 %1121
      %1125 = vrot.lane.b32.xlu0 %v1022, 20
      %v1126 = vpop.permute.xlu0 %1125
      %1127 = vrot.lane.b32.xlu0 %v1023, 20
      %v1128 = vpop.permute.xlu0 %1127
      %1133 = vrot.lane.b32.xlu0 %v1095, 24
      %v1134 = vpop.permute.xlu0 %1133
      %1135 = vrot.lane.b32.xlu0 %v1096, 24
      %v1136 = vpop.permute.xlu0 %1135
      %1141 = vrot.lane.b32.xlu0 %v1097, 28
      %v1142 = vpop.permute.xlu0 %1141
      %1143 = vrot.lane.b32.xlu0 %v1098, 28
      %v1144 = vpop.permute.xlu0 %1143
      %1149 = vrot.lane.b32.xlu0 %v1099, 32
      %v1150 = vpop.permute.xlu0 %1149
      %1151 = vrot.lane.b32.xlu0 %v1100, 32
      %v1152 = vpop.permute.xlu0 %1151
      %v1155 = vsel %vm300, %v941, %v1102
      %v1156 = vsel %vm300, %v942, %v1104
      %v1157 = vsel %vm303, %v1155, %v1108
      %v1158 = vsel %vm303, %v1156, %v1110
      %v1159 = vsel %vm306, %v1157, %v1114
      %v1160 = vsel %vm306, %v1158, %v1116
      %v1161 = vsel %vm309, %v1159, %v1120
      %v1162 = vsel %vm309, %v1160, %v1122
      %v1163 = vsel %vm312, %v1161, %v1126
      %v1164 = vsel %vm312, %v1162, %v1128
      %v1165 = vsel %vm315, %v1163, %v1134
      %v1166 = vsel %vm315, %v1164, %v1136
      %v1167 = vsel %vm318, %v1165, %v1142
      %v1168 = vsel %vm318, %v1166, %v1144
      %v1169 = vsel %vm321, %v1167, %v1150
      %v1170 = vsel %vm321, %v1168, %v1152
      %s1171 = scalar_lea.vmem %s203, 336
      %v1172 = vld [vmem:[%s1171] sm:$0xff]
      %v1173 = vld [vmem:[%s1171 + $0x8] sm:$0xff]
      %v1174 = vld [vmem:[%s1171 + $0x1] sm:$0xff]
      %v1175 = vld [vmem:[%s1171 + $0x9] sm:$0xff]
      %v1176 = vld [vmem:[%s1171 + $0x2] sm:$0xff]
      %v1177 = vld [vmem:[%s1171 + $0xa] sm:$0xff]
      %1178 = vrot.lane.b32.xlu0 %v1020, 4
      %v1179 = vpop.permute.xlu0 %1178
      %1180 = vrot.lane.b32.xlu0 %v1021, 4
      %v1181 = vpop.permute.xlu0 %1180
      %1184 = vrot.lane.b32.xlu0 %v1022, 8
      %v1185 = vpop.permute.xlu0 %1184
      %1186 = vrot.lane.b32.xlu0 %v1023, 8
      %v1187 = vpop.permute.xlu0 %1186
      %1190 = vrot.lane.b32.xlu0 %v1095, 12
      %v1191 = vpop.permute.xlu0 %1190
      %1192 = vrot.lane.b32.xlu0 %v1096, 12
      %v1193 = vpop.permute.xlu0 %1192
      %1196 = vrot.lane.b32.xlu0 %v1097, 16
      %v1197 = vpop.permute.xlu0 %1196
      %1198 = vrot.lane.b32.xlu0 %v1098, 16
      %v1199 = vpop.permute.xlu0 %1198
      %1202 = vrot.lane.b32.xlu0 %v1099, 20
      %v1203 = vpop.permute.xlu0 %1202
      %1204 = vrot.lane.b32.xlu0 %v1100, 20
      %v1205 = vpop.permute.xlu0 %1204
      %1210 = vrot.lane.b32.xlu0 %v1172, 24
      %v1211 = vpop.permute.xlu0 %1210
      %1212 = vrot.lane.b32.xlu0 %v1173, 24
      %v1213 = vpop.permute.xlu0 %1212
      %1218 = vrot.lane.b32.xlu0 %v1174, 28
      %v1219 = vpop.permute.xlu0 %1218
      %1220 = vrot.lane.b32.xlu0 %v1175, 28
      %v1221 = vpop.permute.xlu0 %1220
      %1226 = vrot.lane.b32.xlu0 %v1176, 32
      %v1227 = vpop.permute.xlu0 %1226
      %1228 = vrot.lane.b32.xlu0 %v1177, 32
      %v1229 = vpop.permute.xlu0 %1228
      %v1232 = vsel %vm300, %v1018, %v1179
      %v1233 = vsel %vm300, %v1019, %v1181
      %v1234 = vsel %vm303, %v1232, %v1185
      %v1235 = vsel %vm303, %v1233, %v1187
      %v1236 = vsel %vm306, %v1234, %v1191
      %v1237 = vsel %vm306, %v1235, %v1193
      %v1238 = vsel %vm309, %v1236, %v1197
      %v1239 = vsel %vm309, %v1237, %v1199
      %v1240 = vsel %vm312, %v1238, %v1203
      %v1241 = vsel %vm312, %v1239, %v1205
      %v1242 = vsel %vm315, %v1240, %v1211
      %v1243 = vsel %vm315, %v1241, %v1213
      %v1244 = vsel %vm318, %v1242, %v1219
      %v1245 = vsel %vm318, %v1243, %v1221
      %v1246 = vsel %vm321, %v1244, %v1227
      %v1247 = vsel %vm321, %v1245, %v1229
      %s1248 = scalar_lea.vmem %s203, 360
      %v1249 = vld [vmem:[%s1248] sm:$0xff]
      %v1250 = vld [vmem:[%s1248 + $0x8] sm:$0xff]
      %v1251 = vld [vmem:[%s1248 + $0x1] sm:$0xff]
      %v1252 = vld [vmem:[%s1248 + $0x9] sm:$0xff]
      %v1253 = vld [vmem:[%s1248 + $0x2] sm:$0xff]
      %v1254 = vld [vmem:[%s1248 + $0xa] sm:$0xff]
      %1255 = vrot.lane.b32.xlu0 %v1097, 4
      %v1256 = vpop.permute.xlu0 %1255
      %1257 = vrot.lane.b32.xlu0 %v1098, 4
      %v1258 = vpop.permute.xlu0 %1257
      %1261 = vrot.lane.b32.xlu0 %v1099, 8
      %v1262 = vpop.permute.xlu0 %1261
      %1263 = vrot.lane.b32.xlu0 %v1100, 8
      %v1264 = vpop.permute.xlu0 %1263
      %1267 = vrot.lane.b32.xlu0 %v1172, 12
      %v1268 = vpop.permute.xlu0 %1267
      %1269 = vrot.lane.b32.xlu0 %v1173, 12
      %v1270 = vpop.permute.xlu0 %1269
      %1273 = vrot.lane.b32.xlu0 %v1174, 16
      %v1274 = vpop.permute.xlu0 %1273
      %1275 = vrot.lane.b32.xlu0 %v1175, 16
      %v1276 = vpop.permute.xlu0 %1275
      %1279 = vrot.lane.b32.xlu0 %v1176, 20
      %v1280 = vpop.permute.xlu0 %1279
      %1281 = vrot.lane.b32.xlu0 %v1177, 20
      %v1282 = vpop.permute.xlu0 %1281
      %1287 = vrot.lane.b32.xlu0 %v1249, 24
      %v1288 = vpop.permute.xlu0 %1287
      %1289 = vrot.lane.b32.xlu0 %v1250, 24
      %v1290 = vpop.permute.xlu0 %1289
      %1295 = vrot.lane.b32.xlu0 %v1251, 28
      %v1296 = vpop.permute.xlu0 %1295
      %1297 = vrot.lane.b32.xlu0 %v1252, 28
      %v1298 = vpop.permute.xlu0 %1297
      %1303 = vrot.lane.b32.xlu0 %v1253, 32
      %v1304 = vpop.permute.xlu0 %1303
      %1305 = vrot.lane.b32.xlu0 %v1254, 32
      %v1306 = vpop.permute.xlu0 %1305
      %v1309 = vsel %vm300, %v1095, %v1256
      %v1310 = vsel %vm300, %v1096, %v1258
      %v1311 = vsel %vm303, %v1309, %v1262
      %v1312 = vsel %vm303, %v1310, %v1264
      %v1313 = vsel %vm306, %v1311, %v1268
      %v1314 = vsel %vm306, %v1312, %v1270
      %v1315 = vsel %vm309, %v1313, %v1274
      %v1316 = vsel %vm309, %v1314, %v1276
      %v1317 = vsel %vm312, %v1315, %v1280
      %v1318 = vsel %vm312, %v1316, %v1282
      %v1319 = vsel %vm315, %v1317, %v1288
      %v1320 = vsel %vm315, %v1318, %v1290
      %v1321 = vsel %vm318, %v1319, %v1296
      %v1322 = vsel %vm318, %v1320, %v1298
      %v1323 = vsel %vm321, %v1321, %v1304
      %v1324 = vsel %vm321, %v1322, %v1306
      %s1325 = scalar_lea.vmem %s203, 384
      %v1326 = vld [vmem:[%s1325] sm:$0xff]
      %v1327 = vld [vmem:[%s1325 + $0x8] sm:$0xff]
      %v1328 = vld [vmem:[%s1325 + $0x1] sm:$0xff]
      %v1329 = vld [vmem:[%s1325 + $0x9] sm:$0xff]
      %v1330 = vld [vmem:[%s1325 + $0x2] sm:$0xff]
      %v1331 = vld [vmem:[%s1325 + $0xa] sm:$0xff]
      %1332 = vrot.lane.b32.xlu0 %v1174, 4
      %v1333 = vpop.permute.xlu0 %1332
      %1334 = vrot.lane.b32.xlu0 %v1175, 4
      %v1335 = vpop.permute.xlu0 %1334
      %1338 = vrot.lane.b32.xlu0 %v1176, 8
      %v1339 = vpop.permute.xlu0 %1338
      %1340 = vrot.lane.b32.xlu0 %v1177, 8
      %v1341 = vpop.permute.xlu0 %1340
      %1344 = vrot.lane.b32.xlu0 %v1249, 12
      %v1345 = vpop.permute.xlu0 %1344
      %1346 = vrot.lane.b32.xlu0 %v1250, 12
      %v1347 = vpop.permute.xlu0 %1346
      %1350 = vrot.lane.b32.xlu0 %v1251, 16
      %v1351 = vpop.permute.xlu0 %1350
      %1352 = vrot.lane.b32.xlu0 %v1252, 16
      %v1353 = vpop.permute.xlu0 %1352
      %1356 = vrot.lane.b32.xlu0 %v1253, 20
      %v1357 = vpop.permute.xlu0 %1356
      %1358 = vrot.lane.b32.xlu0 %v1254, 20
      %v1359 = vpop.permute.xlu0 %1358
      %1364 = vrot.lane.b32.xlu0 %v1326, 24
      %v1365 = vpop.permute.xlu0 %1364
      %1366 = vrot.lane.b32.xlu0 %v1327, 24
      %v1367 = vpop.permute.xlu0 %1366
      %1372 = vrot.lane.b32.xlu0 %v1328, 28
      %v1373 = vpop.permute.xlu0 %1372
      %1374 = vrot.lane.b32.xlu0 %v1329, 28
      %v1375 = vpop.permute.xlu0 %1374
      %1380 = vrot.lane.b32.xlu0 %v1330, 32
      %v1381 = vpop.permute.xlu0 %1380
      %1382 = vrot.lane.b32.xlu0 %v1331, 32
      %v1383 = vpop.permute.xlu0 %1382
      %v1386 = vsel %vm300, %v1172, %v1333
      %v1387 = vsel %vm300, %v1173, %v1335
      %v1388 = vsel %vm303, %v1386, %v1339
      %v1389 = vsel %vm303, %v1387, %v1341
      %v1390 = vsel %vm306, %v1388, %v1345
      %v1391 = vsel %vm306, %v1389, %v1347
      %v1392 = vsel %vm309, %v1390, %v1351
      %v1393 = vsel %vm309, %v1391, %v1353
      %v1394 = vsel %vm312, %v1392, %v1357
      %v1395 = vsel %vm312, %v1393, %v1359
      %v1396 = vsel %vm315, %v1394, %v1365
      %v1397 = vsel %vm315, %v1395, %v1367
      %v1398 = vsel %vm318, %v1396, %v1373
      %v1399 = vsel %vm318, %v1397, %v1375
      %v1400 = vsel %vm321, %v1398, %v1381
      %v1401 = vsel %vm321, %v1399, %v1383
      %s1402 = scalar_lea.vmem %s203, 408
      %v1403 = vld [vmem:[%s1402] sm:$0xff]
      %v1404 = vld [vmem:[%s1402 + $0x8] sm:$0xff]
      %v1405 = vld [vmem:[%s1402 + $0x1] sm:$0xff]
      %v1406 = vld [vmem:[%s1402 + $0x9] sm:$0xff]
      %v1407 = vld [vmem:[%s1402 + $0x2] sm:$0xff]
      %v1408 = vld [vmem:[%s1402 + $0xa] sm:$0xff]
      %1409 = vrot.lane.b32.xlu0 %v1251, 4
      %v1410 = vpop.permute.xlu0 %1409
      %1411 = vrot.lane.b32.xlu0 %v1252, 4
      %v1412 = vpop.permute.xlu0 %1411
      %1415 = vrot.lane.b32.xlu0 %v1253, 8
      %v1416 = vpop.permute.xlu0 %1415
      %1417 = vrot.lane.b32.xlu0 %v1254, 8
      %v1418 = vpop.permute.xlu0 %1417
      %1421 = vrot.lane.b32.xlu0 %v1326, 12
      %v1422 = vpop.permute.xlu0 %1421
      %1423 = vrot.lane.b32.xlu0 %v1327, 12
      %v1424 = vpop.permute.xlu0 %1423
      %1427 = vrot.lane.b32.xlu0 %v1328, 16
      %v1428 = vpop.permute.xlu0 %1427
      %1429 = vrot.lane.b32.xlu0 %v1329, 16
      %v1430 = vpop.permute.xlu0 %1429
      %1433 = vrot.lane.b32.xlu0 %v1330, 20
      %v1434 = vpop.permute.xlu0 %1433
      %1435 = vrot.lane.b32.xlu0 %v1331, 20
      %v1436 = vpop.permute.xlu0 %1435
      %1441 = vrot.lane.b32.xlu0 %v1403, 24
      %v1442 = vpop.permute.xlu0 %1441
      %1443 = vrot.lane.b32.xlu0 %v1404, 24
      %v1444 = vpop.permute.xlu0 %1443
      %1449 = vrot.lane.b32.xlu0 %v1405, 28
      %v1450 = vpop.permute.xlu0 %1449
      %1451 = vrot.lane.b32.xlu0 %v1406, 28
      %v1452 = vpop.permute.xlu0 %1451
      %1457 = vrot.lane.b32.xlu0 %v1407, 32
      %v1458 = vpop.permute.xlu0 %1457
      %1459 = vrot.lane.b32.xlu0 %v1408, 32
      %v1460 = vpop.permute.xlu0 %1459
      %v1463 = vsel %vm300, %v1249, %v1410
      %v1464 = vsel %vm300, %v1250, %v1412
      %v1465 = vsel %vm303, %v1463, %v1416
      %v1466 = vsel %vm303, %v1464, %v1418
      %v1467 = vsel %vm306, %v1465, %v1422
      %v1468 = vsel %vm306, %v1466, %v1424
      %v1469 = vsel %vm309, %v1467, %v1428
      %v1470 = vsel %vm309, %v1468, %v1430
      %v1471 = vsel %vm312, %v1469, %v1434
      %v1472 = vsel %vm312, %v1470, %v1436
      %v1473 = vsel %vm315, %v1471, %v1442
      %v1474 = vsel %vm315, %v1472, %v1444
      %v1475 = vsel %vm318, %v1473, %v1450
      %v1476 = vsel %vm318, %v1474, %v1452
      %v1477 = vsel %vm321, %v1475, %v1458
      %v1478 = vsel %vm321, %v1476, %v1460
      %v1479 = vpack.c.bf16 %v323, %v322
      %v1480 = vpack.c.bf16 %v400, %v399
      %v1481 = vpack.c.bf16 %v477, %v476
      %v1482 = vpack.c.bf16 %v554, %v553
      %v1483 = vpack.c.bf16 %v631, %v630
      %v1484 = vpack.c.bf16 %v708, %v707
      %v1485 = vpack.c.bf16 %v785, %v784
      %v1486 = vpack.c.bf16 %v862, %v861
      %v1487 = vpack.c.bf16 %v939, %v938
      %v1488 = vpack.c.bf16 %v1016, %v1015
      %v1489 = vpack.c.bf16 %v1093, %v1092
      %v1490 = vpack.c.bf16 %v1170, %v1169
      %v1491 = vpack.c.bf16 %v1247, %v1246
      %v1492 = vpack.c.bf16 %v1324, %v1323
      %v1493 = vpack.c.bf16 %v1401, %v1400
      %v1494 = vpack.c.bf16 %v1478, %v1477
      %v1495 = vld [vmem:[%s1] sm:$0xf]
      %v1496 = vld [vmem:[%s1 + $0x4] sm:$0xf]
      %v1497 = vld [vmem:[%s1 + $0x8] sm:$0xf]
      %v1498 = vld [vmem:[%s1 + $0xc] sm:$0xf]
      %v1499 = vld [vmem:[%s1 + $0x10] sm:$0x3]
      %v1505 = vunpack.c.l.b16 %v1495
      %v1506 = vunpack.c.l.b16 %v1496
      %v1507 = vunpack.c.l.b16 %v1497
      %v1508 = vunpack.c.l.b16 %v1498
      %v1509 = vunpack.c.l.b16 %v1499
      %v1510 = vpack.c.b16 %v1506, %v1505
      %v1511 = vpack.c.b16 %v1508, %v1507
      %v1512 = vpack.c.b16 %v1509, %v1509
      %vm1515 = vcmask 293888
      %v1517 = vsel %vm1515, %v1479, 0
      %v1520 = vsel %vm1515, %v1480, 0
      %v1523 = vsel %vm1515, %v1481, 0
      %v1526 = vsel %vm1515, %v1482, 0
      %v1529 = vsel %vm1515, %v1483, 0
      %v1532 = vsel %vm1515, %v1484, 0
      %v1535 = vsel %vm1515, %v1485, 0
      %v1538 = vsel %vm1515, %v1486, 0
      %v1541 = vsel %vm1515, %v1487, 0
      %v1544 = vsel %vm1515, %v1488, 0
      %v1547 = vsel %vm1515, %v1489, 0
      %v1550 = vsel %vm1515, %v1490, 0
      %v1553 = vsel %vm1515, %v1491, 0
      %v1556 = vsel %vm1515, %v1492, 0
      %v1559 = vsel %vm1515, %v1493, 0
      %v1562 = vsel %vm1515, %v1494, 0
      %vm1564 = vcmask 1041408
      %v1566 = vsel %vm1564, %v1512, 0
      %1568 = vmatprep.subr.bf16.mxu0 0
      %1569 = vmatpush1.bf16.msra.mxu0 %v1510
      %1570 = vmatprep.subr.bf16.mxu0 0
      %1571 = vmatpush1.bf16.msra.mxu0 %v1511
      %1572 = vmatprep.subr.bf16.mxu0 0
      %1573 = vmatpush1.bf16.msra.mxu0 %v1566
      %1574 = vmatprep.subr.bf16.mxu0 0
      %1575 = vmatpush1.bf16.msra.mxu0 0
      %1576 = vmatprep.subr.bf16.mxu0 0
      %1577 = vmatpush1.bf16.msra.mxu0 0
      %1578 = vmatprep.subr.bf16.mxu0 0
      %1579 = vmatpush1.bf16.msra.mxu0 0
      %1580 = vmatprep.subr.bf16.mxu0 0
      %1581 = vmatpush1.bf16.msra.mxu0 0
      %1582 = vmatprep.subr.bf16.mxu0 0
      %1583 = vmatpush1.bf16.msra.mxu0 0
      %1584 = vmatprep.subr.bf16.mxu0 0
      %1585 = vmatpush1.bf16.msra.mxu0 0
      %1586 = vmatprep.subr.bf16.mxu0 0
      %1587 = vmatpush1.bf16.msra.mxu0 0
      %1588 = vmatprep.subr.bf16.mxu0 0
      %1589 = vmatpush1.bf16.msra.mxu0 0
      %1590 = vmatprep.subr.bf16.mxu0 0
      %1591 = vmatpush1.bf16.msra.mxu0 0
      %1592 = vmatprep.subr.bf16.mxu0 0
      %1593 = vmatpush1.bf16.msra.mxu0 0
      %1594 = vmatprep.subr.bf16.mxu0 0
      %1595 = vmatpush1.bf16.msra.mxu0 0
      %1596 = vmatprep.subr.bf16.mxu0 0
      %1597 = vmatpush1.bf16.msra.mxu0 0
      %1598 = vmatprep.subr.bf16.mxu0 0
      %1599 = vmatpush1.bf16.msra.mxu0 0
      %1600 = vmatprep.mubr.bf16.mxu0 0
      %1601 = vmatmul.mubr.bf16.gmra.mrb[0].mxu0 %v1517
      %v1602 = vpop.f32.mrb[0].mxu0
      %v1603 = vadd.f32 0.0, %v1602
      %v1604 = vpop.f32.mrb[0].mxu0
      %v1605 = vpop.f32.mrb[0].mxu0
      %v1606 = vadd.f32 0.0, %v1605
      %v1607 = vpop.f32.mrb[0].mxu0
      %1608 = vmatprep.mubr.bf16.mxu0 0
      %1609 = vmatmul.mubr.bf16.gmra.mrb[0].mxu0 %v1520
      %v1610 = vpop.f32.mrb[0].mxu0
      %v1611 = vadd.f32 0.0, %v1610
      %v1612 = vpop.f32.mrb[0].mxu0
      %v1613 = vpop.f32.mrb[0].mxu0
      %v1614 = vadd.f32 0.0, %v1613
      %v1615 = vpop.f32.mrb[0].mxu0
      %1616 = vmatprep.mubr.bf16.mxu0 0
      %1617 = vmatmul.mubr.bf16.gmra.mrb[0].mxu0 %v1523
      %v1618 = vpop.f32.mrb[0].mxu0
      %v1619 = vadd.f32 0.0, %v1618
      %v1620 = vpop.f32.mrb[0].mxu0
      %v1621 = vpop.f32.mrb[0].mxu0
      %v1622 = vadd.f32 0.0, %v1621
      %v1623 = vpop.f32.mrb[0].mxu0
      %1624 = vmatprep.mubr.bf16.mxu0 0
      %1625 = vmatmul.mubr.bf16.gmra.mrb[0].mxu0 %v1526
      %v1626 = vpop.f32.mrb[0].mxu0
      %v1627 = vadd.f32 0.0, %v1626
      %v1628 = vpop.f32.mrb[0].mxu0
      %v1629 = vpop.f32.mrb[0].mxu0
      %v1630 = vadd.f32 0.0, %v1629
      %v1631 = vpop.f32.mrb[0].mxu0
      %1632 = vmatprep.mubr.bf16.mxu0 0
      %1633 = vmatmul.mubr.bf16.gmra.mrb[0].mxu0 %v1529
      %v1634 = vpop.f32.mrb[0].mxu0
      %v1635 = vadd.f32 0.0, %v1634
      %v1636 = vpop.f32.mrb[0].mxu0
      %v1637 = vpop.f32.mrb[0].mxu0
      %v1638 = vadd.f32 0.0, %v1637
      %v1639 = vpop.f32.mrb[0].mxu0
      %1640 = vmatprep.mubr.bf16.mxu0 0
      %1641 = vmatmul.mubr.bf16.gmra.mrb[0].mxu0 %v1532
      %v1642 = vpop.f32.mrb[0].mxu0
      %v1643 = vadd.f32 0.0, %v1642
      %v1644 = vpop.f32.mrb[0].mxu0
      %v1645 = vpop.f32.mrb[0].mxu0
      %v1646 = vadd.f32 0.0, %v1645
      %v1647 = vpop.f32.mrb[0].mxu0
      %1648 = vmatprep.mubr.bf16.mxu0 0
      %1649 = vmatmul.mubr.bf16.gmra.mrb[0].mxu0 %v1535
      %v1650 = vpop.f32.mrb[0].mxu0
      %v1651 = vadd.f32 0.0, %v1650
      %v1652 = vpop.f32.mrb[0].mxu0
      %v1653 = vpop.f32.mrb[0].mxu0
      %v1654 = vadd.f32 0.0, %v1653
      %v1655 = vpop.f32.mrb[0].mxu0
      %1656 = vmatprep.mubr.bf16.mxu0 0
      %1657 = vmatmul.mubr.bf16.gmra.mrb[0].mxu0 %v1538
      %v1658 = vpop.f32.mrb[0].mxu0
      %v1659 = vadd.f32 0.0, %v1658
      %v1660 = vpop.f32.mrb[0].mxu0
      %v1661 = vpop.f32.mrb[0].mxu0
      %v1662 = vadd.f32 0.0, %v1661
      %v1663 = vpop.f32.mrb[0].mxu0
      %1664 = vmatprep.mubr.bf16.mxu0 0
      %1665 = vmatmul.mubr.bf16.gmra.mrb[0].mxu0 %v1541
      %v1666 = vpop.f32.mrb[0].mxu0
      %v1667 = vadd.f32 0.0, %v1666
      %v1668 = vpop.f32.mrb[0].mxu0
      %v1669 = vpop.f32.mrb[0].mxu0
      %v1670 = vadd.f32 0.0, %v1669
      %v1671 = vpop.f32.mrb[0].mxu0
      %1672 = vmatprep.mubr.bf16.mxu0 0
      %1673 = vmatmul.mubr.bf16.gmra.mrb[0].mxu0 %v1544
      %v1674 = vpop.f32.mrb[0].mxu0
      %v1675 = vadd.f32 0.0, %v1674
      %v1676 = vpop.f32.mrb[0].mxu0
      %v1677 = vpop.f32.mrb[0].mxu0
      %v1678 = vadd.f32 0.0, %v1677
      %v1679 = vpop.f32.mrb[0].mxu0
      %1680 = vmatprep.mubr.bf16.mxu0 0
      %1681 = vmatmul.mubr.bf16.gmra.mrb[0].mxu0 %v1547
      %v1682 = vpop.f32.mrb[0].mxu0
      %v1683 = vadd.f32 0.0, %v1682
      %v1684 = vpop.f32.mrb[0].mxu0
      %v1685 = vpop.f32.mrb[0].mxu0
      %v1686 = vadd.f32 0.0, %v1685
      %v1687 = vpop.f32.mrb[0].mxu0
      %1688 = vmatprep.mubr.bf16.mxu0 0
      %1689 = vmatmul.mubr.bf16.gmra.mrb[0].mxu0 %v1550
      %v1690 = vpop.f32.mrb[0].mxu0
      %v1691 = vadd.f32 0.0, %v1690
      %v1692 = vpop.f32.mrb[0].mxu0
      %v1693 = vpop.f32.mrb[0].mxu0
      %v1694 = vadd.f32 0.0, %v1693
      %v1695 = vpop.f32.mrb[0].mxu0
      %1696 = vmatprep.mubr.bf16.mxu0 0
      %1697 = vmatmul.mubr.bf16.gmra.mrb[0].mxu0 %v1553
      %v1698 = vpop.f32.mrb[0].mxu0
      %v1699 = vadd.f32 0.0, %v1698
      %v1700 = vpop.f32.mrb[0].mxu0
      %v1701 = vpop.f32.mrb[0].mxu0
      %v1702 = vadd.f32 0.0, %v1701
      %v1703 = vpop.f32.mrb[0].mxu0
      %1704 = vmatprep.mubr.bf16.mxu0 0
      %1705 = vmatmul.mubr.bf16.gmra.mrb[0].mxu0 %v1556
      %v1706 = vpop.f32.mrb[0].mxu0
      %v1707 = vadd.f32 0.0, %v1706
      %v1708 = vpop.f32.mrb[0].mxu0
      %v1709 = vpop.f32.mrb[0].mxu0
      %v1710 = vadd.f32 0.0, %v1709
      %v1711 = vpop.f32.mrb[0].mxu0
      %1712 = vmatprep.mubr.bf16.mxu0 0
      %1713 = vmatmul.mubr.bf16.gmra.mrb[0].mxu0 %v1559
      %v1714 = vpop.f32.mrb[0].mxu0
      %v1715 = vadd.f32 0.0, %v1714
      %v1716 = vpop.f32.mrb[0].mxu0
      %v1717 = vpop.f32.mrb[0].mxu0
      %v1718 = vadd.f32 0.0, %v1717
      %v1719 = vpop.f32.mrb[0].mxu0
      %1720 = vmatprep.mubr.bf16.mxu0 0
      %1721 = vmatmul.mubr.bf16.gmra.mrb[0].mxu0 %v1562
      %v1722 = vpop.f32.mrb[0].mxu0
      %v1723 = vadd.f32 0.0, %v1722
      %v1724 = vpop.f32.mrb[0].mxu0
      %v1725 = vpop.f32.mrb[0].mxu0
      %v1726 = vadd.f32 0.0, %v1725
      %v1727 = vpop.f32.mrb[0].mxu0
      %1728 = vdwg.mxu0
      %1729 = vst [vmem:[%s208] sm:$0xff] %v1603
      %1730 = vst [vmem:[%s208 + $0x8] sm:$0xff] %v1606
      %1731 = vst [vmem:[%s208 + $0x10] sm:$0xff] %v1611
      %1732 = vst [vmem:[%s208 + $0x18] sm:$0xff] %v1614
      %1733 = vst [vmem:[%s208 + $0x20] sm:$0xff] %v1619
      %1734 = vst [vmem:[%s208 + $0x28] sm:$0xff] %v1622
      %1735 = vst [vmem:[%s208 + $0x30] sm:$0xff] %v1627
      %1736 = vst [vmem:[%s208 + $0x38] sm:$0xff] %v1630
      %1737 = vst [vmem:[%s208 + $0x40] sm:$0xff] %v1635
      %1738 = vst [vmem:[%s208 + $0x48] sm:$0xff] %v1638
      %1739 = vst [vmem:[%s208 + $0x50] sm:$0xff] %v1643
      %1740 = vst [vmem:[%s208 + $0x58] sm:$0xff] %v1646
      %1741 = vst [vmem:[%s208 + $0x60] sm:$0xff] %v1651
      %1742 = vst [vmem:[%s208 + $0x68] sm:$0xff] %v1654
      %1743 = vst [vmem:[%s208 + $0x70] sm:$0xff] %v1659
      %1744 = vst [vmem:[%s208 + $0x78] sm:$0xff] %v1662
      %1745 = vst [vmem:[%s208 + $0x80] sm:$0xff] %v1667
      %1746 = vst [vmem:[%s208 + $0x88] sm:$0xff] %v1670
      %1747 = vst [vmem:[%s208 + $0x90] sm:$0xff] %v1675
      %1748 = vst [vmem:[%s208 + $0x98] sm:$0xff] %v1678
      %1749 = vst [vmem:[%s208 + $0xa0] sm:$0xff] %v1683
      %1750 = vst [vmem:[%s208 + $0xa8] sm:$0xff] %v1686
      %1751 = vst [vmem:[%s208 + $0xb0] sm:$0xff] %v1691
      %1752 = vst [vmem:[%s208 + $0xb8] sm:$0xff] %v1694
      %1753 = vst [vmem:[%s208 + $0xc0] sm:$0xff] %v1699
      %1754 = vst [vmem:[%s208 + $0xc8] sm:$0xff] %v1702
      %1755 = vst [vmem:[%s208 + $0xd0] sm:$0xff] %v1707
      %1756 = vst [vmem:[%s208 + $0xd8] sm:$0xff] %v1710
      %1757 = vst [vmem:[%s208 + $0xe0] sm:$0xff] %v1715
      %1758 = vst [vmem:[%s208 + $0xe8] sm:$0xff] %v1718
      %1759 = vst [vmem:[%s208 + $0xf0] sm:$0xff] %v1723
      %1760 = vst [vmem:[%s208 + $0xf8] sm:$0xff] %v1726
      %v1761 = vadd.f32 %v1603, %v1606
      %v1762 = vadd.f32 %v1761, %v1611
      %v1763 = vadd.f32 %v1762, %v1614
      %v1764 = vadd.f32 %v1763, %v1619
      %v1765 = vadd.f32 %v1764, %v1622
      %v1766 = vadd.f32 %v1765, %v1627
      %v1767 = vadd.f32 %v1766, %v1630
      %v1768 = vadd.f32 %v1767, %v1635
      %v1769 = vadd.f32 %v1768, %v1638
      %v1770 = vadd.f32 %v1769, %v1643
      %v1771 = vadd.f32 %v1770, %v1646
      %v1772 = vadd.f32 %v1771, %v1651
      %v1773 = vadd.f32 %v1772, %v1654
      %v1774 = vadd.f32 %v1773, %v1659
      %v1775 = vadd.f32 %v1774, %v1662
      %v1776 = vadd.f32 %v1775, %v1667
      %v1777 = vadd.f32 %v1776, %v1670
      %v1778 = vadd.f32 %v1777, %v1675
      %v1779 = vadd.f32 %v1778, %v1678
      %v1780 = vadd.f32 %v1779, %v1683
      %v1781 = vadd.f32 %v1780, %v1686
      %v1782 = vadd.f32 %v1781, %v1691
      %v1783 = vadd.f32 %v1782, %v1694
      %v1784 = vadd.f32 %v1783, %v1699
      %v1785 = vadd.f32 %v1784, %v1702
      %v1786 = vadd.f32 %v1785, %v1707
      %v1787 = vadd.f32 %v1786, %v1710
      %v1788 = vadd.f32 %v1787, %v1715
      %v1789 = vadd.f32 %v1788, %v1718
      %v1790 = vadd.f32 %v1789, %v1723
      %v1791 = vadd.f32 %v1790, %v1726
      %v1792 = vrot.slane %v1791, 4
      %v1793 = vadd.f32 %v1791, %v1792
      %v1794 = vrot.slane %v1793, 2
      %v1795 = vadd.f32 %v1793, %v1794
      %v1796 = vrot.slane %v1795, 1
      %v1797 = vadd.f32 %v1795, %v1796
      %1798 = vst [vmem:[%s211] sm:$0x1] %v1797
      %v1799 = vmul.f32 %v1603, %v1603
      %v1800 = vmul.f32 %v1606, %v1606
      %v1801 = vmul.f32 %v1611, %v1611
      %v1802 = vmul.f32 %v1614, %v1614
      %v1803 = vmul.f32 %v1619, %v1619
      %v1804 = vmul.f32 %v1622, %v1622
      %v1805 = vmul.f32 %v1627, %v1627
      %v1806 = vmul.f32 %v1630, %v1630
      %v1807 = vmul.f32 %v1635, %v1635
      %v1808 = vmul.f32 %v1638, %v1638
      %v1809 = vmul.f32 %v1643, %v1643
      %v1810 = vmul.f32 %v1646, %v1646
      %v1811 = vmul.f32 %v1651, %v1651
      %v1812 = vmul.f32 %v1654, %v1654
      %v1813 = vmul.f32 %v1659, %v1659
      %v1814 = vmul.f32 %v1662, %v1662
      %v1815 = vmul.f32 %v1667, %v1667
      %v1816 = vmul.f32 %v1670, %v1670
      %v1817 = vmul.f32 %v1675, %v1675
      %v1818 = vmul.f32 %v1678, %v1678
      %v1819 = vmul.f32 %v1683, %v1683
      %v1820 = vmul.f32 %v1686, %v1686
      %v1821 = vmul.f32 %v1691, %v1691
      %v1822 = vmul.f32 %v1694, %v1694
      %v1823 = vmul.f32 %v1699, %v1699
      %v1824 = vmul.f32 %v1702, %v1702
      %v1825 = vmul.f32 %v1707, %v1707
      %v1826 = vmul.f32 %v1710, %v1710
      %v1827 = vmul.f32 %v1715, %v1715
      %v1828 = vmul.f32 %v1718, %v1718
      %v1829 = vmul.f32 %v1723, %v1723
      %v1830 = vmul.f32 %v1726, %v1726
      %v1831 = vadd.f32 %v1799, %v1800
      %v1832 = vadd.f32 %v1831, %v1801
      %v1833 = vadd.f32 %v1832, %v1802
      %v1834 = vadd.f32 %v1833, %v1803
      %v1835 = vadd.f32 %v1834, %v1804
      %v1836 = vadd.f32 %v1835, %v1805
      %v1837 = vadd.f32 %v1836, %v1806
      %v1838 = vadd.f32 %v1837, %v1807
      %v1839 = vadd.f32 %v1838, %v1808
      %v1840 = vadd.f32 %v1839, %v1809
      %v1841 = vadd.f32 %v1840, %v1810
      %v1842 = vadd.f32 %v1841, %v1811
      %v1843 = vadd.f32 %v1842, %v1812
      %v1844 = vadd.f32 %v1843, %v1813
      %v1845 = vadd.f32 %v1844, %v1814
      %v1846 = vadd.f32 %v1845, %v1815
      %v1847 = vadd.f32 %v1846, %v1816
      %v1848 = vadd.f32 %v1847, %v1817
      %v1849 = vadd.f32 %v1848, %v1818
      %v1850 = vadd.f32 %v1849, %v1819
      %v1851 = vadd.f32 %v1850, %v1820
      %v1852 = vadd.f32 %v1851, %v1821
      %v1853 = vadd.f32 %v1852, %v1822
      %v1854 = vadd.f32 %v1853, %v1823
      %v1855 = vadd.f32 %v1854, %v1824
      %v1856 = vadd.f32 %v1855, %v1825
      %v1857 = vadd.f32 %v1856, %v1826
      %v1858 = vadd.f32 %v1857, %v1827
      %v1859 = vadd.f32 %v1858, %v1828
      %v1860 = vadd.f32 %v1859, %v1829
      %v1861 = vadd.f32 %v1860, %v1830
      %v1862 = vrot.slane %v1861, 4
      %v1863 = vadd.f32 %v1861, %v1862
      %v1864 = vrot.slane %v1863, 2
      %v1865 = vadd.f32 %v1863, %v1864
      %v1866 = vrot.slane %v1865, 1
      %v1867 = vadd.f32 %v1865, %v1866
      %1868 = vst [vmem:[%s214] sm:$0x1] %v1867
      %p1869 = scmp.lt.s32.totalorder %s16, 1
      %s1870 = scalar_select %p1869, %s16, 1
      %s1871 = smul.addr %s1870, 32
      %s1872 = smul.addr %s1871, 8
      %s1873 = scalar_lea.vmem %s2, %s1872
      %p1874 = scmp.lt.s32.totalorder %s16, 1
      %s1875 = scalar_select %p1874, %s16, 1
      %s1876 = scalar_lea.vmem %s3, %s1875
      %p1877 = scmp.lt.s32.totalorder %s16, 1
      %s1878 = scalar_select %p1877, %s16, 1
      %s1879 = scalar_lea.vmem %s4, %s1878
      // Predicated region
      $region29: #{conv_tag_para_forward.2} parent=27 // pred_check
        %p1880 = pneg %p81
      $region30: #{conv_tag_para_forward.2} parent=27 // pred_check_branch
        %1882 = sbr.rel (%p1880) target = $region32
      $region31: #{conv_tag_para_forward.2} parent=27 // pred_region
        _
      $region32: #{conv_tag_para_forward.2} parent=27 // pred_fallthru
        _
      // Predicated region
      $region33: #{conv_tag_para_forward.2} parent=27 // pred_check
        %p1883 = pneg %p107
      $region34: #{conv_tag_para_forward.2} parent=27 // pred_check_branch
        %1885 = sbr.rel (%p1883) target = $region36
      $region35: #{conv_tag_para_forward.2} parent=27 // pred_region
        _
      $region36: #{conv_tag_para_forward.2} parent=27 // pred_fallthru
        _
      // Predicated region
      $region37: #{conv_tag_para_forward.2} parent=27 // pred_check
        %p1886 = pneg %p133
      $region38: #{conv_tag_para_forward.2} parent=27 // pred_check_branch
        %1888 = sbr.rel (%p1886) target = $region40
      $region39: #{conv_tag_para_forward.2} parent=27 // pred_region
        _
      $region40: #{conv_tag_para_forward.2} parent=27 // pred_fallthru
        _
    $region28: #{conv_tag_para_forward.2} parent=5 // pred_fallthru
      _
    %p1889 = scmp.le.s32.totalorder 2, %s11
    // Predicated region
    $region41: #{conv_tag_para_forward.2} parent=5 // pred_check
      %p1890 = pneg %p1889
    $region42: #{conv_tag_para_forward.2} parent=5 // pred_check_branch
      %1892 = sbr.rel (%p1890) target = $region44
    $region43: #{conv_tag_para_forward.2} parent=5 // pred_region
      %s1893 = ssub.s32 %s11, 2
      // Predicated region
      $region45: #{conv_tag_para_forward.2} parent=43 // pred_check
        %p1894 = pneg %p87
      $region46: #{conv_tag_para_forward.2} parent=43 // pred_check_branch
        %1896 = sbr.rel (%p1894) target = $region48
      $region47: #{conv_tag_para_forward.2} parent=43 // pred_region
        %p1897 = scmp.lt.s32.totalorder %s17, 1
        %s1898 = scalar_select %p1897, %s17, 1
        %s1899 = smul.addr %s1898, 32
        %s1900 = smul.addr %s1899, 8
        %s1901 = scalar_lea.vmem %s2, %s1900
      $region48: #{conv_tag_para_forward.2} parent=43 // pred_fallthru
        _
      // Predicated region
      $region49: #{conv_tag_para_forward.2} parent=43 // pred_check
        %p1902 = pneg %p113
      $region50: #{conv_tag_para_forward.2} parent=43 // pred_check_branch
        %1904 = sbr.rel (%p1902) target = $region52
      $region51: #{conv_tag_para_forward.2} parent=43 // pred_region
        %p1905 = scmp.lt.s32.totalorder %s17, 1
        %s1906 = scalar_select %p1905, %s17, 1
        %s1907 = scalar_lea.vmem %s3, %s1906
      $region52: #{conv_tag_para_forward.2} parent=43 // pred_fallthru
        _
      // Predicated region
      $region53: #{conv_tag_para_forward.2} parent=43 // pred_check
        %p1908 = pneg %p139
      $region54: #{conv_tag_para_forward.2} parent=43 // pred_check_branch
        %1910 = sbr.rel (%p1908) target = $region56
      $region55: #{conv_tag_para_forward.2} parent=43 // pred_region
        %p1911 = scmp.lt.s32.totalorder %s17, 1
        %s1912 = scalar_select %p1911, %s17, 1
        %s1913 = scalar_lea.vmem %s4, %s1912
      $region56: #{conv_tag_para_forward.2} parent=43 // pred_fallthru
        _
    $region44: #{conv_tag_para_forward.2} parent=5 // pred_fallthru
      _
  $region6: #{conv_tag_para_forward.2} parent=0 // loop_footer
    %s15 = sadd.s32 1, %s11
  $region7: #{conv_tag_para_forward.2} parent=0 // loop_footer_branch
    %10 = sbr.rel target = $region3
  $region8: #{conv_tag_para_forward.2} parent=0 // loop_exit
    _

</llo_original>
